<compile_context>
chip_gen: v6e
topology: v6e:2x2x1
jax: 0.10.0
libtpu: 0.0.40
codegen_flags: <defaults>
</compile_context>

<pallas_src>
import math

import jax
import jax.numpy as jnp
import numpy as np
from jax.experimental import pallas as pl
from jax.experimental.pallas import tpu as pltpu


# ----------------------------------------------------------------------------
# In-kernel helpers (activations are lane-dense 2-D values: (rows, W*C)).
# ----------------------------------------------------------------------------
def _zero_border(pad_ref, bb, H, W, C):
    """Zero only the 1-wide padding border of a (bb*(H+2), (W+2)*C) buffer."""
    Rp = bb * (H + 2)
    zrow = jnp.zeros((1, (W + 2) * C), jnp.float32)
    for b in range(bb):
        pad_ref[pl.ds(b * (H + 2), 1), :] = zrow           # top pad row
        pad_ref[pl.ds(b * (H + 2) + H + 1, 1), :] = zrow   # bottom pad row
    zcol = jnp.zeros((Rp, C), jnp.float32)
    pad_ref[:, pl.ds(0, C)] = zcol                         # left pad column
    pad_ref[:, pl.ds((W + 1) * C, C)] = zcol               # right pad column


def _conv3x3_bias_relu(pad_ref, w_ref, b_ref, bb, H, W, Cin, Cout):
    """3x3 'SAME' conv + bias + ReLU as 3 banded, lane-dense MXU matmuls.

    pad_ref : (bb*(H+2), (W+2)*Cin) f32 — zero border, per-image interiors set.
    w_ref   : (3, (W+2)*Cin, W*Cout) bf16 banded matrices (one per kh).
    b_ref   : (1, W*Cout) f32 (bias tiled across W).
    Returns an f32 value of shape (bb*(H+2)-2, W*Cout); image b's valid output
    rows are [b*(H+2), b*(H+2)+H).
    """
    R = bb * (H + 2) - 2
    y = jnp.dot(pad_ref[pl.ds(0, R), :].astype(jnp.bfloat16), w_ref[0],
                preferred_element_type=jnp.float32)
    for kh in (1, 2):
        y = y + jnp.dot(pad_ref[pl.ds(kh, R), :].astype(jnp.bfloat16), w_ref[kh],
                        preferred_element_type=jnp.float32)
    return jnp.maximum(y + b_ref[...], 0.0)


def _maxpool_2x2(y, H, W, C):
    """2x2 stride-2 max pool of a (H, W*C) value -> (H//2, (W//2)*C)."""
    Ho, Wo = H // 2, W // 2
    z = y.reshape(Ho, 2, W * C)
    hm = jnp.maximum(z[:, 0, :], z[:, 1, :])               # H pool: (Ho, W*C)
    w4 = hm.reshape(Ho, Wo, 2 * C)
    wm = jnp.maximum(w4[:, :, :C], w4[:, :, C:])           # W pool: (Ho, Wo, C)
    return wm.reshape(Ho, Wo * C)


def _make_fused_kernel(dims, bb, d_model):
    """dims: per block (H, W, Cin, Cout), spatial size at block input."""
    L = len(dims)
    n_in = 1 + 4 * L + 2   # x, (wband1,b1,wband2,b2)*L, wf_wide, bf

    def kernel(*refs):
        x_ref = refs[0]
        wf_ref = refs[1 + 4 * L]
        bf_ref = refs[2 + 4 * L]
        o_ref = refs[n_in]
        pads = refs[n_in + 1:]                             # 2 scratch per block

        # Scatter the bb input images into block-0 conv-1's padded buffer.
        H0, W0, C0, _ = dims[0]
        _zero_border(pads[0], bb, H0, W0, C0)
        for b in range(bb):
            pads[0][pl.ds(b * (H0 + 2) + 1, H0), pl.ds(C0, W0 * C0)] = x_ref[b]

        head_rows = []
        for i, (H, W, Cin, Cout) in enumerate(dims):
            w1_ref, b1_ref, w2_ref, b2_ref = refs[1 + 4 * i: 5 + 4 * i]
            pad1, pad2 = pads[2 * i], pads[2 * i + 1]

            # conv1 + bias + ReLU  (noise disabled, StyleMod is a pass-through)
            y1 = _conv3x3_bias_relu(pad1, w1_ref, b1_ref, bb, H, W, Cin, Cout)

            # conv2 input: scatter valid rows into its padded buffer.
            _zero_border(pad2, bb, H, W, Cout)
            for b in range(bb):
                pad2[pl.ds(b * (H + 2) + 1, H), pl.ds(Cout, W * Cout)] = \
                    y1[b * (H + 2): b * (H + 2) + H, :]

            # conv2 + bias + ReLU
            y2 = _conv3x3_bias_relu(pad2, w2_ref, b2_ref, bb, H, W, Cout, Cout)

            Ho, Wo = H // 2, W // 2
            if i + 1 < L:
                pad_next = pads[2 * (i + 1)]
                Cn = dims[i + 1][2]                        # == Cout
                _zero_border(pad_next, bb, Ho, Wo, Cn)
                for b in range(bb):
                    pooled = _maxpool_2x2(
                        y2[b * (H + 2): b * (H + 2) + H, :], H, W, Cout)
                    pad_next[pl.ds(b * (Ho + 2) + 1, Ho),
                             pl.ds(Cn, Wo * Cn)] = pooled
            else:
                # Last block: max-pool + spatial sum (the 1/(Hf*Wf) of the
                # avg-pool is folded into the pre-scaled final weight).
                for b in range(bb):
                    pooled = _maxpool_2x2(
                        y2[b * (H + 2): b * (H + 2) + H, :], H, W, Cout)
                    head_rows.append(jnp.sum(pooled, axis=0, keepdims=True))

        feats = head_rows[0] if len(head_rows) == 1 else \
            jnp.concatenate(head_rows, axis=0)             # (bb, Wf*C_last)
        out = jnp.dot(feats.astype(jnp.bfloat16), wf_ref[...],
                      preferred_element_type=jnp.float32) + bf_ref[...]
        o_ref[...] = out.reshape(bb, 1, d_model).astype(o_ref.dtype)

    return kernel


# ----------------------------------------------------------------------------
# Wrapper: weight prep (banded matrices) + single fused pallas_call.
# ----------------------------------------------------------------------------
def _band_weights(w_hwio, W):
    """HWIO (3,3,Cin,Cout) conv weights -> (3, (W+2)*Cin, W*Cout) banded mats.

    Wband[kh, p*Cin + ci, w*Cout + co] = w[kh, p-w, ci, co] for 0 <= p-w <= 2
    (p indexes the zero-padded width), so a 'SAME' 3x3 conv over a lane-dense
    padded activation is  sum_kh pad[kh:kh+H, :] @ Wband[kh].
    """
    _, _, Cin, Cout = w_hwio.shape
    p = jnp.arange(W + 2)[:, None]
    wpos = jnp.arange(W)[None, :]
    kw = p - wpos
    mask = ((kw >= 0) & (kw <= 2)).astype(w_hwio.dtype)
    kwc = jnp.clip(kw, 0, 2)
    mats = []
    for kh in range(3):
        g = w_hwio[kh][kwc] * mask[:, :, None, None]       # (W+2, W, Cin, Cout)
        g = jnp.transpose(g, (0, 2, 1, 3)).reshape((W + 2) * Cin, W * Cout)
        mats.append(g)
    return jnp.stack(mats, axis=0)


def _pick_bb(B):
    """Images per grid step: fatten matmul M, but keep >= 2 grid steps so
    ('parallel',) still spreads work over both v7x TensorCores."""
    if B < 4:
        return 1
    bb = B // 2
    while B % bb:
        bb -= 1
    return bb


def discriminator_forward(img_nchw, params):
    """Fully-fused Pallas forward.  img_nchw: (B, C, H, W) like PyTorch."""
    x = jnp.transpose(img_nchw, (0, 2, 3, 1))              # NCHW -> NHWC
    B, H, W, C0 = x.shape
    x2d = x.reshape(B, H, W * C0)                          # channels folded into lanes
    wf, bf = params["final"]
    d_model = wf.shape[1]
    bb = _pick_bb(B)

    dims = []
    flat_inputs = [x2d]
    c_in, h, w = C0, H, W
    for (w1, b1, w2, b2) in params["blocks"]:
        c_out = w1.shape[-1]
        dims.append((h, w, c_in, c_out))
        flat_inputs += [
            _band_weights(w1, w).astype(jnp.bfloat16),
            jnp.tile(b1, w).reshape(1, w * c_out),
            _band_weights(w2, w).astype(jnp.bfloat16),
            jnp.tile(b2, w).reshape(1, w * c_out),
        ]
        c_in, h, w = c_out, h // 2, w // 2
    # AdaptiveAvgPool2d(1) + Linear folded into one tiled, pre-scaled weight.
    wf_wide = (jnp.tile(wf, (w, 1)) / float(h * w)).astype(jnp.bfloat16)
    flat_inputs += [wf_wide, bf.reshape(1, d_model)]

    def _const_spec(a):
        zeros = (0,) * a.ndim
        return pl.BlockSpec(a.shape, lambda g: zeros)

    in_specs = [pl.BlockSpec((bb, H, W * C0), lambda g: (g, 0, 0))]
    in_specs += [_const_spec(a) for a in flat_inputs[1:]]
    # Note: constant-weight buffers keep default double-buffering; at ~1.3 MiB
    # of bf16 weights this is negligible even on v7x's 64 MiB VMEM.

    scratch_shapes = []
    for (bh, bw, bci, bco) in dims:
        scratch_shapes += [
            pltpu.VMEM((bb * (bh + 2), (bw + 2) * bci), jnp.float32),  # conv1 pad
            pltpu.VMEM((bb * (bh + 2), (bw + 2) * bco), jnp.float32),  # conv2 pad
        ]

    out = pl.pallas_call(
        _make_fused_kernel(dims, bb, d_model),
        out_shape=jax.ShapeDtypeStruct((B, 1, d_model), jnp.float32),
        grid=(B // bb,),
        in_specs=in_specs,
        out_specs=pl.BlockSpec((bb, 1, d_model), lambda g: (g, 0, 0)),
        scratch_shapes=scratch_shapes,
        compiler_params=pltpu.CompilerParams(
            dimension_semantics=("parallel",),             # batch across TCs
            vmem_limit_bytes=32 * 1024 * 1024,
        ),
    )(*flat_inputs)
    return out.reshape(B, d_model)


# ----------------------------------------------------------------------------
# Parameter construction (deterministic, synthetic) + pure-JAX reference.
# ----------------------------------------------------------------------------
def init_params(key, in_channels, num_layers, d_model):
    blocks = []
    c_in = in_channels
    for i in range(num_layers):
        c_out = min(d_model, d_model // 2 ** (num_layers - i - 1))
        key, k1, k2, k3, k4 = jax.random.split(key, 5)
        w1 = jax.random.normal(k1, (3, 3, c_in, c_out), jnp.float32) / math.sqrt(9 * c_in)
        b1 = 0.01 * jax.random.normal(k2, (c_out,), jnp.float32)
        w2 = jax.random.normal(k3, (3, 3, c_out, c_out), jnp.float32) / math.sqrt(9 * c_out)
        b2 = 0.01 * jax.random.normal(k4, (c_out,), jnp.float32)
        blocks.append((w1, b1, w2, b2))
        c_in = c_out
    key, k5, k6 = jax.random.split(key, 3)
    wf = jax.random.normal(k5, (c_in, d_model), jnp.float32) / math.sqrt(c_in)
    bf = 0.01 * jax.random.normal(k6, (d_model,), jnp.float32)
    return {"blocks": blocks, "final": (wf, bf)}


def discriminator_reference(img_nchw, params):
    """Pure-JAX f32 reference (mirrors PyTorch semantics) for validation."""
    x = jnp.transpose(img_nchw, (0, 2, 3, 1))
    dn = ("NHWC", "HWIO", "NHWC")
    for (w1, b1, w2, b2) in params["blocks"]:
        x = jax.lax.conv_general_dilated(x, w1, (1, 1), "SAME", dimension_numbers=dn) + b1
        x = jnp.maximum(x, 0.0)
        x = jax.lax.conv_general_dilated(x, w2, (1, 1), "SAME", dimension_numbers=dn) + b2
        x = jnp.maximum(x, 0.0)
        x = jax.lax.reduce_window(
            x, -jnp.inf, jax.lax.max, (1, 2, 2, 1), (1, 2, 2, 1), "VALID"
        )
    pooled = jnp.mean(x, axis=(1, 2))
    wf, bf = params["final"]
    return pooled @ wf + bf


if __name__ == "__main__":
    # network_params: z_dim=8 (unused in forward), d_model=32,
    #                 obs_shape=(4, 16, 16), num_layers=2, batch=2
    batch, num_channels, height, width = 2, 4, 16, 16
    num_layers, d_model = 2, 32

    key = jax.random.PRNGKey(0)
    key, pkey, xkey = jax.random.split(key, 3)
    params = init_params(pkey, num_channels, num_layers, d_model)
    img = jax.random.normal(xkey, (batch, num_channels, height, width), jnp.float32)

    fwd = jax.jit(discriminator_forward)
    out = jax.block_until_ready(fwd(img, params))
    assert out.shape == (batch, d_model), out.shape

    ref = jax.block_until_ready(discriminator_reference(img, params))
    # bf16 MXU operands (f32 accumulation) -> relaxed tolerance vs f32 reference.
    np.testing.assert_allclose(np.asarray(out), np.asarray(ref), rtol=5e-2, atol=5e-2)

    print("KERNEL_OK")
</pallas_src>

<mosaic_0001>
module attributes {stable_mosaic.version = 11 : i64} {
  func.func @kernel(%arg0: i32, %arg1: memref<1x16x64xf32, #tpu.memory_space<vmem>>, %arg2: memref<3x72x256xbf16, #tpu.memory_space<vmem>>, %arg3: memref<1x256xf32, #tpu.memory_space<vmem>>, %arg4: memref<3x288x256xbf16, #tpu.memory_space<vmem>>, %arg5: memref<1x256xf32, #tpu.memory_space<vmem>>, %arg6: memref<3x160x256xbf16, #tpu.memory_space<vmem>>, %arg7: memref<1x256xf32, #tpu.memory_space<vmem>>, %arg8: memref<3x320x256xbf16, #tpu.memory_space<vmem>>, %arg9: memref<1x256xf32, #tpu.memory_space<vmem>>, %arg10: memref<128x32xbf16, #tpu.memory_space<vmem>>, %arg11: memref<1x32xf32, #tpu.memory_space<vmem>>, %arg12: memref<1x1x32xf32, #tpu.memory_space<vmem>>, %arg13: memref<18x72xf32, #tpu.memory_space<vmem>>, %arg14: memref<18x288xf32, #tpu.memory_space<vmem>>, %arg15: memref<10x160xf32, #tpu.memory_space<vmem>>, %arg16: memref<10x320xf32, #tpu.memory_space<vmem>>) attributes {dimension_semantics = [#tpu.dimension_semantics<parallel>], iteration_bounds = array<i64: 2>, scalar_prefetch = 0 : i64, scratch_operands = 4 : i64, tpu.core_type = #tpu.core_type<tc>, window_params = [{transform_indices = @transform_0, window_bounds = array<i64: 1, 16, 64>}, {pipeline_mode = #tpu.pipeline_mode<synchronous>, transform_indices = @transform_1, window_bounds = array<i64: 3, 72, 256>}, {pipeline_mode = #tpu.pipeline_mode<synchronous>, transform_indices = @transform_2, window_bounds = array<i64: 1, 256>}, {pipeline_mode = #tpu.pipeline_mode<synchronous>, transform_indices = @transform_3, window_bounds = array<i64: 3, 288, 256>}, {pipeline_mode = #tpu.pipeline_mode<synchronous>, transform_indices = @transform_4, window_bounds = array<i64: 1, 256>}, {pipeline_mode = #tpu.pipeline_mode<synchronous>, transform_indices = @transform_5, window_bounds = array<i64: 3, 160, 256>}, {pipeline_mode = #tpu.pipeline_mode<synchronous>, transform_indices = @transform_6, window_bounds = array<i64: 1, 256>}, {pipeline_mode = #tpu.pipeline_mode<synchronous>, transform_indices = @transform_7, window_bounds = array<i64: 3, 320, 256>}, {pipeline_mode = #tpu.pipeline_mode<synchronous>, transform_indices = @transform_8, window_bounds = array<i64: 1, 256>}, {pipeline_mode = #tpu.pipeline_mode<synchronous>, transform_indices = @transform_9, window_bounds = array<i64: 128, 32>}, {pipeline_mode = #tpu.pipeline_mode<synchronous>, transform_indices = @transform_10, window_bounds = array<i64: 1, 32>}, {transform_indices = @transform_11, window_bounds = array<i64: 1, 1, 32>}]} {
    %cst = arith.constant 0.000000e+00 : f32
    %0 = vector.broadcast %cst : f32 to vector<1x72xf32>
    %c0 = arith.constant 0 : index
    %c0_0 = arith.constant 0 : index
    %1 = vector.load %arg13[%c0, %c0_0] : memref<18x72xf32, #tpu.memory_space<vmem>>, vector<1x72xf32>
    tpu.vector_store %arg13[%c0, %c0_0], %0 {strides = array<i32>} : memref<18x72xf32, #tpu.memory_space<vmem>>, vector<1x72xf32>,
    %c17 = arith.constant 17 : index
    %c0_1 = arith.constant 0 : index
    %2 = vector.load %arg13[%c17, %c0_1] : memref<18x72xf32, #tpu.memory_space<vmem>>, vector<1x72xf32>
    tpu.vector_store %arg13[%c17, %c0_1], %0 {strides = array<i32>} : memref<18x72xf32, #tpu.memory_space<vmem>>, vector<1x72xf32>,
    %cst_2 = arith.constant 0.000000e+00 : f32
    %3 = vector.broadcast %cst_2 : f32 to vector<18x4xf32>
    %c0_3 = arith.constant 0 : index
    %c0_4 = arith.constant 0 : index
    %4 = vector.load %arg13[%c0_3, %c0_4] : memref<18x72xf32, #tpu.memory_space<vmem>>, vector<18x4xf32>
    tpu.vector_store %arg13[%c0_3, %c0_4], %3 {strides = array<i32>} : memref<18x72xf32, #tpu.memory_space<vmem>>, vector<18x4xf32>,
    %c0_5 = arith.constant 0 : index
    %c68 = arith.constant 68 : index
    %5 = vector.load %arg13[%c0_5, %c68] : memref<18x72xf32, #tpu.memory_space<vmem>>, vector<18x4xf32>
    tpu.vector_store %arg13[%c0_5, %c68], %3 {strides = array<i32>} : memref<18x72xf32, #tpu.memory_space<vmem>>, vector<18x4xf32>,
    %c0_6 = arith.constant 0 : index
    %c0_7 = arith.constant 0 : index
    %c0_8 = arith.constant 0 : index
    %6 = vector.load %arg1[%c0_6, %c0_7, %c0_8] : memref<1x16x64xf32, #tpu.memory_space<vmem>>, vector<1x16x64xf32>
    %7 = vector.shape_cast %6 : vector<1x16x64xf32> to vector<16x64xf32>
    %c1 = arith.constant 1 : index
    %c4 = arith.constant 4 : index
    %8 = vector.load %arg13[%c1, %c4] : memref<18x72xf32, #tpu.memory_space<vmem>>, vector<16x64xf32>
    tpu.vector_store %arg13[%c1, %c4], %7 {strides = array<i32>} : memref<18x72xf32, #tpu.memory_space<vmem>>, vector<16x64xf32>,
    %c0_9 = arith.constant 0 : index
    %c0_10 = arith.constant 0 : index
    %9 = vector.load %arg13[%c0_9, %c0_10] : memref<18x72xf32, #tpu.memory_space<vmem>>, vector<16x72xf32>
    %10 = arith.truncf %9 : vector<16x72xf32> to vector<16x72xbf16>
    %c0_11 = arith.constant 0 : index
    %c0_12 = arith.constant 0 : index
    %c0_13 = arith.constant 0 : index
    %11 = vector.load %arg2[%c0_11, %c0_12, %c0_13] : memref<3x72x256xbf16, #tpu.memory_space<vmem>>, vector<1x72x256xbf16>
    %12 = vector.shape_cast %11 : vector<1x72x256xbf16> to vector<72x256xbf16>
    %cst_14 = arith.constant dense<0.000000e+00> : vector<16x256xf32>
    %13 = tpu.matmul %10, %12, %cst_14 {dimension_numbers = #tpu.dot_dimension_numbers<[1], [0], [0], [1], [0, 0, 1, 1], [], []>} : vector<16x72xbf16>, vector<72x256xbf16>, vector<16x256xf32> -> vector<16x256xf32>
    %c1_15 = arith.constant 1 : index
    %c0_16 = arith.constant 0 : index
    %14 = vector.load %arg13[%c1_15, %c0_16] : memref<18x72xf32, #tpu.memory_space<vmem>>, vector<16x72xf32>
    %15 = arith.truncf %14 : vector<16x72xf32> to vector<16x72xbf16>
    %c1_17 = arith.constant 1 : index
    %c0_18 = arith.constant 0 : index
    %c0_19 = arith.constant 0 : index
    %16 = vector.load %arg2[%c1_17, %c0_18, %c0_19] : memref<3x72x256xbf16, #tpu.memory_space<vmem>>, vector<1x72x256xbf16>
    %17 = vector.shape_cast %16 : vector<1x72x256xbf16> to vector<72x256xbf16>
    %cst_20 = arith.constant dense<0.000000e+00> : vector<16x256xf32>
    %18 = tpu.matmul %15, %17, %cst_20 {dimension_numbers = #tpu.dot_dimension_numbers<[1], [0], [0], [1], [0, 0, 1, 1], [], []>} : vector<16x72xbf16>, vector<72x256xbf16>, vector<16x256xf32> -> vector<16x256xf32>
    %19 = arith.addf %13, %18 : vector<16x256xf32>
    %c2 = arith.constant 2 : index
    %c0_21 = arith.constant 0 : index
    %20 = vector.load %arg13[%c2, %c0_21] : memref<18x72xf32, #tpu.memory_space<vmem>>, vector<16x72xf32>
    %21 = arith.truncf %20 : vector<16x72xf32> to vector<16x72xbf16>
    %c2_22 = arith.constant 2 : index
    %c0_23 = arith.constant 0 : index
    %c0_24 = arith.constant 0 : index
    %22 = vector.load %arg2[%c2_22, %c0_23, %c0_24] : memref<3x72x256xbf16, #tpu.memory_space<vmem>>, vector<1x72x256xbf16>
    %23 = vector.shape_cast %22 : vector<1x72x256xbf16> to vector<72x256xbf16>
    %cst_25 = arith.constant dense<0.000000e+00> : vector<16x256xf32>
    %24 = tpu.matmul %21, %23, %cst_25 {dimension_numbers = #tpu.dot_dimension_numbers<[1], [0], [0], [1], [0, 0, 1, 1], [], []>} : vector<16x72xbf16>, vector<72x256xbf16>, vector<16x256xf32> -> vector<16x256xf32>
    %25 = arith.addf %19, %24 : vector<16x256xf32>
    %c0_26 = arith.constant 0 : index
    %c0_27 = arith.constant 0 : index
    %26 = vector.load %arg3[%c0_26, %c0_27] : memref<1x256xf32, #tpu.memory_space<vmem>>, vector<1x256xf32>
    %27 = vector.broadcast %26 : vector<1x256xf32> to vector<16x256xf32>
    %28 = arith.addf %25, %27 : vector<16x256xf32>
    %cst_28 = arith.constant 0.000000e+00 : f32
    %29 = vector.broadcast %cst_28 : f32 to vector<16x256xf32>
    %30 = arith.maximumf %28, %29 : vector<16x256xf32>
    %cst_29 = arith.constant 0.000000e+00 : f32
    %31 = vector.broadcast %cst_29 : f32 to vector<1x288xf32>
    %c0_30 = arith.constant 0 : index
    %c0_31 = arith.constant 0 : index
    %32 = vector.load %arg14[%c0_30, %c0_31] : memref<18x288xf32, #tpu.memory_space<vmem>>, vector<1x288xf32>
    tpu.vector_store %arg14[%c0_30, %c0_31], %31 {strides = array<i32>} : memref<18x288xf32, #tpu.memory_space<vmem>>, vector<1x288xf32>,
    %c17_32 = arith.constant 17 : index
    %c0_33 = arith.constant 0 : index
    %33 = vector.load %arg14[%c17_32, %c0_33] : memref<18x288xf32, #tpu.memory_space<vmem>>, vector<1x288xf32>
    tpu.vector_store %arg14[%c17_32, %c0_33], %31 {strides = array<i32>} : memref<18x288xf32, #tpu.memory_space<vmem>>, vector<1x288xf32>,
    %cst_34 = arith.constant 0.000000e+00 : f32
    %34 = vector.broadcast %cst_34 : f32 to vector<18x16xf32>
    %c0_35 = arith.constant 0 : index
    %c0_36 = arith.constant 0 : index
    %35 = vector.load %arg14[%c0_35, %c0_36] : memref<18x288xf32, #tpu.memory_space<vmem>>, vector<18x16xf32>
    tpu.vector_store %arg14[%c0_35, %c0_36], %34 {strides = array<i32>} : memref<18x288xf32, #tpu.memory_space<vmem>>, vector<18x16xf32>,
    %c0_37 = arith.constant 0 : index
    %c272 = arith.constant 272 : index
    %36 = vector.load %arg14[%c0_37, %c272] : memref<18x288xf32, #tpu.memory_space<vmem>>, vector<18x16xf32>
    tpu.vector_store %arg14[%c0_37, %c272], %34 {strides = array<i32>} : memref<18x288xf32, #tpu.memory_space<vmem>>, vector<18x16xf32>,
    %c1_38 = arith.constant 1 : index
    %c16 = arith.constant 16 : index
    %37 = vector.load %arg14[%c1_38, %c16] : memref<18x288xf32, #tpu.memory_space<vmem>>, vector<16x256xf32>
    tpu.vector_store %arg14[%c1_38, %c16], %30 {strides = array<i32>} : memref<18x288xf32, #tpu.memory_space<vmem>>, vector<16x256xf32>,
    %c0_39 = arith.constant 0 : index
    %c0_40 = arith.constant 0 : index
    %38 = vector.load %arg14[%c0_39, %c0_40] : memref<18x288xf32, #tpu.memory_space<vmem>>, vector<16x288xf32>
    %39 = arith.truncf %38 : vector<16x288xf32> to vector<16x288xbf16>
    %c0_41 = arith.constant 0 : index
    %c0_42 = arith.constant 0 : index
    %c0_43 = arith.constant 0 : index
    %40 = vector.load %arg4[%c0_41, %c0_42, %c0_43] : memref<3x288x256xbf16, #tpu.memory_space<vmem>>, vector<1x288x256xbf16>
    %41 = vector.shape_cast %40 : vector<1x288x256xbf16> to vector<288x256xbf16>
    %cst_44 = arith.constant dense<0.000000e+00> : vector<16x256xf32>
    %42 = tpu.matmul %39, %41, %cst_44 {dimension_numbers = #tpu.dot_dimension_numbers<[1], [0], [0], [1], [0, 0, 1, 1], [], []>} : vector<16x288xbf16>, vector<288x256xbf16>, vector<16x256xf32> -> vector<16x256xf32>
    %c1_45 = arith.constant 1 : index
    %c0_46 = arith.constant 0 : index
    %43 = vector.load %arg14[%c1_45, %c0_46] : memref<18x288xf32, #tpu.memory_space<vmem>>, vector<16x288xf32>
    %44 = arith.truncf %43 : vector<16x288xf32> to vector<16x288xbf16>
    %c1_47 = arith.constant 1 : index
    %c0_48 = arith.constant 0 : index
    %c0_49 = arith.constant 0 : index
    %45 = vector.load %arg4[%c1_47, %c0_48, %c0_49] : memref<3x288x256xbf16, #tpu.memory_space<vmem>>, vector<1x288x256xbf16>
    %46 = vector.shape_cast %45 : vector<1x288x256xbf16> to vector<288x256xbf16>
    %cst_50 = arith.constant dense<0.000000e+00> : vector<16x256xf32>
    %47 = tpu.matmul %44, %46, %cst_50 {dimension_numbers = #tpu.dot_dimension_numbers<[1], [0], [0], [1], [0, 0, 1, 1], [], []>} : vector<16x288xbf16>, vector<288x256xbf16>, vector<16x256xf32> -> vector<16x256xf32>
    %48 = arith.addf %42, %47 : vector<16x256xf32>
    %c2_51 = arith.constant 2 : index
    %c0_52 = arith.constant 0 : index
    %49 = vector.load %arg14[%c2_51, %c0_52] : memref<18x288xf32, #tpu.memory_space<vmem>>, vector<16x288xf32>
    %50 = arith.truncf %49 : vector<16x288xf32> to vector<16x288xbf16>
    %c2_53 = arith.constant 2 : index
    %c0_54 = arith.constant 0 : index
    %c0_55 = arith.constant 0 : index
    %51 = vector.load %arg4[%c2_53, %c0_54, %c0_55] : memref<3x288x256xbf16, #tpu.memory_space<vmem>>, vector<1x288x256xbf16>
    %52 = vector.shape_cast %51 : vector<1x288x256xbf16> to vector<288x256xbf16>
    %cst_56 = arith.constant dense<0.000000e+00> : vector<16x256xf32>
    %53 = tpu.matmul %50, %52, %cst_56 {dimension_numbers = #tpu.dot_dimension_numbers<[1], [0], [0], [1], [0, 0, 1, 1], [], []>} : vector<16x288xbf16>, vector<288x256xbf16>, vector<16x256xf32> -> vector<16x256xf32>
    %54 = arith.addf %48, %53 : vector<16x256xf32>
    %c0_57 = arith.constant 0 : index
    %c0_58 = arith.constant 0 : index
    %55 = vector.load %arg5[%c0_57, %c0_58] : memref<1x256xf32, #tpu.memory_space<vmem>>, vector<1x256xf32>
    %56 = vector.broadcast %55 : vector<1x256xf32> to vector<16x256xf32>
    %57 = arith.addf %54, %56 : vector<16x256xf32>
    %cst_59 = arith.constant 0.000000e+00 : f32
    %58 = vector.broadcast %cst_59 : f32 to vector<16x256xf32>
    %59 = arith.maximumf %57, %58 : vector<16x256xf32>
    %cst_60 = arith.constant 0.000000e+00 : f32
    %60 = vector.broadcast %cst_60 : f32 to vector<1x160xf32>
    %c0_61 = arith.constant 0 : index
    %c0_62 = arith.constant 0 : index
    %61 = vector.load %arg15[%c0_61, %c0_62] : memref<10x160xf32, #tpu.memory_space<vmem>>, vector<1x160xf32>
    tpu.vector_store %arg15[%c0_61, %c0_62], %60 {strides = array<i32>} : memref<10x160xf32, #tpu.memory_space<vmem>>, vector<1x160xf32>,
    %c9 = arith.constant 9 : index
    %c0_63 = arith.constant 0 : index
    %62 = vector.load %arg15[%c9, %c0_63] : memref<10x160xf32, #tpu.memory_space<vmem>>, vector<1x160xf32>
    tpu.vector_store %arg15[%c9, %c0_63], %60 {strides = array<i32>} : memref<10x160xf32, #tpu.memory_space<vmem>>, vector<1x160xf32>,
    %cst_64 = arith.constant 0.000000e+00 : f32
    %63 = vector.broadcast %cst_64 : f32 to vector<10x16xf32>
    %c0_65 = arith.constant 0 : index
    %c0_66 = arith.constant 0 : index
    %64 = vector.load %arg15[%c0_65, %c0_66] : memref<10x160xf32, #tpu.memory_space<vmem>>, vector<10x16xf32>
    tpu.vector_store %arg15[%c0_65, %c0_66], %63 {strides = array<i32>} : memref<10x160xf32, #tpu.memory_space<vmem>>, vector<10x16xf32>,
    %c0_67 = arith.constant 0 : index
    %c144 = arith.constant 144 : index
    %65 = vector.load %arg15[%c0_67, %c144] : memref<10x160xf32, #tpu.memory_space<vmem>>, vector<10x16xf32>
    tpu.vector_store %arg15[%c0_67, %c144], %63 {strides = array<i32>} : memref<10x160xf32, #tpu.memory_space<vmem>>, vector<10x16xf32>,
    %66 = vector.shape_cast %59 : vector<16x256xf32> to vector<8x2x256xf32>
    %67 = vector.extract_strided_slice %66 {offsets = [0, 0, 0], sizes = [8, 1, 256], strides = [1, 1, 1]} : vector<8x2x256xf32> to vector<8x1x256xf32>
    %68 = vector.shape_cast %67 : vector<8x1x256xf32> to vector<8x256xf32>
    %69 = vector.extract_strided_slice %66 {offsets = [0, 1, 0], sizes = [8, 1, 256], strides = [1, 1, 1]} : vector<8x2x256xf32> to vector<8x1x256xf32>
    %70 = vector.shape_cast %69 : vector<8x1x256xf32> to vector<8x256xf32>
    %71 = arith.maximumf %68, %70 : vector<8x256xf32>
    %72 = vector.shape_cast %71 : vector<8x256xf32> to vector<8x8x32xf32>
    %73 = vector.extract_strided_slice %72 {offsets = [0, 0, 0], sizes = [8, 8, 16], strides = [1, 1, 1]} : vector<8x8x32xf32> to vector<8x8x16xf32>
    %74 = vector.extract_strided_slice %72 {offsets = [0, 0, 16], sizes = [8, 8, 16], strides = [1, 1, 1]} : vector<8x8x32xf32> to vector<8x8x16xf32>
    %75 = arith.maximumf %73, %74 : vector<8x8x16xf32>
    %76 = vector.shape_cast %75 : vector<8x8x16xf32> to vector<8x128xf32>
    %c1_68 = arith.constant 1 : index
    %c16_69 = arith.constant 16 : index
    %77 = vector.load %arg15[%c1_68, %c16_69] : memref<10x160xf32, #tpu.memory_space<vmem>>, vector<8x128xf32>
    tpu.vector_store %arg15[%c1_68, %c16_69], %76 {strides = array<i32>} : memref<10x160xf32, #tpu.memory_space<vmem>>, vector<8x128xf32>,
    %c0_70 = arith.constant 0 : index
    %c0_71 = arith.constant 0 : index
    %78 = vector.load %arg15[%c0_70, %c0_71] : memref<10x160xf32, #tpu.memory_space<vmem>>, vector<8x160xf32>
    %79 = arith.truncf %78 : vector<8x160xf32> to vector<8x160xbf16>
    %c0_72 = arith.constant 0 : index
    %c0_73 = arith.constant 0 : index
    %c0_74 = arith.constant 0 : index
    %80 = vector.load %arg6[%c0_72, %c0_73, %c0_74] : memref<3x160x256xbf16, #tpu.memory_space<vmem>>, vector<1x160x256xbf16>
    %81 = vector.shape_cast %80 : vector<1x160x256xbf16> to vector<160x256xbf16>
    %cst_75 = arith.constant dense<0.000000e+00> : vector<8x256xf32>
    %82 = tpu.matmul %79, %81, %cst_75 {dimension_numbers = #tpu.dot_dimension_numbers<[1], [0], [0], [1], [0, 0, 1, 1], [], []>} : vector<8x160xbf16>, vector<160x256xbf16>, vector<8x256xf32> -> vector<8x256xf32>
    %c1_76 = arith.constant 1 : index
    %c0_77 = arith.constant 0 : index
    %83 = vector.load %arg15[%c1_76, %c0_77] : memref<10x160xf32, #tpu.memory_space<vmem>>, vector<8x160xf32>
    %84 = arith.truncf %83 : vector<8x160xf32> to vector<8x160xbf16>
    %c1_78 = arith.constant 1 : index
    %c0_79 = arith.constant 0 : index
    %c0_80 = arith.constant 0 : index
    %85 = vector.load %arg6[%c1_78, %c0_79, %c0_80] : memref<3x160x256xbf16, #tpu.memory_space<vmem>>, vector<1x160x256xbf16>
    %86 = vector.shape_cast %85 : vector<1x160x256xbf16> to vector<160x256xbf16>
    %cst_81 = arith.constant dense<0.000000e+00> : vector<8x256xf32>
    %87 = tpu.matmul %84, %86, %cst_81 {dimension_numbers = #tpu.dot_dimension_numbers<[1], [0], [0], [1], [0, 0, 1, 1], [], []>} : vector<8x160xbf16>, vector<160x256xbf16>, vector<8x256xf32> -> vector<8x256xf32>
    %88 = arith.addf %82, %87 : vector<8x256xf32>
    %c2_82 = arith.constant 2 : index
    %c0_83 = arith.constant 0 : index
    %89 = vector.load %arg15[%c2_82, %c0_83] : memref<10x160xf32, #tpu.memory_space<vmem>>, vector<8x160xf32>
    %90 = arith.truncf %89 : vector<8x160xf32> to vector<8x160xbf16>
    %c2_84 = arith.constant 2 : index
    %c0_85 = arith.constant 0 : index
    %c0_86 = arith.constant 0 : index
    %91 = vector.load %arg6[%c2_84, %c0_85, %c0_86] : memref<3x160x256xbf16, #tpu.memory_space<vmem>>, vector<1x160x256xbf16>
    %92 = vector.shape_cast %91 : vector<1x160x256xbf16> to vector<160x256xbf16>
    %cst_87 = arith.constant dense<0.000000e+00> : vector<8x256xf32>
    %93 = tpu.matmul %90, %92, %cst_87 {dimension_numbers = #tpu.dot_dimension_numbers<[1], [0], [0], [1], [0, 0, 1, 1], [], []>} : vector<8x160xbf16>, vector<160x256xbf16>, vector<8x256xf32> -> vector<8x256xf32>
    %94 = arith.addf %88, %93 : vector<8x256xf32>
    %c0_88 = arith.constant 0 : index
    %c0_89 = arith.constant 0 : index
    %95 = vector.load %arg7[%c0_88, %c0_89] : memref<1x256xf32, #tpu.memory_space<vmem>>, vector<1x256xf32>
    %96 = vector.broadcast %95 : vector<1x256xf32> to vector<8x256xf32>
    %97 = arith.addf %94, %96 : vector<8x256xf32>
    %cst_90 = arith.constant 0.000000e+00 : f32
    %98 = vector.broadcast %cst_90 : f32 to vector<8x256xf32>
    %99 = arith.maximumf %97, %98 : vector<8x256xf32>
    %cst_91 = arith.constant 0.000000e+00 : f32
    %100 = vector.broadcast %cst_91 : f32 to vector<1x320xf32>
    %c0_92 = arith.constant 0 : index
    %c0_93 = arith.constant 0 : index
    %101 = vector.load %arg16[%c0_92, %c0_93] : memref<10x320xf32, #tpu.memory_space<vmem>>, vector<1x320xf32>
    tpu.vector_store %arg16[%c0_92, %c0_93], %100 {strides = array<i32>} : memref<10x320xf32, #tpu.memory_space<vmem>>, vector<1x320xf32>,
    %c9_94 = arith.constant 9 : index
    %c0_95 = arith.constant 0 : index
    %102 = vector.load %arg16[%c9_94, %c0_95] : memref<10x320xf32, #tpu.memory_space<vmem>>, vector<1x320xf32>
    tpu.vector_store %arg16[%c9_94, %c0_95], %100 {strides = array<i32>} : memref<10x320xf32, #tpu.memory_space<vmem>>, vector<1x320xf32>,
    %cst_96 = arith.constant 0.000000e+00 : f32
    %103 = vector.broadcast %cst_96 : f32 to vector<10x32xf32>
    %c0_97 = arith.constant 0 : index
    %c0_98 = arith.constant 0 : index
    %104 = vector.load %arg16[%c0_97, %c0_98] : memref<10x320xf32, #tpu.memory_space<vmem>>, vector<10x32xf32>
    tpu.vector_store %arg16[%c0_97, %c0_98], %103 {strides = array<i32>} : memref<10x320xf32, #tpu.memory_space<vmem>>, vector<10x32xf32>,
    %c0_99 = arith.constant 0 : index
    %c288 = arith.constant 288 : index
    %105 = vector.load %arg16[%c0_99, %c288] : memref<10x320xf32, #tpu.memory_space<vmem>>, vector<10x32xf32>
    tpu.vector_store %arg16[%c0_99, %c288], %103 {strides = array<i32>} : memref<10x320xf32, #tpu.memory_space<vmem>>, vector<10x32xf32>,
    %c1_100 = arith.constant 1 : index
    %c32 = arith.constant 32 : index
    %106 = vector.load %arg16[%c1_100, %c32] : memref<10x320xf32, #tpu.memory_space<vmem>>, vector<8x256xf32>
    tpu.vector_store %arg16[%c1_100, %c32], %99 {strides = array<i32>} : memref<10x320xf32, #tpu.memory_space<vmem>>, vector<8x256xf32>,
    %c0_101 = arith.constant 0 : index
    %c0_102 = arith.constant 0 : index
    %107 = vector.load %arg16[%c0_101, %c0_102] : memref<10x320xf32, #tpu.memory_space<vmem>>, vector<8x320xf32>
    %108 = arith.truncf %107 : vector<8x320xf32> to vector<8x320xbf16>
    %c0_103 = arith.constant 0 : index
    %c0_104 = arith.constant 0 : index
    %c0_105 = arith.constant 0 : index
    %109 = vector.load %arg8[%c0_103, %c0_104, %c0_105] : memref<3x320x256xbf16, #tpu.memory_space<vmem>>, vector<1x320x256xbf16>
    %110 = vector.shape_cast %109 : vector<1x320x256xbf16> to vector<320x256xbf16>
    %cst_106 = arith.constant dense<0.000000e+00> : vector<8x256xf32>
    %111 = tpu.matmul %108, %110, %cst_106 {dimension_numbers = #tpu.dot_dimension_numbers<[1], [0], [0], [1], [0, 0, 1, 1], [], []>} : vector<8x320xbf16>, vector<320x256xbf16>, vector<8x256xf32> -> vector<8x256xf32>
    %c1_107 = arith.constant 1 : index
    %c0_108 = arith.constant 0 : index
    %112 = vector.load %arg16[%c1_107, %c0_108] : memref<10x320xf32, #tpu.memory_space<vmem>>, vector<8x320xf32>
    %113 = arith.truncf %112 : vector<8x320xf32> to vector<8x320xbf16>
    %c1_109 = arith.constant 1 : index
    %c0_110 = arith.constant 0 : index
    %c0_111 = arith.constant 0 : index
    %114 = vector.load %arg8[%c1_109, %c0_110, %c0_111] : memref<3x320x256xbf16, #tpu.memory_space<vmem>>, vector<1x320x256xbf16>
    %115 = vector.shape_cast %114 : vector<1x320x256xbf16> to vector<320x256xbf16>
    %cst_112 = arith.constant dense<0.000000e+00> : vector<8x256xf32>
    %116 = tpu.matmul %113, %115, %cst_112 {dimension_numbers = #tpu.dot_dimension_numbers<[1], [0], [0], [1], [0, 0, 1, 1], [], []>} : vector<8x320xbf16>, vector<320x256xbf16>, vector<8x256xf32> -> vector<8x256xf32>
    %117 = arith.addf %111, %116 : vector<8x256xf32>
    %c2_113 = arith.constant 2 : index
    %c0_114 = arith.constant 0 : index
    %118 = vector.load %arg16[%c2_113, %c0_114] : memref<10x320xf32, #tpu.memory_space<vmem>>, vector<8x320xf32>
    %119 = arith.truncf %118 : vector<8x320xf32> to vector<8x320xbf16>
    %c2_115 = arith.constant 2 : index
    %c0_116 = arith.constant 0 : index
    %c0_117 = arith.constant 0 : index
    %120 = vector.load %arg8[%c2_115, %c0_116, %c0_117] : memref<3x320x256xbf16, #tpu.memory_space<vmem>>, vector<1x320x256xbf16>
    %121 = vector.shape_cast %120 : vector<1x320x256xbf16> to vector<320x256xbf16>
    %cst_118 = arith.constant dense<0.000000e+00> : vector<8x256xf32>
    %122 = tpu.matmul %119, %121, %cst_118 {dimension_numbers = #tpu.dot_dimension_numbers<[1], [0], [0], [1], [0, 0, 1, 1], [], []>} : vector<8x320xbf16>, vector<320x256xbf16>, vector<8x256xf32> -> vector<8x256xf32>
    %123 = arith.addf %117, %122 : vector<8x256xf32>
    %c0_119 = arith.constant 0 : index
    %c0_120 = arith.constant 0 : index
    %124 = vector.load %arg9[%c0_119, %c0_120] : memref<1x256xf32, #tpu.memory_space<vmem>>, vector<1x256xf32>
    %125 = vector.broadcast %124 : vector<1x256xf32> to vector<8x256xf32>
    %126 = arith.addf %123, %125 : vector<8x256xf32>
    %cst_121 = arith.constant 0.000000e+00 : f32
    %127 = vector.broadcast %cst_121 : f32 to vector<8x256xf32>
    %128 = arith.maximumf %126, %127 : vector<8x256xf32>
    %129 = vector.shape_cast %128 : vector<8x256xf32> to vector<4x2x256xf32>
    %130 = vector.extract_strided_slice %129 {offsets = [0, 0, 0], sizes = [4, 1, 256], strides = [1, 1, 1]} : vector<4x2x256xf32> to vector<4x1x256xf32>
    %131 = vector.shape_cast %130 : vector<4x1x256xf32> to vector<4x256xf32>
    %132 = vector.extract_strided_slice %129 {offsets = [0, 1, 0], sizes = [4, 1, 256], strides = [1, 1, 1]} : vector<4x2x256xf32> to vector<4x1x256xf32>
    %133 = vector.shape_cast %132 : vector<4x1x256xf32> to vector<4x256xf32>
    %134 = arith.maximumf %131, %133 : vector<4x256xf32>
    %135 = vector.shape_cast %134 : vector<4x256xf32> to vector<4x4x64xf32>
    %136 = vector.extract_strided_slice %135 {offsets = [0, 0, 0], sizes = [4, 4, 32], strides = [1, 1, 1]} : vector<4x4x64xf32> to vector<4x4x32xf32>
    %137 = vector.extract_strided_slice %135 {offsets = [0, 0, 32], sizes = [4, 4, 32], strides = [1, 1, 1]} : vector<4x4x64xf32> to vector<4x4x32xf32>
    %138 = arith.maximumf %136, %137 : vector<4x4x32xf32>
    %139 = vector.shape_cast %138 : vector<4x4x32xf32> to vector<4x128xf32>
    %cst_122 = arith.constant dense<0.000000e+00> : vector<128xf32>
    %140 = vector.multi_reduction <add>, %139, %cst_122 [0] : vector<4x128xf32> to vector<128xf32>
    %141 = vector.shape_cast %140 : vector<128xf32> to vector<1x128xf32>
    %142 = arith.truncf %141 : vector<1x128xf32> to vector<1x128xbf16>
    %c0_123 = arith.constant 0 : index
    %c0_124 = arith.constant 0 : index
    %143 = vector.load %arg10[%c0_123, %c0_124] : memref<128x32xbf16, #tpu.memory_space<vmem>>, vector<128x32xbf16>
    %cst_125 = arith.constant dense<0.000000e+00> : vector<1x32xf32>
    %144 = tpu.matmul %142, %143, %cst_125 {dimension_numbers = #tpu.dot_dimension_numbers<[1], [0], [0], [1], [0, 0, 1, 1], [], []>} : vector<1x128xbf16>, vector<128x32xbf16>, vector<1x32xf32> -> vector<1x32xf32>
    %c0_126 = arith.constant 0 : index
    %c0_127 = arith.constant 0 : index
    %145 = vector.load %arg11[%c0_126, %c0_127] : memref<1x32xf32, #tpu.memory_space<vmem>>, vector<1x32xf32>
    %146 = arith.addf %144, %145 : vector<1x32xf32>
    %147 = vector.shape_cast %146 : vector<1x32xf32> to vector<1x1x32xf32>
    %c0_128 = arith.constant 0 : index
    %c0_129 = arith.constant 0 : index
    %c0_130 = arith.constant 0 : index
    %148 = vector.load %arg12[%c0_128, %c0_129, %c0_130] : memref<1x1x32xf32, #tpu.memory_space<vmem>>, vector<1x1x32xf32>
    tpu.vector_store %arg12[%c0_128, %c0_129, %c0_130], %147 {strides = array<i32>} : memref<1x1x32xf32, #tpu.memory_space<vmem>>, vector<1x1x32xf32>,
    return
  }
  func.func @transform_0(%arg0: i32) -> (i32, i32, i32) {
    %c0_i32 = arith.constant 0 : i32
    %c0_i32_0 = arith.constant 0 : i32
    %c0_i32_1 = arith.constant 0 : i32
    return %arg0, %c0_i32, %c0_i32_0 : i32, i32, i32
  }
  func.func @transform_1(%arg0: i32) -> (i32, i32, i32) {
    %c0_i32 = arith.constant 0 : i32
    %c0_i32_0 = arith.constant 0 : i32
    %c0_i32_1 = arith.constant 0 : i32
    %c0_i32_2 = arith.constant 0 : i32
    return %c0_i32, %c0_i32_0, %c0_i32_1 : i32, i32, i32
  }
  func.func @transform_2(%arg0: i32) -> (i32, i32) {
    %c0_i32 = arith.constant 0 : i32
    %c0_i32_0 = arith.constant 0 : i32
    %c0_i32_1 = arith.constant 0 : i32
    return %c0_i32, %c0_i32_0 : i32, i32
  }
  func.func @transform_3(%arg0: i32) -> (i32, i32, i32) {
    %c0_i32 = arith.constant 0 : i32
    %c0_i32_0 = arith.constant 0 : i32
    %c0_i32_1 = arith.constant 0 : i32
    %c0_i32_2 = arith.constant 0 : i32
    return %c0_i32, %c0_i32_0, %c0_i32_1 : i32, i32, i32
  }
  func.func @transform_4(%arg0: i32) -> (i32, i32) {
    %c0_i32 = arith.constant 0 : i32
    %c0_i32_0 = arith.constant 0 : i32
    %c0_i32_1 = arith.constant 0 : i32
    return %c0_i32, %c0_i32_0 : i32, i32
  }
  func.func @transform_5(%arg0: i32) -> (i32, i32, i32) {
    %c0_i32 = arith.constant 0 : i32
    %c0_i32_0 = arith.constant 0 : i32
    %c0_i32_1 = arith.constant 0 : i32
    %c0_i32_2 = arith.constant 0 : i32
    return %c0_i32, %c0_i32_0, %c0_i32_1 : i32, i32, i32
  }
  func.func @transform_6(%arg0: i32) -> (i32, i32) {
    %c0_i32 = arith.constant 0 : i32
    %c0_i32_0 = arith.constant 0 : i32
    %c0_i32_1 = arith.constant 0 : i32
    return %c0_i32, %c0_i32_0 : i32, i32
  }
  func.func @transform_7(%arg0: i32) -> (i32, i32, i32) {
    %c0_i32 = arith.constant 0 : i32
    %c0_i32_0 = arith.constant 0 : i32
    %c0_i32_1 = arith.constant 0 : i32
    %c0_i32_2 = arith.constant 0 : i32
    return %c0_i32, %c0_i32_0, %c0_i32_1 : i32, i32, i32
  }
  func.func @transform_8(%arg0: i32) -> (i32, i32) {
    %c0_i32 = arith.constant 0 : i32
    %c0_i32_0 = arith.constant 0 : i32
    %c0_i32_1 = arith.constant 0 : i32
    return %c0_i32, %c0_i32_0 : i32, i32
  }
  func.func @transform_9(%arg0: i32) -> (i32, i32) {
    %c0_i32 = arith.constant 0 : i32
    %c0_i32_0 = arith.constant 0 : i32
    %c0_i32_1 = arith.constant 0 : i32
    return %c0_i32, %c0_i32_0 : i32, i32
  }
  func.func @transform_10(%arg0: i32) -> (i32, i32) {
    %c0_i32 = arith.constant 0 : i32
    %c0_i32_0 = arith.constant 0 : i32
    %c0_i32_1 = arith.constant 0 : i32
    return %c0_i32, %c0_i32_0 : i32, i32
  }
  func.func @transform_11(%arg0: i32) -> (i32, i32, i32) {
    %c0_i32 = arith.constant 0 : i32
    %c0_i32_0 = arith.constant 0 : i32
    %c0_i32_1 = arith.constant 0 : i32
    return %arg0, %c0_i32, %c0_i32_0 : i32, i32, i32
  }
}

</mosaic_0001>

<llo_original>
// kernel: tile.28
$region0: #{tile.28}
  #allocation0 [shape = 's32[1]{0}', space=sflag, size = 0x4, scoped, tag = 'scoped memory for tile.28']
  %s0 = inlined_call_operand.vmem [shape: f32[16], index: 0, kind: input, shape index: {}]
  %s1 = inlined_call_operand.vmem [shape: f32[16,16], index: 1, kind: output, shape index: {}]
  // Predicated region
  $region2: #{tile.28} parent=0 // pred_check
    _
  $region3: #{tile.28} parent=0 // pred_check_branch
    %3 = sbr.rel (0) target = $region5
  $region4: #{tile.28} parent=0 // pred_region
    _
  $region5: #{tile.28} parent=0 // pred_fallthru
    _
  %v4 = vld [vmem:[%s0] ss:$0 sm:$0xff]
  %5 = vst [vmem:[%s1] sm:$0xff] %v4
  %s6 = scalar_lea.vmem %s1, 8
  %7 = vst [vmem:[%s6] sm:$0xff] %v4

// kernel: tile.29
$region0: #{tile.29}
  %s0 = inlined_call_operand.vmem [shape: f32[16,16], index: 0, kind: input, shape index: {}]
  %s1 = inlined_call_operand.vmem [shape: f32[1,256], index: 1, kind: output, shape index: {}]
  $region1: #{tile.29} parent=0
    #allocation0 [shape = 'u8[8192]{0}', space=vmem, size = 0x2000, scoped, tag = 'scoped mem for output reshape']
    %s2 = smov 3
    %v3 = vld [vmem:[%s0] ss:$8 sm:%s2]
    %vm4 = vcmask 130048
    %5 = vst.msk [vmem:[#allocation0] ss:$8 sm:$0x3] %vm4, %v3
    %s6 = scalar_lea.vmem %s0, 7
    %s7 = smov 3
    %v8 = vld [vmem:[%s6] ss:$8 sm:%s7]
    %9 = vrot.lane.b32.xlu0 %v8, 112
    %v10 = vpop.permute.xlu0 %9
    %vm11 = vcmask 1048448
    %12 = vst.msk [vmem:[#allocation0] ss:$8 sm:$0x3] %vm11, %v10
    %s13 = scalar_lea.vmem %s0, 6
    %s14 = smov 3
    %v15 = vld [vmem:[%s13] ss:$8 sm:%s14]
    %16 = vrot.lane.b32.xlu0 %v15, 96
    %v17 = vpop.permute.xlu0 %16
    %vm18 = vcmask 917248
    %19 = vst.msk [vmem:[#allocation0] ss:$8 sm:$0x3] %vm18, %v17
    %s20 = scalar_lea.vmem %s0, 5
    %s21 = smov 3
    %v22 = vld [vmem:[%s20] ss:$8 sm:%s21]
    %23 = vrot.lane.b32.xlu0 %v22, 80
    %v24 = vpop.permute.xlu0 %23
    %vm25 = vcmask 786048
    %26 = vst.msk [vmem:[#allocation0] ss:$8 sm:$0x3] %vm25, %v24
    %s27 = scalar_lea.vmem %s0, 4
    %s28 = smov 3
    %v29 = vld [vmem:[%s27] ss:$8 sm:%s28]
    %30 = vrot.lane.b32.xlu0 %v29, 64
    %v31 = vpop.permute.xlu0 %30
    %vm32 = vcmask 654848
    %33 = vst.msk [vmem:[#allocation0] ss:$8 sm:$0x3] %vm32, %v31
    %s34 = scalar_lea.vmem %s0, 3
    %s35 = smov 3
    %v36 = vld [vmem:[%s34] ss:$8 sm:%s35]
    %37 = vrot.lane.b32.xlu0 %v36, 48
    %v38 = vpop.permute.xlu0 %37
    %vm39 = vcmask 523648
    %40 = vst.msk [vmem:[#allocation0] ss:$8 sm:$0x3] %vm39, %v38
    %s41 = scalar_lea.vmem %s0, 2
    %s42 = smov 3
    %v43 = vld [vmem:[%s41] ss:$8 sm:%s42]
    %44 = vrot.lane.b32.xlu0 %v43, 32
    %v45 = vpop.permute.xlu0 %44
    %vm46 = vcmask 392448
    %47 = vst.msk [vmem:[#allocation0] ss:$8 sm:$0x3] %vm46, %v45
    %s48 = scalar_lea.vmem %s0, 1
    %s49 = smov 3
    %v50 = vld [vmem:[%s48] ss:$8 sm:%s49]
    %51 = vrot.lane.b32.xlu0 %v50, 16
    %v52 = vpop.permute.xlu0 %51
    %vm53 = vcmask 261248
    %54 = vst.msk [vmem:[#allocation0] ss:$8 sm:$0x3] %vm53, %v52
    %s56 = sshll.u32 1, 1
    %s57 = ssub.s32 %s56, 1
    %v59 = vld [vmem:[#allocation0] sm:%s57]
    %s60 = sshll.u32 1, 1
    %s61 = ssub.s32 %s60, 1
    %62 = vst [vmem:[%s1] sm:%s61] %v59
    %s63 = scalar_lea.vmem [#allocation0], 8
    %v64 = vld [vmem:[%s63] sm:%s57]
    %s65 = sshll.u32 1, 1
    %s66 = ssub.s32 %s65, 1
    %s67 = scalar_lea.vmem %s1, 1
    %68 = vst [vmem:[%s67] sm:%s66] %v64

// kernel: tile.38
$region0: #{tile.38}
  #allocation0 [shape = 's32[1]{0}', space=sflag, size = 0x4, scoped, tag = 'scoped memory for tile.38']
  %s0 = inlined_call_operand.vmem [shape: f32[32], index: 0, kind: input, shape index: {}]
  %s1 = inlined_call_operand.vmem [shape: f32[8,32], index: 1, kind: output, shape index: {}]
  // Predicated region
  $region2: #{tile.38} parent=0 // pred_check
    _
  $region3: #{tile.38} parent=0 // pred_check_branch
    %3 = sbr.rel (0) target = $region5
  $region4: #{tile.38} parent=0 // pred_region
    _
  $region5: #{tile.38} parent=0 // pred_fallthru
    _
  %v4 = vld [vmem:[%s0] ss:$0 sm:$0xff]
  %5 = vst [vmem:[%s1] sm:$0xff] %v4

// kernel: tile.39
$region0: #{tile.39}
  %s0 = inlined_call_operand.vmem [shape: f32[8,32], index: 0, kind: input, shape index: {}]
  %s1 = inlined_call_operand.vmem [shape: f32[1,256], index: 1, kind: output, shape index: {}]
  $region1: #{tile.39} parent=0
    #allocation0 [shape = 'u8[8192]{0}', space=vmem, size = 0x2000, scoped, tag = 'scoped mem for output reshape']
    %s2 = smov 3
    %v3 = vld [vmem:[%s0] ss:$4 sm:%s2]
    %vm4 = vcmask 261120
    %5 = vst.msk [vmem:[#allocation0] ss:$8 sm:$0x3] %vm4, %v3
    %s6 = scalar_lea.vmem %s0, 3
    %s7 = smov 3
    %v8 = vld [vmem:[%s6] ss:$4 sm:%s7]
    %9 = vrot.lane.b32.xlu0 %v8, 96
    %v10 = vpop.permute.xlu0 %9
    %vm11 = vcmask 1048320
    %12 = vst.msk [vmem:[#allocation0] ss:$8 sm:$0x3] %vm11, %v10
    %s13 = scalar_lea.vmem %s0, 2
    %s14 = smov 3
    %v15 = vld [vmem:[%s13] ss:$4 sm:%s14]
    %16 = vrot.lane.b32.xlu0 %v15, 64
    %v17 = vpop.permute.xlu0 %16
    %vm18 = vcmask 785920
    %19 = vst.msk [vmem:[#allocation0] ss:$8 sm:$0x3] %vm18, %v17
    %s20 = scalar_lea.vmem %s0, 1
    %s21 = smov 3
    %v22 = vld [vmem:[%s20] ss:$4 sm:%s21]
    %23 = vrot.lane.b32.xlu0 %v22, 32
    %v24 = vpop.permute.xlu0 %23
    %vm25 = vcmask 523520
    %26 = vst.msk [vmem:[#allocation0] ss:$8 sm:$0x3] %vm25, %v24
    %s28 = sshll.u32 1, 1
    %s29 = ssub.s32 %s28, 1
    %v31 = vld [vmem:[#allocation0] sm:%s29]
    %s32 = sshll.u32 1, 1
    %s33 = ssub.s32 %s32, 1
    %34 = vst [vmem:[%s1] sm:%s33] %v31
    %s35 = scalar_lea.vmem [#allocation0], 8
    %v36 = vld [vmem:[%s35] sm:%s29]
    %s37 = sshll.u32 1, 1
    %s38 = ssub.s32 %s37, 1
    %s39 = scalar_lea.vmem %s1, 1
    %40 = vst [vmem:[%s39] sm:%s38] %v36

// kernel: discriminator_forward.1
$region0: #{discriminator_forward.1}
  #allocation0 [shape = 'u32[]', space=smem, size = 0x4, offset = 0x4, fixed_abs, tag = 'smem constant byte address 0x4 - core index']
  #allocation1 [shape = 'u32[144,128]{1,0:T(1,128)}', space=vmem, size = 0x12000, scoped, tag = 'internal scratch']
  #allocation2 [shape = 'f32[18,72]{1,0:T(8,128)}', space=vmem, size = 0x3000, scoped, tag = 'scratch operand']
  #allocation3 [shape = 'f32[18,288]{1,0:T(8,128)}', space=vmem, size = 0x9000, scoped, tag = 'scratch operand']
  #allocation4 [shape = 'f32[10,160]{1,0:T(8,128)}', space=vmem, size = 0x4000, scoped, tag = 'scratch operand']
  #allocation5 [shape = 'f32[10,320]{1,0:T(8,128)}', space=vmem, size = 0x6000, scoped, tag = 'scratch operand']
  %s0 = inlined_call_operand.vmem [shape: f32[2,16,64], index: 0, kind: input, shape index: {}]
  %s1 = inlined_call_operand.vmem [shape: bf16[3,72,256], index: 1, kind: input, shape index: {}]
  %s2 = inlined_call_operand.vmem [shape: f32[1,256], index: 2, kind: input, shape index: {}]
  %s3 = inlined_call_operand.vmem [shape: bf16[3,288,256], index: 3, kind: input, shape index: {}]
  %s4 = inlined_call_operand.vmem [shape: f32[1,256], index: 4, kind: input, shape index: {}]
  %s5 = inlined_call_operand.vmem [shape: bf16[3,160,256], index: 5, kind: input, shape index: {}]
  %s6 = inlined_call_operand.vmem [shape: f32[1,256], index: 6, kind: input, shape index: {}]
  %s7 = inlined_call_operand.vmem [shape: bf16[3,320,256], index: 7, kind: input, shape index: {}]
  %s8 = inlined_call_operand.vmem [shape: f32[1,256], index: 8, kind: input, shape index: {}]
  %s9 = inlined_call_operand.vmem [shape: bf16[128,32], index: 9, kind: input, shape index: {}]
  %s10 = inlined_call_operand.vmem [shape: f32[1,32], index: 10, kind: input, shape index: {}]
  %s11 = inlined_call_operand.hbm [shape: f32[2,1,32], index: 11, kind: output, shape index: {}]
  %s12 = sld [smem:[#allocation0]]
  $region77: #{discriminator_forward.1} parent=0
    _
  %s14 = ssub.s32 1, %s12
  %s15 = scalar_select 0, %s14, %s12
  $region1: #{discriminator_forward.1} parent=0
    #allocation6 [shape = 'u8[1024]{0}', space=vmem, size = 0x400, scoped, tag = 'output window, operand 0']
    #allocation7 [shape = 's32[2]{0}', space=sflag, size = 0x8, scoped, tag = 'scoped memory for discriminator_forward.1']
    %16 = vsyncpa [#allocation7], 0
    %s17 = scalar_lea.sflag [#allocation7], 1
    %18 = vsyncpa %s17, 0
    loop: start=0, step=1, limit=4
    $region2: #{discriminator_forward.1} parent=1 // loop_pre_header
      _
    $region3: #{discriminator_forward.1} parent=1 // loop_header
      %s20 = sphi 0, %s24
      %p21 = scmp.ge.s32.totalorder %s20, 4
      %s30 = sphi 0, %s32
      %s33 = sphi 0, %s30
      %s34 = sphi 0, %s33
      %s50 = sphi 0, %s34
      %s54 = sphi 0, %s54
      %s56 = sphi 0, %s54
      %s57 = sphi 0, %s56
      %s71 = sphi 0, %s57
      %s75 = sphi 0, %s75
      %s77 = sphi 0, %s75
      %s78 = sphi 0, %s77
      %s92 = sphi 0, %s78
      %s96 = sphi 0, %s96
      %s98 = sphi 0, %s96
      %s99 = sphi 0, %s98
      %s113 = sphi 0, %s99
      %s117 = sphi 0, %s117
      %s119 = sphi 0, %s117
      %s120 = sphi 0, %s119
      %s134 = sphi 0, %s120
      %s138 = sphi 0, %s138
      %s140 = sphi 0, %s138
      %s141 = sphi 0, %s140
      %s155 = sphi 0, %s141
      %s159 = sphi 0, %s159
      %s161 = sphi 0, %s159
      %s162 = sphi 0, %s161
      %s176 = sphi 0, %s162
      %s180 = sphi 0, %s180
      %s182 = sphi 0, %s180
      %s183 = sphi 0, %s182
      %s197 = sphi 0, %s183
      %s201 = sphi 0, %s201
      %s203 = sphi 0, %s201
      %s204 = sphi 0, %s203
      %s218 = sphi 0, %s204
      %s222 = sphi 0, %s222
      %s224 = sphi 0, %s222
      %s225 = sphi 0, %s224
      %s239 = sphi 0, %s225
      %s243 = sphi 0, %s243
      %s245 = sphi 0, %s243
      %s246 = sphi 0, %s245
      %s260 = sphi 0, %s246
      %s266 = sphi 0, %s268
      %s269 = sphi 0, %s266
      %s270 = sphi 0, %s269
      %s286 = sphi 0, %s270
    $region4: #{discriminator_forward.1} parent=1 // loop_header_branch
      %23 = sbr.rel (%p21) target = $region8
    $region5: #{discriminator_forward.1} parent=1 // loop_body
      %s25 = ssub.s32 %s20, 1
      %s26 = ssub.s32 %s20, 2
      %s27 = sadd.s32 %s20, 1
      %s28 = ssub.s32 %s20, %s27
      %p29 = scmp.eq.s32.totalorder %s28, 0
      %s31 = sadd.s32 %s30, 1
      %s32 = scalar_select %p29, %s30, %s31
      %p35 = pneg %p29
      %p36 = scmp.eq.s32.totalorder %s20, 1
      %p37 = por %p35, %p36
      %p38 = scmp.ne.s32.totalorder %s30, %s33
      %p39 = scmp.eq.s32.totalorder %s20, 0
      %p40 = por %p38, %p39
      %p41 = scmp.ne.s32.totalorder %s30, %s33
      %p42 = scmp.eq.s32.totalorder %s25, 1
      %p43 = por %p41, %p42
      %p44 = scmp.ne.s32.totalorder %s33, %s34
      %p45 = scmp.eq.s32.totalorder %s25, 0
      %p46 = por %p44, %p45
      %p47 = scmp.ne.s32.totalorder %s33, %s34
      %p48 = scmp.eq.s32.totalorder %s26, 1
      %p49 = por %p47, %p48
      %p51 = scmp.ne.s32.totalorder %s34, %s50
      %p52 = scmp.eq.s32.totalorder %s26, 0
      %p53 = por %p51, %p52
      %s55 = sadd.s32 %s54, 1
      %p58 = scmp.eq.s32.totalorder %s20, 1
      %p59 = scmp.ne.s32.totalorder %s54, %s56
      %p60 = scmp.eq.s32.totalorder %s20, 0
      %p61 = por %p59, %p60
      %p62 = scmp.ne.s32.totalorder %s54, %s56
      %p63 = scmp.eq.s32.totalorder %s25, 1
      %p64 = por %p62, %p63
      %p65 = scmp.ne.s32.totalorder %s56, %s57
      %p66 = scmp.eq.s32.totalorder %s25, 0
      %p67 = por %p65, %p66
      %p68 = scmp.ne.s32.totalorder %s56, %s57
      %p69 = scmp.eq.s32.totalorder %s26, 1
      %p70 = por %p68, %p69
      %p72 = scmp.ne.s32.totalorder %s57, %s71
      %p73 = scmp.eq.s32.totalorder %s26, 0
      %p74 = por %p72, %p73
      %s76 = sadd.s32 %s75, 1
      %p79 = scmp.eq.s32.totalorder %s20, 1
      %p80 = scmp.ne.s32.totalorder %s75, %s77
      %p81 = scmp.eq.s32.totalorder %s20, 0
      %p82 = por %p80, %p81
      %p83 = scmp.ne.s32.totalorder %s75, %s77
      %p84 = scmp.eq.s32.totalorder %s25, 1
      %p85 = por %p83, %p84
      %p86 = scmp.ne.s32.totalorder %s77, %s78
      %p87 = scmp.eq.s32.totalorder %s25, 0
      %p88 = por %p86, %p87
      %p89 = scmp.ne.s32.totalorder %s77, %s78
      %p90 = scmp.eq.s32.totalorder %s26, 1
      %p91 = por %p89, %p90
      %p93 = scmp.ne.s32.totalorder %s78, %s92
      %p94 = scmp.eq.s32.totalorder %s26, 0
      %p95 = por %p93, %p94
      %s97 = sadd.s32 %s96, 1
      %p100 = scmp.eq.s32.totalorder %s20, 1
      %p101 = scmp.ne.s32.totalorder %s96, %s98
      %p102 = scmp.eq.s32.totalorder %s20, 0
      %p103 = por %p101, %p102
      %p104 = scmp.ne.s32.totalorder %s96, %s98
      %p105 = scmp.eq.s32.totalorder %s25, 1
      %p106 = por %p104, %p105
      %p107 = scmp.ne.s32.totalorder %s98, %s99
      %p108 = scmp.eq.s32.totalorder %s25, 0
      %p109 = por %p107, %p108
      %p110 = scmp.ne.s32.totalorder %s98, %s99
      %p111 = scmp.eq.s32.totalorder %s26, 1
      %p112 = por %p110, %p111
      %p114 = scmp.ne.s32.totalorder %s99, %s113
      %p115 = scmp.eq.s32.totalorder %s26, 0
      %p116 = por %p114, %p115
      %s118 = sadd.s32 %s117, 1
      %p121 = scmp.eq.s32.totalorder %s20, 1
      %p122 = scmp.ne.s32.totalorder %s117, %s119
      %p123 = scmp.eq.s32.totalorder %s20, 0
      %p124 = por %p122, %p123
      %p125 = scmp.ne.s32.totalorder %s117, %s119
      %p126 = scmp.eq.s32.totalorder %s25, 1
      %p127 = por %p125, %p126
      %p128 = scmp.ne.s32.totalorder %s119, %s120
      %p129 = scmp.eq.s32.totalorder %s25, 0
      %p130 = por %p128, %p129
      %p131 = scmp.ne.s32.totalorder %s119, %s120
      %p132 = scmp.eq.s32.totalorder %s26, 1
      %p133 = por %p131, %p132
      %p135 = scmp.ne.s32.totalorder %s120, %s134
      %p136 = scmp.eq.s32.totalorder %s26, 0
      %p137 = por %p135, %p136
      %s139 = sadd.s32 %s138, 1
      %p142 = scmp.eq.s32.totalorder %s20, 1
      %p143 = scmp.ne.s32.totalorder %s138, %s140
      %p144 = scmp.eq.s32.totalorder %s20, 0
      %p145 = por %p143, %p144
      %p146 = scmp.ne.s32.totalorder %s138, %s140
      %p147 = scmp.eq.s32.totalorder %s25, 1
      %p148 = por %p146, %p147
      %p149 = scmp.ne.s32.totalorder %s140, %s141
      %p150 = scmp.eq.s32.totalorder %s25, 0
      %p151 = por %p149, %p150
      %p152 = scmp.ne.s32.totalorder %s140, %s141
      %p153 = scmp.eq.s32.totalorder %s26, 1
      %p154 = por %p152, %p153
      %p156 = scmp.ne.s32.totalorder %s141, %s155
      %p157 = scmp.eq.s32.totalorder %s26, 0
      %p158 = por %p156, %p157
      %s160 = sadd.s32 %s159, 1
      %p163 = scmp.eq.s32.totalorder %s20, 1
      %p164 = scmp.ne.s32.totalorder %s159, %s161
      %p165 = scmp.eq.s32.totalorder %s20, 0
      %p166 = por %p164, %p165
      %p167 = scmp.ne.s32.totalorder %s159, %s161
      %p168 = scmp.eq.s32.totalorder %s25, 1
      %p169 = por %p167, %p168
      %p170 = scmp.ne.s32.totalorder %s161, %s162
      %p171 = scmp.eq.s32.totalorder %s25, 0
      %p172 = por %p170, %p171
      %p173 = scmp.ne.s32.totalorder %s161, %s162
      %p174 = scmp.eq.s32.totalorder %s26, 1
      %p175 = por %p173, %p174
      %p177 = scmp.ne.s32.totalorder %s162, %s176
      %p178 = scmp.eq.s32.totalorder %s26, 0
      %p179 = por %p177, %p178
      %s181 = sadd.s32 %s180, 1
      %p184 = scmp.eq.s32.totalorder %s20, 1
      %p185 = scmp.ne.s32.totalorder %s180, %s182
      %p186 = scmp.eq.s32.totalorder %s20, 0
      %p187 = por %p185, %p186
      %p188 = scmp.ne.s32.totalorder %s180, %s182
      %p189 = scmp.eq.s32.totalorder %s25, 1
      %p190 = por %p188, %p189
      %p191 = scmp.ne.s32.totalorder %s182, %s183
      %p192 = scmp.eq.s32.totalorder %s25, 0
      %p193 = por %p191, %p192
      %p194 = scmp.ne.s32.totalorder %s182, %s183
      %p195 = scmp.eq.s32.totalorder %s26, 1
      %p196 = por %p194, %p195
      %p198 = scmp.ne.s32.totalorder %s183, %s197
      %p199 = scmp.eq.s32.totalorder %s26, 0
      %p200 = por %p198, %p199
      %s202 = sadd.s32 %s201, 1
      %p205 = scmp.eq.s32.totalorder %s20, 1
      %p206 = scmp.ne.s32.totalorder %s201, %s203
      %p207 = scmp.eq.s32.totalorder %s20, 0
      %p208 = por %p206, %p207
      %p209 = scmp.ne.s32.totalorder %s201, %s203
      %p210 = scmp.eq.s32.totalorder %s25, 1
      %p211 = por %p209, %p210
      %p212 = scmp.ne.s32.totalorder %s203, %s204
      %p213 = scmp.eq.s32.totalorder %s25, 0
      %p214 = por %p212, %p213
      %p215 = scmp.ne.s32.totalorder %s203, %s204
      %p216 = scmp.eq.s32.totalorder %s26, 1
      %p217 = por %p215, %p216
      %p219 = scmp.ne.s32.totalorder %s204, %s218
      %p220 = scmp.eq.s32.totalorder %s26, 0
      %p221 = por %p219, %p220
      %s223 = sadd.s32 %s222, 1
      %p226 = scmp.eq.s32.totalorder %s20, 1
      %p227 = scmp.ne.s32.totalorder %s222, %s224
      %p228 = scmp.eq.s32.totalorder %s20, 0
      %p229 = por %p227, %p228
      %p230 = scmp.ne.s32.totalorder %s222, %s224
      %p231 = scmp.eq.s32.totalorder %s25, 1
      %p232 = por %p230, %p231
      %p233 = scmp.ne.s32.totalorder %s224, %s225
      %p234 = scmp.eq.s32.totalorder %s25, 0
      %p235 = por %p233, %p234
      %p236 = scmp.ne.s32.totalorder %s224, %s225
      %p237 = scmp.eq.s32.totalorder %s26, 1
      %p238 = por %p236, %p237
      %p240 = scmp.ne.s32.totalorder %s225, %s239
      %p241 = scmp.eq.s32.totalorder %s26, 0
      %p242 = por %p240, %p241
      %s244 = sadd.s32 %s243, 1
      %p247 = scmp.eq.s32.totalorder %s20, 1
      %p248 = scmp.ne.s32.totalorder %s243, %s245
      %p249 = scmp.eq.s32.totalorder %s20, 0
      %p250 = por %p248, %p249
      %p251 = scmp.ne.s32.totalorder %s243, %s245
      %p252 = scmp.eq.s32.totalorder %s25, 1
      %p253 = por %p251, %p252
      %p254 = scmp.ne.s32.totalorder %s245, %s246
      %p255 = scmp.eq.s32.totalorder %s25, 0
      %p256 = por %p254, %p255
      %p257 = scmp.ne.s32.totalorder %s245, %s246
      %p258 = scmp.eq.s32.totalorder %s26, 1
      %p259 = por %p257, %p258
      %p261 = scmp.ne.s32.totalorder %s246, %s260
      %p262 = scmp.eq.s32.totalorder %s26, 0
      %p263 = por %p261, %p262
      %s264 = ssub.s32 %s20, %s27
      %p265 = scmp.eq.s32.totalorder %s264, 0
      %s267 = sadd.s32 %s266, 1
      %s268 = scalar_select %p265, %s266, %s267
      %p271 = pneg %p265
      %p272 = scmp.eq.s32.totalorder %s20, 1
      %p273 = por %p271, %p272
      %p274 = scmp.ne.s32.totalorder %s266, %s269
      %p275 = scmp.eq.s32.totalorder %s20, 0
      %p276 = por %p274, %p275
      %p277 = scmp.ne.s32.totalorder %s266, %s269
      %p278 = scmp.eq.s32.totalorder %s25, 1
      %p279 = por %p277, %p278
      %p280 = scmp.ne.s32.totalorder %s269, %s270
      %p281 = scmp.eq.s32.totalorder %s25, 0
      %p282 = por %p280, %p281
      %p283 = scmp.ne.s32.totalorder %s269, %s270
      %p284 = scmp.eq.s32.totalorder %s26, 1
      %p285 = por %p283, %p284
      %p287 = scmp.ne.s32.totalorder %s270, %s286
      %p288 = scmp.eq.s32.totalorder %s26, 0
      %p289 = por %p287, %p288
      %p290 = scmp.le.s32.totalorder 1, %s20
      %p291 = scmp.lt.s32.totalorder %s20, 3
      %p292 = pnand %p290, %p291
      %p293 = pneg %p292
      // Predicated region
      $region9: #{discriminator_forward.1} parent=5 // pred_check
        _
      $region10: #{discriminator_forward.1} parent=5 // pred_check_branch
        %295 = sbr.rel (%p292) target = $region12
      $region11: #{discriminator_forward.1} parent=5 // pred_region
        %s296 = ssub.s32 %s20, 1
        // Predicated region
        $region13: #{discriminator_forward.1} parent=11 // pred_check
          %p297 = pneg %p67
        $region14: #{discriminator_forward.1} parent=11 // pred_check_branch
          %299 = sbr.rel (%p297) target = $region16
        $region15: #{discriminator_forward.1} parent=11 // pred_region
          _
        $region16: #{discriminator_forward.1} parent=11 // pred_fallthru
          _
        // Predicated region
        $region17: #{discriminator_forward.1} parent=11 // pred_check
          %p300 = pneg %p88
        $region18: #{discriminator_forward.1} parent=11 // pred_check_branch
          %302 = sbr.rel (%p300) target = $region20
        $region19: #{discriminator_forward.1} parent=11 // pred_region
          _
        $region20: #{discriminator_forward.1} parent=11 // pred_fallthru
          _
        // Predicated region
        $region21: #{discriminator_forward.1} parent=11 // pred_check
          %p303 = pneg %p109
        $region22: #{discriminator_forward.1} parent=11 // pred_check_branch
          %305 = sbr.rel (%p303) target = $region24
        $region23: #{discriminator_forward.1} parent=11 // pred_region
          _
        $region24: #{discriminator_forward.1} parent=11 // pred_fallthru
          _
        // Predicated region
        $region25: #{discriminator_forward.1} parent=11 // pred_check
          %p306 = pneg %p130
        $region26: #{discriminator_forward.1} parent=11 // pred_check_branch
          %308 = sbr.rel (%p306) target = $region28
        $region27: #{discriminator_forward.1} parent=11 // pred_region
          _
        $region28: #{discriminator_forward.1} parent=11 // pred_fallthru
          _
        // Predicated region
        $region29: #{discriminator_forward.1} parent=11 // pred_check
          %p309 = pneg %p151
        $region30: #{discriminator_forward.1} parent=11 // pred_check_branch
          %311 = sbr.rel (%p309) target = $region32
        $region31: #{discriminator_forward.1} parent=11 // pred_region
          _
        $region32: #{discriminator_forward.1} parent=11 // pred_fallthru
          _
        // Predicated region
        $region33: #{discriminator_forward.1} parent=11 // pred_check
          %p312 = pneg %p172
        $region34: #{discriminator_forward.1} parent=11 // pred_check_branch
          %314 = sbr.rel (%p312) target = $region36
        $region35: #{discriminator_forward.1} parent=11 // pred_region
          _
        $region36: #{discriminator_forward.1} parent=11 // pred_fallthru
          _
        // Predicated region
        $region37: #{discriminator_forward.1} parent=11 // pred_check
          %p315 = pneg %p193
        $region38: #{discriminator_forward.1} parent=11 // pred_check_branch
          %317 = sbr.rel (%p315) target = $region40
        $region39: #{discriminator_forward.1} parent=11 // pred_region
          _
        $region40: #{discriminator_forward.1} parent=11 // pred_fallthru
          _
        // Predicated region
        $region41: #{discriminator_forward.1} parent=11 // pred_check
          %p318 = pneg %p214
        $region42: #{discriminator_forward.1} parent=11 // pred_check_branch
          %320 = sbr.rel (%p318) target = $region44
        $region43: #{discriminator_forward.1} parent=11 // pred_region
          _
        $region44: #{discriminator_forward.1} parent=11 // pred_fallthru
          _
        // Predicated region
        $region45: #{discriminator_forward.1} parent=11 // pred_check
          %p321 = pneg %p235
        $region46: #{discriminator_forward.1} parent=11 // pred_check_branch
          %323 = sbr.rel (%p321) target = $region48
        $region47: #{discriminator_forward.1} parent=11 // pred_region
          _
        $region48: #{discriminator_forward.1} parent=11 // pred_fallthru
          _
        // Predicated region
        $region49: #{discriminator_forward.1} parent=11 // pred_check
          %p324 = pneg %p256
        $region50: #{discriminator_forward.1} parent=11 // pred_check_branch
          %326 = sbr.rel (%p324) target = $region52
        $region51: #{discriminator_forward.1} parent=11 // pred_region
          _
        $region52: #{discriminator_forward.1} parent=11 // pred_fallthru
          _
      $region12: #{discriminator_forward.1} parent=5 // pred_fallthru
        _
      %p327 = scmp.lt.s32.totalorder %s20, 2
      // Predicated region
      $region53: #{discriminator_forward.1} parent=5 // pred_check
        %p328 = pneg %p327
      $region54: #{discriminator_forward.1} parent=5 // pred_check_branch
        %330 = sbr.rel (%p328) target = $region56
      $region55: #{discriminator_forward.1} parent=5 // pred_region
        // Predicated region
        $region57: #{discriminator_forward.1} parent=55 // pred_check
          %p331 = pneg %p40
        $region58: #{discriminator_forward.1} parent=55 // pred_check_branch
          %333 = sbr.rel (%p331) target = $region60
        $region59: #{discriminator_forward.1} parent=55 // pred_region
          %p334 = scmp.lt.s32.totalorder %s20, 1
          %s335 = scalar_select %p334, %s20, 1
          %s336 = smul.addr %s335, 2
          %s337 = smul.addr %s336, 8
          %s338 = scalar_lea.vmem %s0, %s337
        $region60: #{discriminator_forward.1} parent=55 // pred_fallthru
          _
      $region56: #{discriminator_forward.1} parent=5 // pred_fallthru
        _
      %p339 = scmp.le.s32.totalorder 1, %s20
      %p340 = scmp.lt.s32.totalorder %s20, 3
      %p341 = pnand %p339, %p340
      %p342 = pneg %p341
      // Predicated region
      $region61: #{discriminator_forward.1} parent=5 // pred_check
        _
      $region62: #{discriminator_forward.1} parent=5 // pred_check_branch
        %344 = sbr.rel (%p341) target = $region64
      $region63: #{discriminator_forward.1} parent=5 // pred_region
        %s345 = ssub.s32 %s20, 1
        %p346 = scmp.lt.s32.totalorder %s25, 1
        %s347 = scalar_select %p346, %s25, 1
        %s348 = smul.addr %s347, 2
        %s349 = smul.addr %s348, 8
        %s350 = scalar_lea.vmem %s0, %s349
        %p351 = pneg %p46
        %p352 = pneg %p43
        %p353 = pneg %p67
        %p354 = pneg %p64
        %p355 = pneg %p88
        %p356 = pneg %p85
        %p357 = pneg %p109
        %p358 = pneg %p106
        %p359 = pneg %p130
        %p360 = pneg %p127
        %p361 = pneg %p151
        %p362 = pneg %p148
        %p363 = pneg %p172
        %p364 = pneg %p169
        %p365 = pneg %p193
        %p366 = pneg %p190
        %p367 = pneg %p214
        %p368 = pneg %p211
        %p369 = pneg %p235
        %p370 = pneg %p232
        %p371 = pneg %p256
        %p372 = pneg %p253
        %p373 = pneg %p282
        %p374 = pneg %p279
        %s375 = sand.u32 %s269, 1
        %s376 = scalar_lea.sflag [#allocation7], %s375
        %s377 = sand.u32 %s269, 1
        %s378 = scalar_lea.vmem [#allocation6], %s377
        %p379 = scmp.lt.s32.totalorder %s25, 1
        %s380 = scalar_select %p379, %s25, 1
        %s381 = smul.addr %s380, 2
        %s382 = smul.addr %s381, 8
        %s383 = scalar_lea.vmem %s0, %s382
        %vm385 = vcmask 581632
        %386 = vst.msk [vmem:[#allocation2] sm:$0x1] %vm385, 0.0
        %387 = vst.msk [vmem:[#allocation2 + $0x11] sm:$0x1] %vm385, 0.0
        %vm388 = vcmask 31744
        %389 = vst.msk [vmem:[#allocation2] sm:$0xff] %vm388, 0.0
        %390 = vst.msk [vmem:[#allocation2 + $0x8] sm:$0xff] %vm388, 0.0
        %vm391 = vcmask 25600
        %392 = vst.msk [vmem:[#allocation2 + $0x10] sm:$0x3] %vm391, 0.0
        %vm393 = vcmask 589344
        %394 = vst.msk [vmem:[#allocation2] sm:$0xff] %vm393, 0.0
        %395 = vst.msk [vmem:[#allocation2 + $0x8] sm:$0xff] %vm393, 0.0
        %vm396 = vcmask 583200
        %397 = vst.msk [vmem:[#allocation2 + $0x10] sm:$0x3] %vm396, 0.0
        %v398 = vld [vmem:[%s383] sm:$0xff]
        %v399 = vld [vmem:[%s383 + $0x8] sm:$0xff]
        %402 = vrot.lane.b32.xlu0 %v398, 4
        %v403 = vpop.permute.xlu0 %402
        %404 = vrot.lane.b32.xlu0 %v399, 4
        %v405 = vpop.permute.xlu0 %404
        %vm408 = vcmask 556064
        %409 = vst.msk [vmem:[#allocation2 + $0x1] sm:$0xff] %vm408, %v403
        %410 = vst.msk [vmem:[#allocation2 + $0x9] sm:$0xff] %vm408, %v405
        %v411 = vld [vmem:[#allocation2] sm:$0xff]
        %v412 = vld [vmem:[#allocation2 + $0x8] sm:$0xff]
        %v413 = vpack.c.bf16 %v412, %v411
        %v414 = vld [vmem:[%s1] sm:$0xff]
        %v415 = vld [vmem:[%s1 + $0x8] sm:$0xff]
        %v416 = vld [vmem:[%s1 + $0x10] sm:$0xff]
        %v417 = vld [vmem:[%s1 + $0x18] sm:$0xff]
        %v418 = vld [vmem:[%s1 + $0x20] sm:$0xff]
        %v419 = vld [vmem:[%s1 + $0x28] sm:$0xff]
        %v420 = vld [vmem:[%s1 + $0x30] sm:$0xff]
        %v421 = vld [vmem:[%s1 + $0x38] sm:$0xff]
        %v422 = vld [vmem:[%s1 + $0x40] sm:$0xff]
        %v423 = vld [vmem:[#allocation2 + $0x1] sm:$0xff]
        %v424 = vld [vmem:[#allocation2 + $0x9] sm:$0xff]
        %v425 = vpack.c.bf16 %v424, %v423
        %s426 = scalar_lea.vmem %s1, 72
        %v427 = vld [vmem:[%s426] sm:$0xff]
        %v428 = vld [vmem:[%s426 + $0x8] sm:$0xff]
        %v429 = vld [vmem:[%s426 + $0x10] sm:$0xff]
        %v430 = vld [vmem:[%s426 + $0x18] sm:$0xff]
        %v431 = vld [vmem:[%s426 + $0x20] sm:$0xff]
        %v432 = vld [vmem:[%s426 + $0x28] sm:$0xff]
        %v433 = vld [vmem:[%s426 + $0x30] sm:$0xff]
        %v434 = vld [vmem:[%s426 + $0x38] sm:$0xff]
        %v435 = vld [vmem:[%s426 + $0x40] sm:$0xff]
        %v445 = vunpack.c.l.b16 %v427
        %v446 = vunpack.c.h.b16 %v427
        %v447 = vunpack.c.l.b16 %v428
        %v448 = vunpack.c.h.b16 %v428
        %v449 = vunpack.c.l.b16 %v429
        %v450 = vunpack.c.h.b16 %v429
        %v451 = vunpack.c.l.b16 %v430
        %v452 = vunpack.c.h.b16 %v430
        %v453 = vunpack.c.l.b16 %v431
        %v454 = vunpack.c.h.b16 %v431
        %v455 = vunpack.c.l.b16 %v432
        %v456 = vunpack.c.h.b16 %v432
        %v457 = vunpack.c.l.b16 %v433
        %v458 = vunpack.c.h.b16 %v433
        %v459 = vunpack.c.l.b16 %v434
        %v460 = vunpack.c.h.b16 %v434
        %v461 = vunpack.c.l.b16 %v435
        %v462 = vunpack.c.h.b16 %v435
        %v463 = vpack.c.b16 %v447, %v445
        %v464 = vpack.c.b16 %v448, %v446
        %v465 = vpack.c.b16 %v451, %v449
        %v466 = vpack.c.b16 %v452, %v450
        %v467 = vpack.c.b16 %v455, %v453
        %v468 = vpack.c.b16 %v456, %v454
        %v469 = vpack.c.b16 %v459, %v457
        %v470 = vpack.c.b16 %v460, %v458
        %v471 = vpack.c.b16 %v461, %v461
        %v472 = vpack.c.b16 %v462, %v462
        %vm481 = vcmask 588800
        %v483 = vsel %vm481, %v425, 0
        %vm485 = vcmask 1043456
        %v487 = vsel %vm485, %v471, 0
        %v490 = vsel %vm485, %v472, 0
        %492 = vmatprep.subr.bf16.mxu0 0
        %493 = vmatpush1.bf16.msra.mxu0 0
        %494 = vmatprep.subr.bf16.mxu0 0
        %495 = vmatpush1.bf16.msra.mxu0 0
        %496 = vmatprep.subr.bf16.mxu0 0
        %497 = vmatpush1.bf16.msra.mxu0 0
        %498 = vmatprep.subr.bf16.mxu0 %v490
        %499 = vmatpush1.bf16.msra.mxu0 %v487
        %500 = vmatprep.subr.bf16.mxu0 %v470
        %501 = vmatpush1.bf16.msra.mxu0 %v469
        %502 = vmatprep.subr.bf16.mxu0 %v468
        %503 = vmatpush1.bf16.msra.mxu0 %v467
        %504 = vmatprep.subr.bf16.mxu0 %v466
        %505 = vmatpush1.bf16.msra.mxu0 %v465
        %506 = vmatprep.subr.bf16.mxu0 %v464
        %507 = vmatpush1.bf16.msra.mxu0 %v463
        %508 = vmatprep.subr.bf16.mxu0 0
        %509 = vmatpush2.bf16.msra.mxu0 0
        %510 = vmatprep.subr.bf16.mxu0 0
        %511 = vmatpush2.bf16.msra.mxu0 0
        %512 = vmatprep.subr.bf16.mxu0 0
        %513 = vmatpush2.bf16.msra.mxu0 0
        %514 = vmatprep.subr.bf16.mxu0 0
        %515 = vmatpush2.bf16.msra.mxu0 0
        %516 = vmatprep.subr.bf16.mxu0 0
        %517 = vmatpush2.bf16.msra.mxu0 0
        %518 = vmatprep.subr.bf16.mxu0 0
        %519 = vmatpush2.bf16.msra.mxu0 0
        %520 = vmatprep.subr.bf16.mxu0 0
        %521 = vmatpush2.bf16.msra.mxu0 0
        %522 = vmatprep.subr.bf16.mxu0 0
        %523 = vmatpush2.bf16.msra.mxu0 0
        %524 = vmatprep.mubr.bf16.mxu0 0
        %525 = vmatmul.mubr.bf16.gmra.mxu0 %v483
        %v526 = vpop.f32.mrf.mxu0
        %v527 = vadd.f32 0.0, %v526
        %v528 = vpop.f32.mrf.mxu0
        %v529 = vadd.f32 0.0, %v528
        %v530 = vpop.f32.mrf.mxu0
        %v531 = vadd.f32 0.0, %v530
        %v532 = vpop.f32.mrf.mxu0
        %v533 = vadd.f32 0.0, %v532
        %534 = vdwg.mxu0
        %v544 = vunpack.c.l.b16 %v414
        %v545 = vunpack.c.h.b16 %v414
        %v546 = vunpack.c.l.b16 %v415
        %v547 = vunpack.c.h.b16 %v415
        %v548 = vunpack.c.l.b16 %v416
        %v549 = vunpack.c.h.b16 %v416
        %v550 = vunpack.c.l.b16 %v417
        %v551 = vunpack.c.h.b16 %v417
        %v552 = vunpack.c.l.b16 %v418
        %v553 = vunpack.c.h.b16 %v418
        %v554 = vunpack.c.l.b16 %v419
        %v555 = vunpack.c.h.b16 %v419
        %v556 = vunpack.c.l.b16 %v420
        %v557 = vunpack.c.h.b16 %v420
        %v558 = vunpack.c.l.b16 %v421
        %v559 = vunpack.c.h.b16 %v421
        %v560 = vunpack.c.l.b16 %v422
        %v561 = vunpack.c.h.b16 %v422
        %v562 = vpack.c.b16 %v546, %v544
        %v563 = vpack.c.b16 %v547, %v545
        %v564 = vpack.c.b16 %v550, %v548
        %v565 = vpack.c.b16 %v551, %v549
        %v566 = vpack.c.b16 %v554, %v552
        %v567 = vpack.c.b16 %v555, %v553
        %v568 = vpack.c.b16 %v558, %v556
        %v569 = vpack.c.b16 %v559, %v557
        %v570 = vpack.c.b16 %v560, %v560
        %v571 = vpack.c.b16 %v561, %v561
        %v581 = vsel %vm481, %v413, 0
        %v584 = vsel %vm485, %v570, 0
        %v587 = vsel %vm485, %v571, 0
        %589 = vmatprep.subr.bf16.mxu0 0
        %590 = vmatpush1.bf16.msra.mxu0 0
        %591 = vmatprep.subr.bf16.mxu0 0
        %592 = vmatpush1.bf16.msra.mxu0 0
        %593 = vmatprep.subr.bf16.mxu0 0
        %594 = vmatpush1.bf16.msra.mxu0 0
        %595 = vmatprep.subr.bf16.mxu0 %v587
        %596 = vmatpush1.bf16.msra.mxu0 %v584
        %597 = vmatprep.subr.bf16.mxu0 %v569
        %598 = vmatpush1.bf16.msra.mxu0 %v568
        %599 = vmatprep.subr.bf16.mxu0 %v567
        %600 = vmatpush1.bf16.msra.mxu0 %v566
        %601 = vmatprep.subr.bf16.mxu0 %v565
        %602 = vmatpush1.bf16.msra.mxu0 %v564
        %603 = vmatprep.subr.bf16.mxu0 %v563
        %604 = vmatpush1.bf16.msra.mxu0 %v562
        %605 = vmatprep.subr.bf16.mxu0 0
        %606 = vmatpush2.bf16.msra.mxu0 0
        %607 = vmatprep.subr.bf16.mxu0 0
        %608 = vmatpush2.bf16.msra.mxu0 0
        %609 = vmatprep.subr.bf16.mxu0 0
        %610 = vmatpush2.bf16.msra.mxu0 0
        %611 = vmatprep.subr.bf16.mxu0 0
        %612 = vmatpush2.bf16.msra.mxu0 0
        %613 = vmatprep.subr.bf16.mxu0 0
        %614 = vmatpush2.bf16.msra.mxu0 0
        %615 = vmatprep.subr.bf16.mxu0 0
        %616 = vmatpush2.bf16.msra.mxu0 0
        %617 = vmatprep.subr.bf16.mxu0 0
        %618 = vmatpush2.bf16.msra.mxu0 0
        %619 = vmatprep.subr.bf16.mxu0 0
        %620 = vmatpush2.bf16.msra.mxu0 0
        %621 = vmatprep.mubr.bf16.mxu0 0
        %622 = vmatmul.mubr.bf16.gmra.mxu0 %v581
        %v623 = vpop.f32.mrf.mxu0
        %v624 = vadd.f32 %v527, %v623
        %v625 = vpop.f32.mrf.mxu0
        %v626 = vadd.f32 %v529, %v625
        %v627 = vpop.f32.mrf.mxu0
        %v628 = vadd.f32 %v531, %v627
        %v629 = vpop.f32.mrf.mxu0
        %v630 = vadd.f32 %v533, %v629
        %631 = vdwg.mxu0
        %v632 = vld [vmem:[#allocation2 + $0x2] sm:$0xff]
        %v633 = vld [vmem:[#allocation2 + $0xa] sm:$0xff]
        %v634 = vpack.c.bf16 %v633, %v632
        %s635 = scalar_lea.vmem %s1, 144
        %v636 = vld [vmem:[%s635] sm:$0xff]
        %v637 = vld [vmem:[%s635 + $0x8] sm:$0xff]
        %v638 = vld [vmem:[%s635 + $0x10] sm:$0xff]
        %v639 = vld [vmem:[%s635 + $0x18] sm:$0xff]
        %v640 = vld [vmem:[%s635 + $0x20] sm:$0xff]
        %v641 = vld [vmem:[%s635 + $0x28] sm:$0xff]
        %v642 = vld [vmem:[%s635 + $0x30] sm:$0xff]
        %v643 = vld [vmem:[%s635 + $0x38] sm:$0xff]
        %v644 = vld [vmem:[%s635 + $0x40] sm:$0xff]
        %v654 = vunpack.c.l.b16 %v636
        %v655 = vunpack.c.h.b16 %v636
        %v656 = vunpack.c.l.b16 %v637
        %v657 = vunpack.c.h.b16 %v637
        %v658 = vunpack.c.l.b16 %v638
        %v659 = vunpack.c.h.b16 %v638
        %v660 = vunpack.c.l.b16 %v639
        %v661 = vunpack.c.h.b16 %v639
        %v662 = vunpack.c.l.b16 %v640
        %v663 = vunpack.c.h.b16 %v640
        %v664 = vunpack.c.l.b16 %v641
        %v665 = vunpack.c.h.b16 %v641
        %v666 = vunpack.c.l.b16 %v642
        %v667 = vunpack.c.h.b16 %v642
        %v668 = vunpack.c.l.b16 %v643
        %v669 = vunpack.c.h.b16 %v643
        %v670 = vunpack.c.l.b16 %v644
        %v671 = vunpack.c.h.b16 %v644
        %v672 = vpack.c.b16 %v656, %v654
        %v673 = vpack.c.b16 %v657, %v655
        %v674 = vpack.c.b16 %v660, %v658
        %v675 = vpack.c.b16 %v661, %v659
        %v676 = vpack.c.b16 %v664, %v662
        %v677 = vpack.c.b16 %v665, %v663
        %v678 = vpack.c.b16 %v668, %v666
        %v679 = vpack.c.b16 %v669, %v667
        %v680 = vpack.c.b16 %v670, %v670
        %v681 = vpack.c.b16 %v671, %v671
        %v691 = vsel %vm481, %v634, 0
        %v694 = vsel %vm485, %v680, 0
        %v697 = vsel %vm485, %v681, 0
        %699 = vmatprep.subr.bf16.mxu0 0
        %700 = vmatpush1.bf16.msra.mxu0 0
        %701 = vmatprep.subr.bf16.mxu0 0
        %702 = vmatpush1.bf16.msra.mxu0 0
        %703 = vmatprep.subr.bf16.mxu0 0
        %704 = vmatpush1.bf16.msra.mxu0 0
        %705 = vmatprep.subr.bf16.mxu0 %v697
        %706 = vmatpush1.bf16.msra.mxu0 %v694
        %707 = vmatprep.subr.bf16.mxu0 %v679
        %708 = vmatpush1.bf16.msra.mxu0 %v678
        %709 = vmatprep.subr.bf16.mxu0 %v677
        %710 = vmatpush1.bf16.msra.mxu0 %v676
        %711 = vmatprep.subr.bf16.mxu0 %v675
        %712 = vmatpush1.bf16.msra.mxu0 %v674
        %713 = vmatprep.subr.bf16.mxu0 %v673
        %714 = vmatpush1.bf16.msra.mxu0 %v672
        %715 = vmatprep.subr.bf16.mxu0 0
        %716 = vmatpush2.bf16.msra.mxu0 0
        %717 = vmatprep.subr.bf16.mxu0 0
        %718 = vmatpush2.bf16.msra.mxu0 0
        %719 = vmatprep.subr.bf16.mxu0 0
        %720 = vmatpush2.bf16.msra.mxu0 0
        %721 = vmatprep.subr.bf16.mxu0 0
        %722 = vmatpush2.bf16.msra.mxu0 0
        %723 = vmatprep.subr.bf16.mxu0 0
        %724 = vmatpush2.bf16.msra.mxu0 0
        %725 = vmatprep.subr.bf16.mxu0 0
        %726 = vmatpush2.bf16.msra.mxu0 0
        %727 = vmatprep.subr.bf16.mxu0 0
        %728 = vmatpush2.bf16.msra.mxu0 0
        %729 = vmatprep.subr.bf16.mxu0 0
        %730 = vmatpush2.bf16.msra.mxu0 0
        %731 = vmatprep.mubr.bf16.mxu0 0
        %732 = vmatmul.mubr.bf16.gmra.mxu0 %v691
        %v733 = vpop.f32.mrf.mxu0
        %v734 = vadd.f32 0.0, %v733
        %v735 = vpop.f32.mrf.mxu0
        %v736 = vadd.f32 0.0, %v735
        %v737 = vpop.f32.mrf.mxu0
        %v738 = vadd.f32 0.0, %v737
        %v739 = vpop.f32.mrf.mxu0
        %v740 = vadd.f32 0.0, %v739
        %741 = vdwg.mxu0
        %v742 = vadd.f32 %v624, %v734
        %v743 = vadd.f32 %v626, %v736
        %v744 = vadd.f32 %v628, %v738
        %v745 = vadd.f32 %v630, %v740
        %v746 = vld [vmem:[%s2] sm:$0x3]
        %v748 = vlaneseq
        %v749 = vshrl.u32 %v748, 7
        %v750 = vsub.s32 0, %v749
        %v751 = vrot.slane %v746, %v750
        %v752 = vlaneseq
        %v753 = vshrl.u32 %v752, 7
        %v754 = vsub.s32 1, %v753
        %v755 = vrot.slane %v746, %v754
        %v758 = vadd.f32 %v742, %v751
        %v759 = vadd.f32 %v743, %v755
        %v760 = vadd.f32 %v744, %v751
        %v761 = vadd.f32 %v745, %v755
        %v762 = vmax.f32 %v758, 0.0
        %v763 = vmax.f32 %v759, 0.0
        %v764 = vmax.f32 %v760, 0.0
        %v765 = vmax.f32 %v761, 0.0
        %v766 = vlaneseq
        %vm767 = vcmp.ge.s32.totalorder %v766, 0
        %vm768 = vcmp.lt.s32.totalorder %v766, 288
        %vm769 = vmand %vm767, %vm768
        %770 = vst.msk [vmem:[#allocation3] ss:$8 sm:$0x7] %vm769, 0.0
        %771 = vst.msk [vmem:[#allocation3] ss:$8 sm:$0x0] %vm769, 0.0
        %s772 = scalar_lea.vmem [#allocation3], 49
        %773 = vst.msk [vmem:[%s772] ss:$8 sm:$0x7] %vm769, 0.0
        %774 = vst.msk [vmem:[%s772] ss:$8 sm:$0x0] %vm769, 0.0
        %vm775 = vcmask 130048
        %776 = vst.msk [vmem:[#allocation3] sm:$0xff] %vm775, 0.0
        %777 = vst.msk [vmem:[#allocation3 + $0x18] sm:$0xff] %vm775, 0.0
        %vm778 = vcmask 123904
        %779 = vst.msk [vmem:[#allocation3 + $0x30] sm:$0x3] %vm778, 0.0
        %vm780 = vcmask 261248
        %781 = vst.msk [vmem:[#allocation3 + $0x10] sm:$0xff] %vm780, 0.0
        %782 = vst.msk [vmem:[#allocation3 + $0x28] sm:$0xff] %vm780, 0.0
        %vm783 = vcmask 255104
        %784 = vst.msk [vmem:[#allocation3 + $0x40] sm:$0x3] %vm783, 0.0
        %vm789 = vcmask 1040384
        %v790 = vrot.slane %v762, 7
        %v791 = vrot.slane %v763, 7
        %v792 = vrot.slane %v764, 7
        %v793 = vsel %vm789, %v790, %v792
        %v794 = vrot.slane %v765, 7
        %v795 = vsel %vm789, %v791, %v794
        %796 = vrot.lane.b32.xlu0 %v790, 16
        %v797 = vpop.permute.xlu0 %796
        %798 = vrot.lane.b32.xlu0 %v791, 16
        %v799 = vpop.permute.xlu0 %798
        %800 = vrot.lane.b32.xlu0 %v793, 16
        %v801 = vpop.permute.xlu0 %800
        %802 = vrot.lane.b32.xlu0 %v795, 16
        %v803 = vpop.permute.xlu0 %802
        %804 = vrot.lane.b32.xlu0 %v792, 16
        %v805 = vpop.permute.xlu0 %804
        %806 = vrot.lane.b32.xlu0 %v794, 16
        %v807 = vpop.permute.xlu0 %806
        %v808 = vsel %vm775, %v797, %v799
        %v809 = vsel %vm775, %v801, %v803
        %v810 = vsel %vm775, %v805, %v807
        %vm820 = vcmask 1047681
        %821 = vst.msk [vmem:[#allocation3] sm:$0xfe] %vm820, %v797
        %822 = vst [vmem:[#allocation3 + $0x8] sm:$0xfe] %v808
        %vm823 = vcmask 130049
        %824 = vst.msk [vmem:[#allocation3 + $0x10] sm:$0xfe] %vm823, %v799
        %vm825 = vcmask 1047680
        %826 = vst.msk [vmem:[#allocation3 + $0x18] sm:$0xff] %vm825, %v801
        %827 = vst [vmem:[#allocation3 + $0x20] sm:$0xff] %v809
        %828 = vst.msk [vmem:[#allocation3 + $0x28] sm:$0xff] %vm775, %v803
        %vm829 = vcmask 1040512
        %830 = vst.msk [vmem:[#allocation3 + $0x30] sm:$0x1] %vm829, %v805
        %831 = vst [vmem:[#allocation3 + $0x38] sm:$0x1] %v810
        %vm832 = vcmask 122880
        %833 = vst.msk [vmem:[#allocation3 + $0x40] sm:$0x1] %vm832, %v807
        %v834 = vld [vmem:[#allocation3] sm:$0xff]
        %v835 = vld [vmem:[#allocation3 + $0x8] sm:$0xff]
        %v836 = vld [vmem:[#allocation3 + $0x10] sm:$0xff]
        %v837 = vld [vmem:[#allocation3 + $0x18] sm:$0xff]
        %v838 = vld [vmem:[#allocation3 + $0x20] sm:$0xff]
        %v839 = vld [vmem:[#allocation3 + $0x28] sm:$0xff]
        %v840 = vpack.c.bf16 %v837, %v834
        %v841 = vpack.c.bf16 %v838, %v835
        %v842 = vpack.c.bf16 %v839, %v836
        %v843 = vld [vmem:[%s3] sm:$0xff]
        %v844 = vld [vmem:[%s3 + $0x8] sm:$0xff]
        %v845 = vld [vmem:[%s3 + $0x10] sm:$0xff]
        %v846 = vld [vmem:[%s3 + $0x18] sm:$0xff]
        %v847 = vld [vmem:[%s3 + $0x20] sm:$0xff]
        %v848 = vld [vmem:[%s3 + $0x28] sm:$0xff]
        %v849 = vld [vmem:[%s3 + $0x30] sm:$0xff]
        %v850 = vld [vmem:[%s3 + $0x38] sm:$0xff]
        %v851 = vld [vmem:[%s3 + $0x40] sm:$0xff]
        %v852 = vld [vmem:[%s3 + $0x48] sm:$0xff]
        %v853 = vld [vmem:[%s3 + $0x50] sm:$0xff]
        %v854 = vld [vmem:[%s3 + $0x58] sm:$0xff]
        %v855 = vld [vmem:[%s3 + $0x60] sm:$0xff]
        %v856 = vld [vmem:[%s3 + $0x68] sm:$0xff]
        %v857 = vld [vmem:[%s3 + $0x70] sm:$0xff]
        %v858 = vld [vmem:[%s3 + $0x78] sm:$0xff]
        %v859 = vld [vmem:[%s3 + $0x80] sm:$0xff]
        %v860 = vld [vmem:[%s3 + $0x88] sm:$0xff]
        %v861 = vld [vmem:[%s3 + $0x90] sm:$0xff]
        %v862 = vld [vmem:[%s3 + $0x98] sm:$0xff]
        %v863 = vld [vmem:[%s3 + $0xa0] sm:$0xff]
        %v864 = vld [vmem:[%s3 + $0xa8] sm:$0xff]
        %v865 = vld [vmem:[%s3 + $0xb0] sm:$0xff]
        %v866 = vld [vmem:[%s3 + $0xb8] sm:$0xff]
        %v867 = vld [vmem:[%s3 + $0xc0] sm:$0xff]
        %v868 = vld [vmem:[%s3 + $0xc8] sm:$0xff]
        %v869 = vld [vmem:[%s3 + $0xd0] sm:$0xff]
        %v870 = vld [vmem:[%s3 + $0xd8] sm:$0xff]
        %v871 = vld [vmem:[%s3 + $0xe0] sm:$0xff]
        %v872 = vld [vmem:[%s3 + $0xe8] sm:$0xff]
        %v873 = vld [vmem:[%s3 + $0xf0] sm:$0xff]
        %v874 = vld [vmem:[%s3 + $0xf8] sm:$0xff]
        %v875 = vld [vmem:[%s3 + $0x100] sm:$0xff]
        %v876 = vld [vmem:[%s3 + $0x108] sm:$0xff]
        %v877 = vld [vmem:[%s3 + $0x110] sm:$0xff]
        %v878 = vld [vmem:[%s3 + $0x118] sm:$0xff]
        %v879 = vld [vmem:[#allocation3] sm:$0xfe]
        %v880 = vld [vmem:[#allocation3 + $0x8] sm:$0xfe]
        %v881 = vld [vmem:[#allocation3 + $0x10] sm:$0xfe]
        %v882 = vld [vmem:[#allocation3 + $0x30] sm:$0x1]
        %v883 = vld [vmem:[#allocation3 + $0x38] sm:$0x1]
        %v884 = vld [vmem:[#allocation3 + $0x40] sm:$0x1]
        %v885 = vpack.c.bf16 %v837, %v879
        %v886 = vpack.c.bf16 %v838, %v880
        %v887 = vpack.c.bf16 %v839, %v881
        %v888 = vpack.c.bf16 %v882, %v882
        %v889 = vpack.c.bf16 %v883, %v883
        %v890 = vpack.c.bf16 %v884, %v884
        %s891 = scalar_lea.vmem %s3, 288
        %v892 = vld [vmem:[%s891] sm:$0xff]
        %v893 = vld [vmem:[%s891 + $0x8] sm:$0xff]
        %v894 = vld [vmem:[%s891 + $0x10] sm:$0xff]
        %v895 = vld [vmem:[%s891 + $0x18] sm:$0xff]
        %v896 = vld [vmem:[%s891 + $0x20] sm:$0xff]
        %v897 = vld [vmem:[%s891 + $0x28] sm:$0xff]
        %v898 = vld [vmem:[%s891 + $0x30] sm:$0xff]
        %v899 = vld [vmem:[%s891 + $0x38] sm:$0xff]
        %v900 = vld [vmem:[%s891 + $0x40] sm:$0xff]
        %v901 = vld [vmem:[%s891 + $0x48] sm:$0xff]
        %v902 = vld [vmem:[%s891 + $0x50] sm:$0xff]
        %v903 = vld [vmem:[%s891 + $0x58] sm:$0xff]
        %v904 = vld [vmem:[%s891 + $0x60] sm:$0xff]
        %v905 = vld [vmem:[%s891 + $0x68] sm:$0xff]
        %v906 = vld [vmem:[%s891 + $0x70] sm:$0xff]
        %v907 = vld [vmem:[%s891 + $0x78] sm:$0xff]
        %v908 = vld [vmem:[%s891 + $0x80] sm:$0xff]
        %v909 = vld [vmem:[%s891 + $0x88] sm:$0xff]
        %v910 = vld [vmem:[%s891 + $0x90] sm:$0xff]
        %v911 = vld [vmem:[%s891 + $0x98] sm:$0xff]
        %v912 = vld [vmem:[%s891 + $0xa0] sm:$0xff]
        %v913 = vld [vmem:[%s891 + $0xa8] sm:$0xff]
        %v914 = vld [vmem:[%s891 + $0xb0] sm:$0xff]
        %v915 = vld [vmem:[%s891 + $0xb8] sm:$0xff]
        %v916 = vld [vmem:[%s891 + $0xc0] sm:$0xff]
        %v917 = vld [vmem:[%s891 + $0xc8] sm:$0xff]
        %v918 = vld [vmem:[%s891 + $0xd0] sm:$0xff]
        %v919 = vld [vmem:[%s891 + $0xd8] sm:$0xff]
        %v920 = vld [vmem:[%s891 + $0xe0] sm:$0xff]
        %v921 = vld [vmem:[%s891 + $0xe8] sm:$0xff]
        %v922 = vld [vmem:[%s891 + $0xf0] sm:$0xff]
        %v923 = vld [vmem:[%s891 + $0xf8] sm:$0xff]
        %v924 = vld [vmem:[%s891 + $0x100] sm:$0xff]
        %v925 = vld [vmem:[%s891 + $0x108] sm:$0xff]
        %v926 = vld [vmem:[%s891 + $0x110] sm:$0xff]
        %v927 = vld [vmem:[%s891 + $0x118] sm:$0xff]
        %vm928 = vsmask.f32 7424
        %v930 = vshrl.u32 %v885, 16
        %v932 = vshll.u32 %v885, 16
        %v934 = vrot.slane %v932, 1
        %v935 = vor.u32 %v930, %v934
        %v937 = vshll.u32 %v888, 16
        %v939 = vrot.slane %v937, 1
        %v940 = vsel %vm928, %v935, %v939
        %v942 = vshrl.u32 %v886, 16
        %v944 = vshll.u32 %v886, 16
        %v946 = vrot.slane %v944, 1
        %v947 = vor.u32 %v942, %v946
        %v949 = vshll.u32 %v889, 16
        %v951 = vrot.slane %v949, 1
        %v952 = vsel %vm928, %v947, %v951
        %v954 = vshrl.u32 %v887, 16
        %v956 = vshll.u32 %v887, 16
        %v958 = vrot.slane %v956, 1
        %v959 = vor.u32 %v954, %v958
        %v961 = vshll.u32 %v890, 16
        %v963 = vrot.slane %v961, 1
        %v964 = vsel %vm928, %v959, %v963
        %v1003 = vunpack.c.l.b16 %v892
        %v1004 = vunpack.c.h.b16 %v892
        %v1005 = vunpack.c.l.b16 %v893
        %v1006 = vunpack.c.h.b16 %v893
        %v1007 = vunpack.c.l.b16 %v894
        %v1008 = vunpack.c.h.b16 %v894
        %v1009 = vunpack.c.l.b16 %v895
        %v1010 = vunpack.c.h.b16 %v895
        %v1011 = vunpack.c.l.b16 %v896
        %v1012 = vunpack.c.h.b16 %v896
        %v1013 = vunpack.c.l.b16 %v897
        %v1014 = vunpack.c.h.b16 %v897
        %v1015 = vunpack.c.l.b16 %v898
        %v1016 = vunpack.c.h.b16 %v898
        %v1017 = vunpack.c.l.b16 %v899
        %v1018 = vunpack.c.h.b16 %v899
        %v1019 = vunpack.c.l.b16 %v900
        %v1020 = vunpack.c.h.b16 %v900
        %v1021 = vunpack.c.l.b16 %v901
        %v1022 = vunpack.c.h.b16 %v901
        %v1023 = vunpack.c.l.b16 %v902
        %v1024 = vunpack.c.h.b16 %v902
        %v1025 = vunpack.c.l.b16 %v903
        %v1026 = vunpack.c.h.b16 %v903
        %v1027 = vunpack.c.l.b16 %v904
        %v1028 = vunpack.c.h.b16 %v904
        %v1029 = vunpack.c.l.b16 %v905
        %v1030 = vunpack.c.h.b16 %v905
        %v1031 = vunpack.c.l.b16 %v906
        %v1032 = vunpack.c.h.b16 %v906
        %v1033 = vunpack.c.l.b16 %v907
        %v1034 = vunpack.c.h.b16 %v907
        %v1035 = vunpack.c.l.b16 %v908
        %v1036 = vunpack.c.h.b16 %v908
        %v1037 = vunpack.c.l.b16 %v909
        %v1038 = vunpack.c.h.b16 %v909
        %v1039 = vunpack.c.l.b16 %v910
        %v1040 = vunpack.c.h.b16 %v910
        %v1041 = vunpack.c.l.b16 %v911
        %v1042 = vunpack.c.h.b16 %v911
        %v1043 = vunpack.c.l.b16 %v912
        %v1044 = vunpack.c.h.b16 %v912
        %v1045 = vunpack.c.l.b16 %v913
        %v1046 = vunpack.c.h.b16 %v913
        %v1047 = vunpack.c.l.b16 %v914
        %v1048 = vunpack.c.h.b16 %v914
        %v1049 = vunpack.c.l.b16 %v915
        %v1050 = vunpack.c.h.b16 %v915
        %v1051 = vunpack.c.l.b16 %v916
        %v1052 = vunpack.c.h.b16 %v916
        %v1053 = vunpack.c.l.b16 %v917
        %v1054 = vunpack.c.h.b16 %v917
        %v1055 = vunpack.c.l.b16 %v918
        %v1056 = vunpack.c.h.b16 %v918
        %v1057 = vunpack.c.l.b16 %v919
        %v1058 = vunpack.c.h.b16 %v919
        %v1059 = vunpack.c.l.b16 %v920
        %v1060 = vunpack.c.h.b16 %v920
        %v1061 = vunpack.c.l.b16 %v921
        %v1062 = vunpack.c.h.b16 %v921
        %v1063 = vunpack.c.l.b16 %v922
        %v1064 = vunpack.c.h.b16 %v922
        %v1065 = vunpack.c.l.b16 %v923
        %v1066 = vunpack.c.h.b16 %v923
        %v1067 = vunpack.c.l.b16 %v924
        %v1068 = vunpack.c.h.b16 %v924
        %v1069 = vunpack.c.l.b16 %v925
        %v1070 = vunpack.c.h.b16 %v925
        %v1071 = vunpack.c.l.b16 %v926
        %v1072 = vunpack.c.h.b16 %v926
        %v1073 = vunpack.c.l.b16 %v927
        %v1074 = vunpack.c.h.b16 %v927
        %v1075 = vpack.c.b16 %v1005, %v1003
        %v1076 = vpack.c.b16 %v1006, %v1004
        %v1077 = vpack.c.b16 %v1009, %v1007
        %v1078 = vpack.c.b16 %v1010, %v1008
        %v1079 = vpack.c.b16 %v1013, %v1011
        %v1080 = vpack.c.b16 %v1014, %v1012
        %v1081 = vpack.c.b16 %v1017, %v1015
        %v1082 = vpack.c.b16 %v1018, %v1016
        %v1083 = vpack.c.b16 %v1021, %v1019
        %v1084 = vpack.c.b16 %v1022, %v1020
        %v1085 = vpack.c.b16 %v1025, %v1023
        %v1086 = vpack.c.b16 %v1026, %v1024
        %v1087 = vpack.c.b16 %v1029, %v1027
        %v1088 = vpack.c.b16 %v1030, %v1028
        %v1089 = vpack.c.b16 %v1033, %v1031
        %v1090 = vpack.c.b16 %v1034, %v1032
        %v1091 = vpack.c.b16 %v1037, %v1035
        %v1092 = vpack.c.b16 %v1038, %v1036
        %v1093 = vpack.c.b16 %v1041, %v1039
        %v1094 = vpack.c.b16 %v1042, %v1040
        %v1095 = vpack.c.b16 %v1045, %v1043
        %v1096 = vpack.c.b16 %v1046, %v1044
        %v1097 = vpack.c.b16 %v1049, %v1047
        %v1098 = vpack.c.b16 %v1050, %v1048
        %v1099 = vpack.c.b16 %v1053, %v1051
        %v1100 = vpack.c.b16 %v1054, %v1052
        %v1101 = vpack.c.b16 %v1057, %v1055
        %v1102 = vpack.c.b16 %v1058, %v1056
        %v1103 = vpack.c.b16 %v1061, %v1059
        %v1104 = vpack.c.b16 %v1062, %v1060
        %v1105 = vpack.c.b16 %v1065, %v1063
        %v1106 = vpack.c.b16 %v1066, %v1064
        %v1107 = vpack.c.b16 %v1069, %v1067
        %v1108 = vpack.c.b16 %v1070, %v1068
        %v1109 = vpack.c.b16 %v1073, %v1071
        %v1110 = vpack.c.b16 %v1074, %v1072
        %vm1147 = vcmask 261120
        %v1149 = vsel %vm1147, %v964, 0
        %1151 = vmatprep.subr.bf16.mxu0 %v1090
        %1152 = vmatpush1.bf16.msra.mxu0 %v1089
        %1153 = vmatprep.subr.bf16.mxu0 %v1088
        %1154 = vmatpush1.bf16.msra.mxu0 %v1087
        %1155 = vmatprep.subr.bf16.mxu0 %v1086
        %1156 = vmatpush1.bf16.msra.mxu0 %v1085
        %1157 = vmatprep.subr.bf16.mxu0 %v1084
        %1158 = vmatpush1.bf16.msra.mxu0 %v1083
        %1159 = vmatprep.subr.bf16.mxu0 %v1082
        %1160 = vmatpush1.bf16.msra.mxu0 %v1081
        %1161 = vmatprep.subr.bf16.mxu0 %v1080
        %1162 = vmatpush1.bf16.msra.mxu0 %v1079
        %1163 = vmatprep.subr.bf16.mxu0 %v1078
        %1164 = vmatpush1.bf16.msra.mxu0 %v1077
        %1165 = vmatprep.subr.bf16.mxu0 %v1076
        %1166 = vmatpush1.bf16.msra.mxu0 %v1075
        %1167 = vmatprep.subr.bf16.mxu0 %v1106
        %1168 = vmatpush2.bf16.msra.mxu0 %v1105
        %1169 = vmatprep.subr.bf16.mxu0 %v1104
        %1170 = vmatpush2.bf16.msra.mxu0 %v1103
        %1171 = vmatprep.subr.bf16.mxu0 %v1102
        %1172 = vmatpush2.bf16.msra.mxu0 %v1101
        %1173 = vmatprep.subr.bf16.mxu0 %v1100
        %1174 = vmatpush2.bf16.msra.mxu0 %v1099
        %1175 = vmatprep.subr.bf16.mxu0 %v1098
        %1176 = vmatpush2.bf16.msra.mxu0 %v1097
        %1177 = vmatprep.subr.bf16.mxu0 %v1096
        %1178 = vmatpush2.bf16.msra.mxu0 %v1095
        %1179 = vmatprep.subr.bf16.mxu0 %v1094
        %1180 = vmatpush2.bf16.msra.mxu0 %v1093
        %1181 = vmatprep.subr.bf16.mxu0 %v1092
        %1182 = vmatpush2.bf16.msra.mxu0 %v1091
        %1183 = vmatprep.mubr.bf16.mxu0 %v952
        %1184 = vmatmul.mubr.bf16.gmra.mxu0 %v940
        %v1185 = vpop.f32.mrf.mxu0
        %v1186 = vadd.f32 0.0, %v1185
        %v1187 = vpop.f32.mrf.mxu0
        %v1188 = vadd.f32 0.0, %v1187
        %v1189 = vpop.f32.mrf.mxu0
        %v1190 = vadd.f32 0.0, %v1189
        %v1191 = vpop.f32.mrf.mxu0
        %v1192 = vadd.f32 0.0, %v1191
        %1193 = vdwg.mxu0
        %1194 = vmatprep.subr.bf16.mxu0 0
        %1195 = vmatpush1.bf16.msra.mxu0 0
        %1196 = vmatprep.subr.bf16.mxu0 0
        %1197 = vmatpush1.bf16.msra.mxu0 0
        %1198 = vmatprep.subr.bf16.mxu0 0
        %1199 = vmatpush1.bf16.msra.mxu0 0
        %1200 = vmatprep.subr.bf16.mxu0 0
        %1201 = vmatpush1.bf16.msra.mxu0 0
        %1202 = vmatprep.subr.bf16.mxu0 0
        %1203 = vmatpush1.bf16.msra.mxu0 0
        %1204 = vmatprep.subr.bf16.mxu0 0
        %1205 = vmatpush1.bf16.msra.mxu0 0
        %1206 = vmatprep.subr.bf16.mxu0 %v1110
        %1207 = vmatpush1.bf16.msra.mxu0 %v1109
        %1208 = vmatprep.subr.bf16.mxu0 %v1108
        %1209 = vmatpush1.bf16.msra.mxu0 %v1107
        %1210 = vmatprep.subr.bf16.mxu0 0
        %1211 = vmatpush2.bf16.msra.mxu0 0
        %1212 = vmatprep.subr.bf16.mxu0 0
        %1213 = vmatpush2.bf16.msra.mxu0 0
        %1214 = vmatprep.subr.bf16.mxu0 0
        %1215 = vmatpush2.bf16.msra.mxu0 0
        %1216 = vmatprep.subr.bf16.mxu0 0
        %1217 = vmatpush2.bf16.msra.mxu0 0
        %1218 = vmatprep.subr.bf16.mxu0 0
        %1219 = vmatpush2.bf16.msra.mxu0 0
        %1220 = vmatprep.subr.bf16.mxu0 0
        %1221 = vmatpush2.bf16.msra.mxu0 0
        %1222 = vmatprep.subr.bf16.mxu0 0
        %1223 = vmatpush2.bf16.msra.mxu0 0
        %1224 = vmatprep.subr.bf16.mxu0 0
        %1225 = vmatpush2.bf16.msra.mxu0 0
        %1226 = vmatprep.mubr.bf16.mxu0 0
        %1227 = vmatmul.mubr.bf16.gmra.mxu0 %v1149
        %v1228 = vpop.f32.mrf.mxu0
        %v1229 = vadd.f32 %v1186, %v1228
        %v1230 = vpop.f32.mrf.mxu0
        %v1231 = vadd.f32 %v1188, %v1230
        %v1232 = vpop.f32.mrf.mxu0
        %v1233 = vadd.f32 %v1190, %v1232
        %v1234 = vpop.f32.mrf.mxu0
        %v1235 = vadd.f32 %v1192, %v1234
        %1236 = vdwg.mxu0
        %v1273 = vunpack.c.l.b16 %v843
        %v1274 = vunpack.c.h.b16 %v843
        %v1275 = vunpack.c.l.b16 %v844
        %v1276 = vunpack.c.h.b16 %v844
        %v1277 = vunpack.c.l.b16 %v845
        %v1278 = vunpack.c.h.b16 %v845
        %v1279 = vunpack.c.l.b16 %v846
        %v1280 = vunpack.c.h.b16 %v846
        %v1281 = vunpack.c.l.b16 %v847
        %v1282 = vunpack.c.h.b16 %v847
        %v1283 = vunpack.c.l.b16 %v848
        %v1284 = vunpack.c.h.b16 %v848
        %v1285 = vunpack.c.l.b16 %v849
        %v1286 = vunpack.c.h.b16 %v849
        %v1287 = vunpack.c.l.b16 %v850
        %v1288 = vunpack.c.h.b16 %v850
        %v1289 = vunpack.c.l.b16 %v851
        %v1290 = vunpack.c.h.b16 %v851
        %v1291 = vunpack.c.l.b16 %v852
        %v1292 = vunpack.c.h.b16 %v852
        %v1293 = vunpack.c.l.b16 %v853
        %v1294 = vunpack.c.h.b16 %v853
        %v1295 = vunpack.c.l.b16 %v854
        %v1296 = vunpack.c.h.b16 %v854
        %v1297 = vunpack.c.l.b16 %v855
        %v1298 = vunpack.c.h.b16 %v855
        %v1299 = vunpack.c.l.b16 %v856
        %v1300 = vunpack.c.h.b16 %v856
        %v1301 = vunpack.c.l.b16 %v857
        %v1302 = vunpack.c.h.b16 %v857
        %v1303 = vunpack.c.l.b16 %v858
        %v1304 = vunpack.c.h.b16 %v858
        %v1305 = vunpack.c.l.b16 %v859
        %v1306 = vunpack.c.h.b16 %v859
        %v1307 = vunpack.c.l.b16 %v860
        %v1308 = vunpack.c.h.b16 %v860
        %v1309 = vunpack.c.l.b16 %v861
        %v1310 = vunpack.c.h.b16 %v861
        %v1311 = vunpack.c.l.b16 %v862
        %v1312 = vunpack.c.h.b16 %v862
        %v1313 = vunpack.c.l.b16 %v863
        %v1314 = vunpack.c.h.b16 %v863
        %v1315 = vunpack.c.l.b16 %v864
        %v1316 = vunpack.c.h.b16 %v864
        %v1317 = vunpack.c.l.b16 %v865
        %v1318 = vunpack.c.h.b16 %v865
        %v1319 = vunpack.c.l.b16 %v866
        %v1320 = vunpack.c.h.b16 %v866
        %v1321 = vunpack.c.l.b16 %v867
        %v1322 = vunpack.c.h.b16 %v867
        %v1323 = vunpack.c.l.b16 %v868
        %v1324 = vunpack.c.h.b16 %v868
        %v1325 = vunpack.c.l.b16 %v869
        %v1326 = vunpack.c.h.b16 %v869
        %v1327 = vunpack.c.l.b16 %v870
        %v1328 = vunpack.c.h.b16 %v870
        %v1329 = vunpack.c.l.b16 %v871
        %v1330 = vunpack.c.h.b16 %v871
        %v1331 = vunpack.c.l.b16 %v872
        %v1332 = vunpack.c.h.b16 %v872
        %v1333 = vunpack.c.l.b16 %v873
        %v1334 = vunpack.c.h.b16 %v873
        %v1335 = vunpack.c.l.b16 %v874
        %v1336 = vunpack.c.h.b16 %v874
        %v1337 = vunpack.c.l.b16 %v875
        %v1338 = vunpack.c.h.b16 %v875
        %v1339 = vunpack.c.l.b16 %v876
        %v1340 = vunpack.c.h.b16 %v876
        %v1341 = vunpack.c.l.b16 %v877
        %v1342 = vunpack.c.h.b16 %v877
        %v1343 = vunpack.c.l.b16 %v878
        %v1344 = vunpack.c.h.b16 %v878
        %v1345 = vpack.c.b16 %v1275, %v1273
        %v1346 = vpack.c.b16 %v1276, %v1274
        %v1347 = vpack.c.b16 %v1279, %v1277
        %v1348 = vpack.c.b16 %v1280, %v1278
        %v1349 = vpack.c.b16 %v1283, %v1281
        %v1350 = vpack.c.b16 %v1284, %v1282
        %v1351 = vpack.c.b16 %v1287, %v1285
        %v1352 = vpack.c.b16 %v1288, %v1286
        %v1353 = vpack.c.b16 %v1291, %v1289
        %v1354 = vpack.c.b16 %v1292, %v1290
        %v1355 = vpack.c.b16 %v1295, %v1293
        %v1356 = vpack.c.b16 %v1296, %v1294
        %v1357 = vpack.c.b16 %v1299, %v1297
        %v1358 = vpack.c.b16 %v1300, %v1298
        %v1359 = vpack.c.b16 %v1303, %v1301
        %v1360 = vpack.c.b16 %v1304, %v1302
        %v1361 = vpack.c.b16 %v1307, %v1305
        %v1362 = vpack.c.b16 %v1308, %v1306
        %v1363 = vpack.c.b16 %v1311, %v1309
        %v1364 = vpack.c.b16 %v1312, %v1310
        %v1365 = vpack.c.b16 %v1315, %v1313
        %v1366 = vpack.c.b16 %v1316, %v1314
        %v1367 = vpack.c.b16 %v1319, %v1317
        %v1368 = vpack.c.b16 %v1320, %v1318
        %v1369 = vpack.c.b16 %v1323, %v1321
        %v1370 = vpack.c.b16 %v1324, %v1322
        %v1371 = vpack.c.b16 %v1327, %v1325
        %v1372 = vpack.c.b16 %v1328, %v1326
        %v1373 = vpack.c.b16 %v1331, %v1329
        %v1374 = vpack.c.b16 %v1332, %v1330
        %v1375 = vpack.c.b16 %v1335, %v1333
        %v1376 = vpack.c.b16 %v1336, %v1334
        %v1377 = vpack.c.b16 %v1339, %v1337
        %v1378 = vpack.c.b16 %v1340, %v1338
        %v1379 = vpack.c.b16 %v1343, %v1341
        %v1380 = vpack.c.b16 %v1344, %v1342
        %v1418 = vsel %vm1147, %v842, 0
        %1420 = vmatprep.subr.bf16.mxu0 %v1360
        %1421 = vmatpush1.bf16.msra.mxu0 %v1359
        %1422 = vmatprep.subr.bf16.mxu0 %v1358
        %1423 = vmatpush1.bf16.msra.mxu0 %v1357
        %1424 = vmatprep.subr.bf16.mxu0 %v1356
        %1425 = vmatpush1.bf16.msra.mxu0 %v1355
        %1426 = vmatprep.subr.bf16.mxu0 %v1354
        %1427 = vmatpush1.bf16.msra.mxu0 %v1353
        %1428 = vmatprep.subr.bf16.mxu0 %v1352
        %1429 = vmatpush1.bf16.msra.mxu0 %v1351
        %1430 = vmatprep.subr.bf16.mxu0 %v1350
        %1431 = vmatpush1.bf16.msra.mxu0 %v1349
        %1432 = vmatprep.subr.bf16.mxu0 %v1348
        %1433 = vmatpush1.bf16.msra.mxu0 %v1347
        %1434 = vmatprep.subr.bf16.mxu0 %v1346
        %1435 = vmatpush1.bf16.msra.mxu0 %v1345
        %1436 = vmatprep.subr.bf16.mxu0 %v1376
        %1437 = vmatpush2.bf16.msra.mxu0 %v1375
        %1438 = vmatprep.subr.bf16.mxu0 %v1374
        %1439 = vmatpush2.bf16.msra.mxu0 %v1373
        %1440 = vmatprep.subr.bf16.mxu0 %v1372
        %1441 = vmatpush2.bf16.msra.mxu0 %v1371
        %1442 = vmatprep.subr.bf16.mxu0 %v1370
        %1443 = vmatpush2.bf16.msra.mxu0 %v1369
        %1444 = vmatprep.subr.bf16.mxu0 %v1368
        %1445 = vmatpush2.bf16.msra.mxu0 %v1367
        %1446 = vmatprep.subr.bf16.mxu0 %v1366
        %1447 = vmatpush2.bf16.msra.mxu0 %v1365
        %1448 = vmatprep.subr.bf16.mxu0 %v1364
        %1449 = vmatpush2.bf16.msra.mxu0 %v1363
        %1450 = vmatprep.subr.bf16.mxu0 %v1362
        %1451 = vmatpush2.bf16.msra.mxu0 %v1361
        %1452 = vmatprep.mubr.bf16.mxu0 %v841
        %1453 = vmatmul.mubr.bf16.gmra.mxu0 %v840
        %v1454 = vpop.f32.mrf.mxu0
        %v1455 = vadd.f32 %v1229, %v1454
        %v1456 = vpop.f32.mrf.mxu0
        %v1457 = vadd.f32 %v1231, %v1456
        %v1458 = vpop.f32.mrf.mxu0
        %v1459 = vadd.f32 %v1233, %v1458
        %v1460 = vpop.f32.mrf.mxu0
        %v1461 = vadd.f32 %v1235, %v1460
        %1462 = vdwg.mxu0
        %1463 = vmatprep.subr.bf16.mxu0 0
        %1464 = vmatpush1.bf16.msra.mxu0 0
        %1465 = vmatprep.subr.bf16.mxu0 0
        %1466 = vmatpush1.bf16.msra.mxu0 0
        %1467 = vmatprep.subr.bf16.mxu0 0
        %1468 = vmatpush1.bf16.msra.mxu0 0
        %1469 = vmatprep.subr.bf16.mxu0 0
        %1470 = vmatpush1.bf16.msra.mxu0 0
        %1471 = vmatprep.subr.bf16.mxu0 0
        %1472 = vmatpush1.bf16.msra.mxu0 0
        %1473 = vmatprep.subr.bf16.mxu0 0
        %1474 = vmatpush1.bf16.msra.mxu0 0
        %1475 = vmatprep.subr.bf16.mxu0 %v1380
        %1476 = vmatpush1.bf16.msra.mxu0 %v1379
        %1477 = vmatprep.subr.bf16.mxu0 %v1378
        %1478 = vmatpush1.bf16.msra.mxu0 %v1377
        %1479 = vmatprep.subr.bf16.mxu0 0
        %1480 = vmatpush2.bf16.msra.mxu0 0
        %1481 = vmatprep.subr.bf16.mxu0 0
        %1482 = vmatpush2.bf16.msra.mxu0 0
        %1483 = vmatprep.subr.bf16.mxu0 0
        %1484 = vmatpush2.bf16.msra.mxu0 0
        %1485 = vmatprep.subr.bf16.mxu0 0
        %1486 = vmatpush2.bf16.msra.mxu0 0
        %1487 = vmatprep.subr.bf16.mxu0 0
        %1488 = vmatpush2.bf16.msra.mxu0 0
        %1489 = vmatprep.subr.bf16.mxu0 0
        %1490 = vmatpush2.bf16.msra.mxu0 0
        %1491 = vmatprep.subr.bf16.mxu0 0
        %1492 = vmatpush2.bf16.msra.mxu0 0
        %1493 = vmatprep.subr.bf16.mxu0 0
        %1494 = vmatpush2.bf16.msra.mxu0 0
        %1495 = vmatprep.mubr.bf16.mxu0 0
        %1496 = vmatmul.mubr.bf16.gmra.mxu0 %v1418
        %v1497 = vpop.f32.mrf.mxu0
        %v1498 = vadd.f32 %v1455, %v1497
        %v1499 = vpop.f32.mrf.mxu0
        %v1500 = vadd.f32 %v1457, %v1499
        %v1501 = vpop.f32.mrf.mxu0
        %v1502 = vadd.f32 %v1459, %v1501
        %v1503 = vpop.f32.mrf.mxu0
        %v1504 = vadd.f32 %v1461, %v1503
        %1505 = vdwg.mxu0
        %v1506 = vld [vmem:[#allocation3] sm:$0xfc]
        %v1507 = vld [vmem:[#allocation3 + $0x8] sm:$0xfc]
        %v1508 = vld [vmem:[#allocation3 + $0x10] sm:$0xfc]
        %v1509 = vld [vmem:[#allocation3 + $0x30] sm:$0x3]
        %v1510 = vld [vmem:[#allocation3 + $0x38] sm:$0x3]
        %v1511 = vld [vmem:[#allocation3 + $0x40] sm:$0x3]
        %v1512 = vpack.c.bf16 %v837, %v1506
        %v1513 = vpack.c.bf16 %v838, %v1507
        %v1514 = vpack.c.bf16 %v839, %v1508
        %v1515 = vpack.c.bf16 %v1509, %v1509
        %v1516 = vpack.c.bf16 %v1510, %v1510
        %v1517 = vpack.c.bf16 %v1511, %v1511
        %s1518 = scalar_lea.vmem %s3, 576
        %v1519 = vld [vmem:[%s1518] sm:$0xff]
        %v1520 = vld [vmem:[%s1518 + $0x8] sm:$0xff]
        %v1521 = vld [vmem:[%s1518 + $0x10] sm:$0xff]
        %v1522 = vld [vmem:[%s1518 + $0x18] sm:$0xff]
        %v1523 = vld [vmem:[%s1518 + $0x20] sm:$0xff]
        %v1524 = vld [vmem:[%s1518 + $0x28] sm:$0xff]
        %v1525 = vld [vmem:[%s1518 + $0x30] sm:$0xff]
        %v1526 = vld [vmem:[%s1518 + $0x38] sm:$0xff]
        %v1527 = vld [vmem:[%s1518 + $0x40] sm:$0xff]
        %v1528 = vld [vmem:[%s1518 + $0x48] sm:$0xff]
        %v1529 = vld [vmem:[%s1518 + $0x50] sm:$0xff]
        %v1530 = vld [vmem:[%s1518 + $0x58] sm:$0xff]
        %v1531 = vld [vmem:[%s1518 + $0x60] sm:$0xff]
        %v1532 = vld [vmem:[%s1518 + $0x68] sm:$0xff]
        %v1533 = vld [vmem:[%s1518 + $0x70] sm:$0xff]
        %v1534 = vld [vmem:[%s1518 + $0x78] sm:$0xff]
        %v1535 = vld [vmem:[%s1518 + $0x80] sm:$0xff]
        %v1536 = vld [vmem:[%s1518 + $0x88] sm:$0xff]
        %v1537 = vld [vmem:[%s1518 + $0x90] sm:$0xff]
        %v1538 = vld [vmem:[%s1518 + $0x98] sm:$0xff]
        %v1539 = vld [vmem:[%s1518 + $0xa0] sm:$0xff]
        %v1540 = vld [vmem:[%s1518 + $0xa8] sm:$0xff]
        %v1541 = vld [vmem:[%s1518 + $0xb0] sm:$0xff]
        %v1542 = vld [vmem:[%s1518 + $0xb8] sm:$0xff]
        %v1543 = vld [vmem:[%s1518 + $0xc0] sm:$0xff]
        %v1544 = vld [vmem:[%s1518 + $0xc8] sm:$0xff]
        %v1545 = vld [vmem:[%s1518 + $0xd0] sm:$0xff]
        %v1546 = vld [vmem:[%s1518 + $0xd8] sm:$0xff]
        %v1547 = vld [vmem:[%s1518 + $0xe0] sm:$0xff]
        %v1548 = vld [vmem:[%s1518 + $0xe8] sm:$0xff]
        %v1549 = vld [vmem:[%s1518 + $0xf0] sm:$0xff]
        %v1550 = vld [vmem:[%s1518 + $0xf8] sm:$0xff]
        %v1551 = vld [vmem:[%s1518 + $0x100] sm:$0xff]
        %v1552 = vld [vmem:[%s1518 + $0x108] sm:$0xff]
        %v1553 = vld [vmem:[%s1518 + $0x110] sm:$0xff]
        %v1554 = vld [vmem:[%s1518 + $0x118] sm:$0xff]
        %vm1561 = vcmask 1046528
        %v1562 = vrot.slane %v1512, 1
        %v1563 = vrot.slane %v1515, 1
        %v1564 = vsel %vm1561, %v1562, %v1563
        %v1565 = vrot.slane %v1513, 1
        %v1566 = vrot.slane %v1516, 1
        %v1567 = vsel %vm1561, %v1565, %v1566
        %v1568 = vrot.slane %v1514, 1
        %v1569 = vrot.slane %v1517, 1
        %v1570 = vsel %vm1561, %v1568, %v1569
        %v1609 = vunpack.c.l.b16 %v1519
        %v1610 = vunpack.c.h.b16 %v1519
        %v1611 = vunpack.c.l.b16 %v1520
        %v1612 = vunpack.c.h.b16 %v1520
        %v1613 = vunpack.c.l.b16 %v1521
        %v1614 = vunpack.c.h.b16 %v1521
        %v1615 = vunpack.c.l.b16 %v1522
        %v1616 = vunpack.c.h.b16 %v1522
        %v1617 = vunpack.c.l.b16 %v1523
        %v1618 = vunpack.c.h.b16 %v1523
        %v1619 = vunpack.c.l.b16 %v1524
        %v1620 = vunpack.c.h.b16 %v1524
        %v1621 = vunpack.c.l.b16 %v1525
        %v1622 = vunpack.c.h.b16 %v1525
        %v1623 = vunpack.c.l.b16 %v1526
        %v1624 = vunpack.c.h.b16 %v1526
        %v1625 = vunpack.c.l.b16 %v1527
        %v1626 = vunpack.c.h.b16 %v1527
        %v1627 = vunpack.c.l.b16 %v1528
        %v1628 = vunpack.c.h.b16 %v1528
        %v1629 = vunpack.c.l.b16 %v1529
        %v1630 = vunpack.c.h.b16 %v1529
        %v1631 = vunpack.c.l.b16 %v1530
        %v1632 = vunpack.c.h.b16 %v1530
        %v1633 = vunpack.c.l.b16 %v1531
        %v1634 = vunpack.c.h.b16 %v1531
        %v1635 = vunpack.c.l.b16 %v1532
        %v1636 = vunpack.c.h.b16 %v1532
        %v1637 = vunpack.c.l.b16 %v1533
        %v1638 = vunpack.c.h.b16 %v1533
        %v1639 = vunpack.c.l.b16 %v1534
        %v1640 = vunpack.c.h.b16 %v1534
        %v1641 = vunpack.c.l.b16 %v1535
        %v1642 = vunpack.c.h.b16 %v1535
        %v1643 = vunpack.c.l.b16 %v1536
        %v1644 = vunpack.c.h.b16 %v1536
        %v1645 = vunpack.c.l.b16 %v1537
        %v1646 = vunpack.c.h.b16 %v1537
        %v1647 = vunpack.c.l.b16 %v1538
        %v1648 = vunpack.c.h.b16 %v1538
        %v1649 = vunpack.c.l.b16 %v1539
        %v1650 = vunpack.c.h.b16 %v1539
        %v1651 = vunpack.c.l.b16 %v1540
        %v1652 = vunpack.c.h.b16 %v1540
        %v1653 = vunpack.c.l.b16 %v1541
        %v1654 = vunpack.c.h.b16 %v1541
        %v1655 = vunpack.c.l.b16 %v1542
        %v1656 = vunpack.c.h.b16 %v1542
        %v1657 = vunpack.c.l.b16 %v1543
        %v1658 = vunpack.c.h.b16 %v1543
        %v1659 = vunpack.c.l.b16 %v1544
        %v1660 = vunpack.c.h.b16 %v1544
        %v1661 = vunpack.c.l.b16 %v1545
        %v1662 = vunpack.c.h.b16 %v1545
        %v1663 = vunpack.c.l.b16 %v1546
        %v1664 = vunpack.c.h.b16 %v1546
        %v1665 = vunpack.c.l.b16 %v1547
        %v1666 = vunpack.c.h.b16 %v1547
        %v1667 = vunpack.c.l.b16 %v1548
        %v1668 = vunpack.c.h.b16 %v1548
        %v1669 = vunpack.c.l.b16 %v1549
        %v1670 = vunpack.c.h.b16 %v1549
        %v1671 = vunpack.c.l.b16 %v1550
        %v1672 = vunpack.c.h.b16 %v1550
        %v1673 = vunpack.c.l.b16 %v1551
        %v1674 = vunpack.c.h.b16 %v1551
        %v1675 = vunpack.c.l.b16 %v1552
        %v1676 = vunpack.c.h.b16 %v1552
        %v1677 = vunpack.c.l.b16 %v1553
        %v1678 = vunpack.c.h.b16 %v1553
        %v1679 = vunpack.c.l.b16 %v1554
        %v1680 = vunpack.c.h.b16 %v1554
        %v1681 = vpack.c.b16 %v1611, %v1609
        %v1682 = vpack.c.b16 %v1612, %v1610
        %v1683 = vpack.c.b16 %v1615, %v1613
        %v1684 = vpack.c.b16 %v1616, %v1614
        %v1685 = vpack.c.b16 %v1619, %v1617
        %v1686 = vpack.c.b16 %v1620, %v1618
        %v1687 = vpack.c.b16 %v1623, %v1621
        %v1688 = vpack.c.b16 %v1624, %v1622
        %v1689 = vpack.c.b16 %v1627, %v1625
        %v1690 = vpack.c.b16 %v1628, %v1626
        %v1691 = vpack.c.b16 %v1631, %v1629
        %v1692 = vpack.c.b16 %v1632, %v1630
        %v1693 = vpack.c.b16 %v1635, %v1633
        %v1694 = vpack.c.b16 %v1636, %v1634
        %v1695 = vpack.c.b16 %v1639, %v1637
        %v1696 = vpack.c.b16 %v1640, %v1638
        %v1697 = vpack.c.b16 %v1643, %v1641
        %v1698 = vpack.c.b16 %v1644, %v1642
        %v1699 = vpack.c.b16 %v1647, %v1645
        %v1700 = vpack.c.b16 %v1648, %v1646
        %v1701 = vpack.c.b16 %v1651, %v1649
        %v1702 = vpack.c.b16 %v1652, %v1650
        %v1703 = vpack.c.b16 %v1655, %v1653
        %v1704 = vpack.c.b16 %v1656, %v1654
        %v1705 = vpack.c.b16 %v1659, %v1657
        %v1706 = vpack.c.b16 %v1660, %v1658
        %v1707 = vpack.c.b16 %v1663, %v1661
        %v1708 = vpack.c.b16 %v1664, %v1662
        %v1709 = vpack.c.b16 %v1667, %v1665
        %v1710 = vpack.c.b16 %v1668, %v1666
        %v1711 = vpack.c.b16 %v1671, %v1669
        %v1712 = vpack.c.b16 %v1672, %v1670
        %v1713 = vpack.c.b16 %v1675, %v1673
        %v1714 = vpack.c.b16 %v1676, %v1674
        %v1715 = vpack.c.b16 %v1679, %v1677
        %v1716 = vpack.c.b16 %v1680, %v1678
        %v1754 = vsel %vm1147, %v1570, 0
        %1756 = vmatprep.subr.bf16.mxu0 %v1696
        %1757 = vmatpush1.bf16.msra.mxu0 %v1695
        %1758 = vmatprep.subr.bf16.mxu0 %v1694
        %1759 = vmatpush1.bf16.msra.mxu0 %v1693
        %1760 = vmatprep.subr.bf16.mxu0 %v1692
        %1761 = vmatpush1.bf16.msra.mxu0 %v1691
        %1762 = vmatprep.subr.bf16.mxu0 %v1690
        %1763 = vmatpush1.bf16.msra.mxu0 %v1689
        %1764 = vmatprep.subr.bf16.mxu0 %v1688
        %1765 = vmatpush1.bf16.msra.mxu0 %v1687
        %1766 = vmatprep.subr.bf16.mxu0 %v1686
        %1767 = vmatpush1.bf16.msra.mxu0 %v1685
        %1768 = vmatprep.subr.bf16.mxu0 %v1684
        %1769 = vmatpush1.bf16.msra.mxu0 %v1683
        %1770 = vmatprep.subr.bf16.mxu0 %v1682
        %1771 = vmatpush1.bf16.msra.mxu0 %v1681
        %1772 = vmatprep.subr.bf16.mxu0 %v1712
        %1773 = vmatpush2.bf16.msra.mxu0 %v1711
        %1774 = vmatprep.subr.bf16.mxu0 %v1710
        %1775 = vmatpush2.bf16.msra.mxu0 %v1709
        %1776 = vmatprep.subr.bf16.mxu0 %v1708
        %1777 = vmatpush2.bf16.msra.mxu0 %v1707
        %1778 = vmatprep.subr.bf16.mxu0 %v1706
        %1779 = vmatpush2.bf16.msra.mxu0 %v1705
        %1780 = vmatprep.subr.bf16.mxu0 %v1704
        %1781 = vmatpush2.bf16.msra.mxu0 %v1703
        %1782 = vmatprep.subr.bf16.mxu0 %v1702
        %1783 = vmatpush2.bf16.msra.mxu0 %v1701
        %1784 = vmatprep.subr.bf16.mxu0 %v1700
        %1785 = vmatpush2.bf16.msra.mxu0 %v1699
        %1786 = vmatprep.subr.bf16.mxu0 %v1698
        %1787 = vmatpush2.bf16.msra.mxu0 %v1697
        %1788 = vmatprep.mubr.bf16.mxu0 %v1567
        %1789 = vmatmul.mubr.bf16.gmra.mxu0 %v1564
        %v1790 = vpop.f32.mrf.mxu0
        %v1791 = vadd.f32 0.0, %v1790
        %v1792 = vpop.f32.mrf.mxu0
        %v1793 = vadd.f32 0.0, %v1792
        %v1794 = vpop.f32.mrf.mxu0
        %v1795 = vadd.f32 0.0, %v1794
        %v1796 = vpop.f32.mrf.mxu0
        %v1797 = vadd.f32 0.0, %v1796
        %1798 = vdwg.mxu0
        %1799 = vmatprep.subr.bf16.mxu0 0
        %1800 = vmatpush1.bf16.msra.mxu0 0
        %1801 = vmatprep.subr.bf16.mxu0 0
        %1802 = vmatpush1.bf16.msra.mxu0 0
        %1803 = vmatprep.subr.bf16.mxu0 0
        %1804 = vmatpush1.bf16.msra.mxu0 0
        %1805 = vmatprep.subr.bf16.mxu0 0
        %1806 = vmatpush1.bf16.msra.mxu0 0
        %1807 = vmatprep.subr.bf16.mxu0 0
        %1808 = vmatpush1.bf16.msra.mxu0 0
        %1809 = vmatprep.subr.bf16.mxu0 0
        %1810 = vmatpush1.bf16.msra.mxu0 0
        %1811 = vmatprep.subr.bf16.mxu0 %v1716
        %1812 = vmatpush1.bf16.msra.mxu0 %v1715
        %1813 = vmatprep.subr.bf16.mxu0 %v1714
        %1814 = vmatpush1.bf16.msra.mxu0 %v1713
        %1815 = vmatprep.subr.bf16.mxu0 0
        %1816 = vmatpush2.bf16.msra.mxu0 0
        %1817 = vmatprep.subr.bf16.mxu0 0
        %1818 = vmatpush2.bf16.msra.mxu0 0
        %1819 = vmatprep.subr.bf16.mxu0 0
        %1820 = vmatpush2.bf16.msra.mxu0 0
        %1821 = vmatprep.subr.bf16.mxu0 0
        %1822 = vmatpush2.bf16.msra.mxu0 0
        %1823 = vmatprep.subr.bf16.mxu0 0
        %1824 = vmatpush2.bf16.msra.mxu0 0
        %1825 = vmatprep.subr.bf16.mxu0 0
        %1826 = vmatpush2.bf16.msra.mxu0 0
        %1827 = vmatprep.subr.bf16.mxu0 0
        %1828 = vmatpush2.bf16.msra.mxu0 0
        %1829 = vmatprep.subr.bf16.mxu0 0
        %1830 = vmatpush2.bf16.msra.mxu0 0
        %1831 = vmatprep.mubr.bf16.mxu0 0
        %1832 = vmatmul.mubr.bf16.gmra.mxu0 %v1754
        %v1833 = vpop.f32.mrf.mxu0
        %v1834 = vadd.f32 %v1791, %v1833
        %v1835 = vpop.f32.mrf.mxu0
        %v1836 = vadd.f32 %v1793, %v1835
        %v1837 = vpop.f32.mrf.mxu0
        %v1838 = vadd.f32 %v1795, %v1837
        %v1839 = vpop.f32.mrf.mxu0
        %v1840 = vadd.f32 %v1797, %v1839
        %1841 = vdwg.mxu0
        %v1842 = vadd.f32 %v1498, %v1834
        %v1843 = vadd.f32 %v1500, %v1836
        %v1844 = vadd.f32 %v1502, %v1838
        %v1845 = vadd.f32 %v1504, %v1840
        %v1846 = vld [vmem:[%s4] sm:$0x3]
        %v1848 = vlaneseq
        %v1849 = vshrl.u32 %v1848, 7
        %v1850 = vsub.s32 0, %v1849
        %v1851 = vrot.slane %v1846, %v1850
        %v1852 = vlaneseq
        %v1853 = vshrl.u32 %v1852, 7
        %v1854 = vsub.s32 1, %v1853
        %v1855 = vrot.slane %v1846, %v1854
        %v1858 = vadd.f32 %v1842, %v1851
        %v1859 = vadd.f32 %v1843, %v1855
        %v1860 = vadd.f32 %v1844, %v1851
        %v1861 = vadd.f32 %v1845, %v1855
        %v1862 = vmax.f32 %v1858, 0.0
        %v1863 = vmax.f32 %v1859, 0.0
        %v1864 = vmax.f32 %v1860, 0.0
        %v1865 = vmax.f32 %v1861, 0.0
        %vm1866 = vcmp.lt.s32.totalorder %v766, 160
        %vm1867 = vmand %vm767, %vm1866
        %1868 = vst.msk [vmem:[#allocation4] ss:$8 sm:$0x3] %vm1867, 0.0
        %1869 = vst.msk [vmem:[#allocation4] ss:$8 sm:$0x0] %vm1867, 0.0
        %s1870 = scalar_lea.vmem [#allocation4], 17
        %1871 = vst.msk [vmem:[%s1870] ss:$8 sm:$0x3] %vm1867, 0.0
        %1872 = vst.msk [vmem:[%s1870] ss:$8 sm:$0x0] %vm1867, 0.0
        %1873 = vst.msk [vmem:[#allocation4] sm:$0xff] %vm775, 0.0
        %1874 = vst.msk [vmem:[#allocation4 + $0x10] sm:$0x3] %vm778, 0.0
        %1875 = vst.msk [vmem:[#allocation4 + $0x8] sm:$0xff] %vm780, 0.0
        %1876 = vst.msk [vmem:[#allocation4 + $0x18] sm:$0x3] %vm783, 0.0
        %v1881 = vcombine.low %v1862, %v1863
        %v1882 = vcombine.high %v1862, %v1863
        %v1884 = vunpack.c.l.s4 1983009808
        %v1885 = vunpack.c.0.s8 %v1884
        %v1886 = vlaneseq
        %v1887 = vshrl.u32 %v1886, 7
        %v1888 = vsub.s32 %v1885, %v1887
        %v1889 = vrot.slane %v1881, %v1888
        %v1891 = vunpack.c.l.s4 1983009808
        %v1892 = vunpack.c.0.s8 %v1891
        %v1893 = vlaneseq
        %v1894 = vshrl.u32 %v1893, 7
        %v1895 = vsub.s32 %v1892, %v1894
        %v1896 = vrot.slane %v1882, %v1895
        %v1897 = vcombine.high %v1889, %v1889
        %v1898 = vcombine.high %v1896, %v1896
        %v1899 = vcombine.low %v1864, %v1865
        %v1900 = vcombine.high %v1864, %v1865
        %v1902 = vunpack.c.l.s4 1983009808
        %v1903 = vunpack.c.0.s8 %v1902
        %v1904 = vlaneseq
        %v1905 = vshrl.u32 %v1904, 7
        %v1906 = vsub.s32 %v1903, %v1905
        %v1907 = vrot.slane %v1899, %v1906
        %v1909 = vunpack.c.l.s4 1983009808
        %v1910 = vunpack.c.0.s8 %v1909
        %v1911 = vlaneseq
        %v1912 = vshrl.u32 %v1911, 7
        %v1913 = vsub.s32 %v1910, %v1912
        %v1914 = vrot.slane %v1900, %v1913
        %v1915 = vcombine.high %v1907, %v1907
        %v1916 = vcombine.high %v1914, %v1914
        %v1925 = vrot.slane %v1889, 7
        %v1926 = vrot.slane %v1925, 2
        %v1927 = vrot.slane %v1897, 7
        %v1928 = vrot.slane %v1927, 2
        %v1929 = vrot.slane %v1896, 7
        %v1930 = vrot.slane %v1929, 2
        %v1931 = vrot.slane %v1898, 7
        %v1932 = vrot.slane %v1931, 2
        %v1933 = vrot.slane %v1907, 7
        %v1934 = vrot.slane %v1933, 2
        %v1935 = vrot.slane %v1915, 7
        %v1936 = vrot.slane %v1935, 2
        %v1937 = vrot.slane %v1914, 7
        %v1938 = vrot.slane %v1937, 2
        %v1939 = vrot.slane %v1916, 7
        %v1940 = vrot.slane %v1939, 2
        %v1949 = vmax.f32 %v1889, %v1926
        %v1950 = vmax.f32 %v1897, %v1928
        %v1951 = vmax.f32 %v1896, %v1930
        %v1952 = vmax.f32 %v1898, %v1932
        %v1953 = vmax.f32 %v1907, %v1934
        %v1954 = vmax.f32 %v1915, %v1936
        %v1955 = vmax.f32 %v1914, %v1938
        %v1956 = vmax.f32 %v1916, %v1940
        %v1965 = vrot.slane %v1949, 2
        %v1966 = vrot.slane %v1950, 2
        %v1967 = vrot.slane %v1951, 2
        %v1968 = vrot.slane %v1952, 2
        %v1969 = vrot.slane %v1953, 2
        %v1970 = vrot.slane %v1954, 2
        %v1971 = vrot.slane %v1955, 2
        %v1972 = vrot.slane %v1956, 2
        %1973 = vrot.lane.b32.xlu0 %v1949, 96
        %v1974 = vpop.permute.xlu0 %1973
        %1975 = vrot.lane.b32.xlu0 %v1950, 96
        %v1976 = vpop.permute.xlu0 %1975
        %1977 = vrot.lane.b32.xlu0 %v1951, 96
        %v1978 = vpop.permute.xlu0 %1977
        %1979 = vrot.lane.b32.xlu0 %v1952, 96
        %v1980 = vpop.permute.xlu0 %1979
        %1981 = vrot.lane.b32.xlu0 %v1953, 96
        %v1982 = vpop.permute.xlu0 %1981
        %1983 = vrot.lane.b32.xlu0 %v1954, 96
        %v1984 = vpop.permute.xlu0 %1983
        %1985 = vrot.lane.b32.xlu0 %v1955, 96
        %v1986 = vpop.permute.xlu0 %1985
        %1987 = vrot.lane.b32.xlu0 %v1956, 96
        %v1988 = vpop.permute.xlu0 %1987
        %v1989 = vrot.slane %v1974, 2
        %v1990 = vrot.slane %v1976, 2
        %v1991 = vrot.slane %v1978, 2
        %v1992 = vrot.slane %v1980, 2
        %v1993 = vrot.slane %v1982, 2
        %v1994 = vrot.slane %v1984, 2
        %v1995 = vrot.slane %v1986, 2
        %v1996 = vrot.slane %v1988, 2
        %1997 = vrot.lane.b32.xlu0 %v1949, 64
        %v1998 = vpop.permute.xlu0 %1997
        %1999 = vrot.lane.b32.xlu0 %v1950, 64
        %v2000 = vpop.permute.xlu0 %1999
        %2001 = vrot.lane.b32.xlu0 %v1951, 64
        %v2002 = vpop.permute.xlu0 %2001
        %2003 = vrot.lane.b32.xlu0 %v1952, 64
        %v2004 = vpop.permute.xlu0 %2003
        %2005 = vrot.lane.b32.xlu0 %v1953, 64
        %v2006 = vpop.permute.xlu0 %2005
        %2007 = vrot.lane.b32.xlu0 %v1954, 64
        %v2008 = vpop.permute.xlu0 %2007
        %2009 = vrot.lane.b32.xlu0 %v1955, 64
        %v2010 = vpop.permute.xlu0 %2009
        %2011 = vrot.lane.b32.xlu0 %v1956, 64
        %v2012 = vpop.permute.xlu0 %2011
        %v2013 = vrot.slane %v1998, 2
        %v2014 = vrot.slane %v2000, 2
        %v2015 = vrot.slane %v2002, 2
        %v2016 = vrot.slane %v2004, 2
        %v2017 = vrot.slane %v2006, 2
        %v2018 = vrot.slane %v2008, 2
        %v2019 = vrot.slane %v2010, 2
        %v2020 = vrot.slane %v2012, 2
        %2021 = vrot.lane.b32.xlu0 %v1949, 32
        %v2022 = vpop.permute.xlu0 %2021
        %2023 = vrot.lane.b32.xlu0 %v1950, 32
        %v2024 = vpop.permute.xlu0 %2023
        %2025 = vrot.lane.b32.xlu0 %v1951, 32
        %v2026 = vpop.permute.xlu0 %2025
        %2027 = vrot.lane.b32.xlu0 %v1952, 32
        %v2028 = vpop.permute.xlu0 %2027
        %2029 = vrot.lane.b32.xlu0 %v1953, 32
        %v2030 = vpop.permute.xlu0 %2029
        %2031 = vrot.lane.b32.xlu0 %v1954, 32
        %v2032 = vpop.permute.xlu0 %2031
        %2033 = vrot.lane.b32.xlu0 %v1955, 32
        %v2034 = vpop.permute.xlu0 %2033
        %2035 = vrot.lane.b32.xlu0 %v1956, 32
        %v2036 = vpop.permute.xlu0 %2035
        %v2037 = vrot.slane %v2022, 2
        %v2038 = vrot.slane %v2024, 2
        %v2039 = vrot.slane %v2026, 2
        %v2040 = vrot.slane %v2028, 2
        %v2041 = vrot.slane %v2030, 2
        %v2042 = vrot.slane %v2032, 2
        %v2043 = vrot.slane %v2034, 2
        %v2044 = vrot.slane %v2036, 2
        %vm2045 = vcmask 1044484
        %v2046 = vsel %vm2045, %v1949, %v1949
        %vm2047 = vcmask 1046534
        %v2048 = vsel %vm2047, %v1949, %v2046
        %v2049 = vrot.slane %v1950, 7
        %vm2050 = vcmask 1041409
        %v2051 = vsel %vm2050, %v2049, %v2048
        %vm2052 = vcmask 1043459
        %v2053 = vsel %vm2052, %v2049, %v2051
        %vm2054 = vcmask 1045509
        %v2055 = vsel %vm2054, %v2049, %v2053
        %vm2056 = vcmask 1047559
        %v2057 = vsel %vm2056, %v2049, %v2055
        %v2058 = vsel %vm2045, %v1951, %v1951
        %v2059 = vsel %vm2047, %v1951, %v2058
        %v2060 = vrot.slane %v1952, 7
        %v2061 = vsel %vm2050, %v2060, %v2059
        %v2062 = vsel %vm2052, %v2060, %v2061
        %v2063 = vsel %vm2054, %v2060, %v2062
        %v2064 = vsel %vm2056, %v2060, %v2063
        %v2065 = vsel %vm2045, %v1953, %v1953
        %v2066 = vsel %vm2047, %v1953, %v2065
        %v2067 = vrot.slane %v1954, 7
        %v2068 = vsel %vm2050, %v2067, %v2066
        %v2069 = vsel %vm2052, %v2067, %v2068
        %v2070 = vsel %vm2054, %v2067, %v2069
        %v2071 = vsel %vm2056, %v2067, %v2070
        %v2072 = vsel %vm2045, %v1955, %v1955
        %v2073 = vsel %vm2047, %v1955, %v2072
        %v2074 = vrot.slane %v1956, 7
        %v2075 = vsel %vm2050, %v2074, %v2073
        %v2076 = vsel %vm2052, %v2074, %v2075
        %v2077 = vsel %vm2054, %v2074, %v2076
        %v2078 = vsel %vm2056, %v2074, %v2077
        %v2079 = vsel %vm2045, %v1974, %v1974
        %v2080 = vsel %vm2047, %v1974, %v2079
        %v2081 = vrot.slane %v1976, 7
        %v2082 = vsel %vm2050, %v2081, %v2080
        %v2083 = vsel %vm2052, %v2081, %v2082
        %v2084 = vsel %vm2054, %v2081, %v2083
        %v2085 = vsel %vm2056, %v2081, %v2084
        %v2086 = vsel %vm2045, %v1978, %v1978
        %v2087 = vsel %vm2047, %v1978, %v2086
        %v2088 = vrot.slane %v1980, 7
        %v2089 = vsel %vm2050, %v2088, %v2087
        %v2090 = vsel %vm2052, %v2088, %v2089
        %v2091 = vsel %vm2054, %v2088, %v2090
        %v2092 = vsel %vm2056, %v2088, %v2091
        %v2093 = vsel %vm2045, %v1982, %v1982
        %v2094 = vsel %vm2047, %v1982, %v2093
        %v2095 = vrot.slane %v1984, 7
        %v2096 = vsel %vm2050, %v2095, %v2094
        %v2097 = vsel %vm2052, %v2095, %v2096
        %v2098 = vsel %vm2054, %v2095, %v2097
        %v2099 = vsel %vm2056, %v2095, %v2098
        %v2100 = vsel %vm2045, %v1986, %v1986
        %v2101 = vsel %vm2047, %v1986, %v2100
        %v2102 = vrot.slane %v1988, 7
        %v2103 = vsel %vm2050, %v2102, %v2101
        %v2104 = vsel %vm2052, %v2102, %v2103
        %v2105 = vsel %vm2054, %v2102, %v2104
        %v2106 = vsel %vm2056, %v2102, %v2105
        %v2107 = vsel %vm2045, %v1998, %v1998
        %v2108 = vsel %vm2047, %v1998, %v2107
        %v2109 = vrot.slane %v2000, 7
        %v2110 = vsel %vm2050, %v2109, %v2108
        %v2111 = vsel %vm2052, %v2109, %v2110
        %v2112 = vsel %vm2054, %v2109, %v2111
        %v2113 = vsel %vm2056, %v2109, %v2112
        %v2114 = vsel %vm2045, %v2002, %v2002
        %v2115 = vsel %vm2047, %v2002, %v2114
        %v2116 = vrot.slane %v2004, 7
        %v2117 = vsel %vm2050, %v2116, %v2115
        %v2118 = vsel %vm2052, %v2116, %v2117
        %v2119 = vsel %vm2054, %v2116, %v2118
        %v2120 = vsel %vm2056, %v2116, %v2119
        %v2121 = vsel %vm2045, %v2006, %v2006
        %v2122 = vsel %vm2047, %v2006, %v2121
        %v2123 = vrot.slane %v2008, 7
        %v2124 = vsel %vm2050, %v2123, %v2122
        %v2125 = vsel %vm2052, %v2123, %v2124
        %v2126 = vsel %vm2054, %v2123, %v2125
        %v2127 = vsel %vm2056, %v2123, %v2126
        %v2128 = vsel %vm2045, %v2010, %v2010
        %v2129 = vsel %vm2047, %v2010, %v2128
        %v2130 = vrot.slane %v2012, 7
        %v2131 = vsel %vm2050, %v2130, %v2129
        %v2132 = vsel %vm2052, %v2130, %v2131
        %v2133 = vsel %vm2054, %v2130, %v2132
        %v2134 = vsel %vm2056, %v2130, %v2133
        %v2135 = vsel %vm2045, %v2022, %v2022
        %v2136 = vsel %vm2047, %v2022, %v2135
        %v2137 = vrot.slane %v2024, 7
        %v2138 = vsel %vm2050, %v2137, %v2136
        %v2139 = vsel %vm2052, %v2137, %v2138
        %v2140 = vsel %vm2054, %v2137, %v2139
        %v2141 = vsel %vm2056, %v2137, %v2140
        %v2142 = vsel %vm2045, %v2026, %v2026
        %v2143 = vsel %vm2047, %v2026, %v2142
        %v2144 = vrot.slane %v2028, 7
        %v2145 = vsel %vm2050, %v2144, %v2143
        %v2146 = vsel %vm2052, %v2144, %v2145
        %v2147 = vsel %vm2054, %v2144, %v2146
        %v2148 = vsel %vm2056, %v2144, %v2147
        %v2149 = vsel %vm2045, %v2030, %v2030
        %v2150 = vsel %vm2047, %v2030, %v2149
        %v2151 = vrot.slane %v2032, 7
        %v2152 = vsel %vm2050, %v2151, %v2150
        %v2153 = vsel %vm2052, %v2151, %v2152
        %v2154 = vsel %vm2054, %v2151, %v2153
        %v2155 = vsel %vm2056, %v2151, %v2154
        %v2156 = vsel %vm2045, %v2034, %v2034
        %v2157 = vsel %vm2047, %v2034, %v2156
        %v2158 = vrot.slane %v2036, 7
        %v2159 = vsel %vm2050, %v2158, %v2157
        %v2160 = vsel %vm2052, %v2158, %v2159
        %v2161 = vsel %vm2054, %v2158, %v2160
        %v2162 = vsel %vm2056, %v2158, %v2161
        %v2163 = vsel %vm2045, %v1965, %v1965
        %v2164 = vsel %vm2047, %v1965, %v2163
        %v2165 = vrot.slane %v1966, 7
        %v2166 = vsel %vm2050, %v2165, %v2164
        %v2167 = vsel %vm2052, %v2165, %v2166
        %v2168 = vsel %vm2054, %v2165, %v2167
        %v2169 = vsel %vm2056, %v2165, %v2168
        %v2170 = vsel %vm2045, %v1967, %v1967
        %v2171 = vsel %vm2047, %v1967, %v2170
        %v2172 = vrot.slane %v1968, 7
        %v2173 = vsel %vm2050, %v2172, %v2171
        %v2174 = vsel %vm2052, %v2172, %v2173
        %v2175 = vsel %vm2054, %v2172, %v2174
        %v2176 = vsel %vm2056, %v2172, %v2175
        %v2177 = vsel %vm2045, %v1969, %v1969
        %v2178 = vsel %vm2047, %v1969, %v2177
        %v2179 = vrot.slane %v1970, 7
        %v2180 = vsel %vm2050, %v2179, %v2178
        %v2181 = vsel %vm2052, %v2179, %v2180
        %v2182 = vsel %vm2054, %v2179, %v2181
        %v2183 = vsel %vm2056, %v2179, %v2182
        %v2184 = vsel %vm2045, %v1971, %v1971
        %v2185 = vsel %vm2047, %v1971, %v2184
        %v2186 = vrot.slane %v1972, 7
        %v2187 = vsel %vm2050, %v2186, %v2185
        %v2188 = vsel %vm2052, %v2186, %v2187
        %v2189 = vsel %vm2054, %v2186, %v2188
        %v2190 = vsel %vm2056, %v2186, %v2189
        %v2191 = vsel %vm2045, %v1989, %v1989
        %v2192 = vsel %vm2047, %v1989, %v2191
        %v2193 = vrot.slane %v1990, 7
        %v2194 = vsel %vm2050, %v2193, %v2192
        %v2195 = vsel %vm2052, %v2193, %v2194
        %v2196 = vsel %vm2054, %v2193, %v2195
        %v2197 = vsel %vm2056, %v2193, %v2196
        %v2198 = vsel %vm2045, %v1991, %v1991
        %v2199 = vsel %vm2047, %v1991, %v2198
        %v2200 = vrot.slane %v1992, 7
        %v2201 = vsel %vm2050, %v2200, %v2199
        %v2202 = vsel %vm2052, %v2200, %v2201
        %v2203 = vsel %vm2054, %v2200, %v2202
        %v2204 = vsel %vm2056, %v2200, %v2203
        %v2205 = vsel %vm2045, %v1993, %v1993
        %v2206 = vsel %vm2047, %v1993, %v2205
        %v2207 = vrot.slane %v1994, 7
        %v2208 = vsel %vm2050, %v2207, %v2206
        %v2209 = vsel %vm2052, %v2207, %v2208
        %v2210 = vsel %vm2054, %v2207, %v2209
        %v2211 = vsel %vm2056, %v2207, %v2210
        %v2212 = vsel %vm2045, %v1995, %v1995
        %v2213 = vsel %vm2047, %v1995, %v2212
        %v2214 = vrot.slane %v1996, 7
        %v2215 = vsel %vm2050, %v2214, %v2213
        %v2216 = vsel %vm2052, %v2214, %v2215
        %v2217 = vsel %vm2054, %v2214, %v2216
        %v2218 = vsel %vm2056, %v2214, %v2217
        %v2219 = vsel %vm2045, %v2013, %v2013
        %v2220 = vsel %vm2047, %v2013, %v2219
        %v2221 = vrot.slane %v2014, 7
        %v2222 = vsel %vm2050, %v2221, %v2220
        %v2223 = vsel %vm2052, %v2221, %v2222
        %v2224 = vsel %vm2054, %v2221, %v2223
        %v2225 = vsel %vm2056, %v2221, %v2224
        %v2226 = vsel %vm2045, %v2015, %v2015
        %v2227 = vsel %vm2047, %v2015, %v2226
        %v2228 = vrot.slane %v2016, 7
        %v2229 = vsel %vm2050, %v2228, %v2227
        %v2230 = vsel %vm2052, %v2228, %v2229
        %v2231 = vsel %vm2054, %v2228, %v2230
        %v2232 = vsel %vm2056, %v2228, %v2231
        %v2233 = vsel %vm2045, %v2017, %v2017
        %v2234 = vsel %vm2047, %v2017, %v2233
        %v2235 = vrot.slane %v2018, 7
        %v2236 = vsel %vm2050, %v2235, %v2234
        %v2237 = vsel %vm2052, %v2235, %v2236
        %v2238 = vsel %vm2054, %v2235, %v2237
        %v2239 = vsel %vm2056, %v2235, %v2238
        %v2240 = vsel %vm2045, %v2019, %v2019
        %v2241 = vsel %vm2047, %v2019, %v2240
        %v2242 = vrot.slane %v2020, 7
        %v2243 = vsel %vm2050, %v2242, %v2241
        %v2244 = vsel %vm2052, %v2242, %v2243
        %v2245 = vsel %vm2054, %v2242, %v2244
        %v2246 = vsel %vm2056, %v2242, %v2245
        %v2247 = vsel %vm2045, %v2037, %v2037
        %v2248 = vsel %vm2047, %v2037, %v2247
        %v2249 = vrot.slane %v2038, 7
        %v2250 = vsel %vm2050, %v2249, %v2248
        %v2251 = vsel %vm2052, %v2249, %v2250
        %v2252 = vsel %vm2054, %v2249, %v2251
        %v2253 = vsel %vm2056, %v2249, %v2252
        %v2254 = vsel %vm2045, %v2039, %v2039
        %v2255 = vsel %vm2047, %v2039, %v2254
        %v2256 = vrot.slane %v2040, 7
        %v2257 = vsel %vm2050, %v2256, %v2255
        %v2258 = vsel %vm2052, %v2256, %v2257
        %v2259 = vsel %vm2054, %v2256, %v2258
        %v2260 = vsel %vm2056, %v2256, %v2259
        %v2261 = vsel %vm2045, %v2041, %v2041
        %v2262 = vsel %vm2047, %v2041, %v2261
        %v2263 = vrot.slane %v2042, 7
        %v2264 = vsel %vm2050, %v2263, %v2262
        %v2265 = vsel %vm2052, %v2263, %v2264
        %v2266 = vsel %vm2054, %v2263, %v2265
        %v2267 = vsel %vm2056, %v2263, %v2266
        %v2268 = vsel %vm2045, %v2043, %v2043
        %v2269 = vsel %vm2047, %v2043, %v2268
        %v2270 = vrot.slane %v2044, 7
        %v2271 = vsel %vm2050, %v2270, %v2269
        %v2272 = vsel %vm2052, %v2270, %v2271
        %v2273 = vsel %vm2054, %v2270, %v2272
        %v2274 = vsel %vm2056, %v2270, %v2273
        %v2307 = vcombine.low %v2057, %v2085
        %v2309 = vunpack.c.l.s4 1934713408
        %v2310 = vunpack.c.0.s8 %v2309
        %v2311 = vlaneseq
        %v2312 = vshrl.u32 %v2311, 7
        %v2313 = vsub.s32 %v2310, %v2312
        %v2314 = vrot.slane %v2307, %v2313
        %v2315 = vcombine.high %v2314, 0.0
        %v2316 = vcombine.low %v2113, %v2141
        %v2318 = vunpack.c.l.s4 1934713408
        %v2319 = vunpack.c.0.s8 %v2318
        %v2320 = vlaneseq
        %v2321 = vshrl.u32 %v2320, 7
        %v2322 = vsub.s32 %v2319, %v2321
        %v2323 = vrot.slane %v2316, %v2322
        %v2324 = vcombine.high %v2323, 0.0
        %v2325 = vcombine.low %v2169, %v2197
        %v2327 = vunpack.c.l.s4 1934713408
        %v2328 = vunpack.c.0.s8 %v2327
        %v2329 = vlaneseq
        %v2330 = vshrl.u32 %v2329, 7
        %v2331 = vsub.s32 %v2328, %v2330
        %v2332 = vrot.slane %v2325, %v2331
        %v2333 = vcombine.high %v2332, 0.0
        %v2334 = vcombine.low %v2225, %v2253
        %v2336 = vunpack.c.l.s4 1934713408
        %v2337 = vunpack.c.0.s8 %v2336
        %v2338 = vlaneseq
        %v2339 = vshrl.u32 %v2338, 7
        %v2340 = vsub.s32 %v2337, %v2339
        %v2341 = vrot.slane %v2334, %v2340
        %v2342 = vcombine.high %v2341, 0.0
        %v2343 = vcombine.low %v2064, %v2092
        %v2345 = vunpack.c.l.s4 1934713408
        %v2346 = vunpack.c.0.s8 %v2345
        %v2347 = vlaneseq
        %v2348 = vshrl.u32 %v2347, 7
        %v2349 = vsub.s32 %v2346, %v2348
        %v2350 = vrot.slane %v2343, %v2349
        %v2351 = vcombine.high %v2350, 0.0
        %v2352 = vcombine.low %v2120, %v2148
        %v2354 = vunpack.c.l.s4 1934713408
        %v2355 = vunpack.c.0.s8 %v2354
        %v2356 = vlaneseq
        %v2357 = vshrl.u32 %v2356, 7
        %v2358 = vsub.s32 %v2355, %v2357
        %v2359 = vrot.slane %v2352, %v2358
        %v2360 = vcombine.high %v2359, 0.0
        %v2361 = vcombine.low %v2176, %v2204
        %v2363 = vunpack.c.l.s4 1934713408
        %v2364 = vunpack.c.0.s8 %v2363
        %v2365 = vlaneseq
        %v2366 = vshrl.u32 %v2365, 7
        %v2367 = vsub.s32 %v2364, %v2366
        %v2368 = vrot.slane %v2361, %v2367
        %v2369 = vcombine.high %v2368, 0.0
        %v2370 = vcombine.low %v2232, %v2260
        %v2372 = vunpack.c.l.s4 1934713408
        %v2373 = vunpack.c.0.s8 %v2372
        %v2374 = vlaneseq
        %v2375 = vshrl.u32 %v2374, 7
        %v2376 = vsub.s32 %v2373, %v2375
        %v2377 = vrot.slane %v2370, %v2376
        %v2378 = vcombine.high %v2377, 0.0
        %v2379 = vcombine.low %v2071, %v2099
        %v2381 = vunpack.c.l.s4 1934713408
        %v2382 = vunpack.c.0.s8 %v2381
        %v2383 = vlaneseq
        %v2384 = vshrl.u32 %v2383, 7
        %v2385 = vsub.s32 %v2382, %v2384
        %v2386 = vrot.slane %v2379, %v2385
        %v2387 = vcombine.high %v2386, 0.0
        %v2388 = vcombine.low %v2127, %v2155
        %v2390 = vunpack.c.l.s4 1934713408
        %v2391 = vunpack.c.0.s8 %v2390
        %v2392 = vlaneseq
        %v2393 = vshrl.u32 %v2392, 7
        %v2394 = vsub.s32 %v2391, %v2393
        %v2395 = vrot.slane %v2388, %v2394
        %v2396 = vcombine.high %v2395, 0.0
        %v2397 = vcombine.low %v2183, %v2211
        %v2399 = vunpack.c.l.s4 1934713408
        %v2400 = vunpack.c.0.s8 %v2399
        %v2401 = vlaneseq
        %v2402 = vshrl.u32 %v2401, 7
        %v2403 = vsub.s32 %v2400, %v2402
        %v2404 = vrot.slane %v2397, %v2403
        %v2405 = vcombine.high %v2404, 0.0
        %v2406 = vcombine.low %v2239, %v2267
        %v2408 = vunpack.c.l.s4 1934713408
        %v2409 = vunpack.c.0.s8 %v2408
        %v2410 = vlaneseq
        %v2411 = vshrl.u32 %v2410, 7
        %v2412 = vsub.s32 %v2409, %v2411
        %v2413 = vrot.slane %v2406, %v2412
        %v2414 = vcombine.high %v2413, 0.0
        %v2415 = vcombine.low %v2078, %v2106
        %v2417 = vunpack.c.l.s4 1934713408
        %v2418 = vunpack.c.0.s8 %v2417
        %v2419 = vlaneseq
        %v2420 = vshrl.u32 %v2419, 7
        %v2421 = vsub.s32 %v2418, %v2420
        %v2422 = vrot.slane %v2415, %v2421
        %v2423 = vcombine.high %v2422, 0.0
        %v2424 = vcombine.low %v2134, %v2162
        %v2426 = vunpack.c.l.s4 1934713408
        %v2427 = vunpack.c.0.s8 %v2426
        %v2428 = vlaneseq
        %v2429 = vshrl.u32 %v2428, 7
        %v2430 = vsub.s32 %v2427, %v2429
        %v2431 = vrot.slane %v2424, %v2430
        %v2432 = vcombine.high %v2431, 0.0
        %v2433 = vcombine.low %v2190, %v2218
        %v2435 = vunpack.c.l.s4 1934713408
        %v2436 = vunpack.c.0.s8 %v2435
        %v2437 = vlaneseq
        %v2438 = vshrl.u32 %v2437, 7
        %v2439 = vsub.s32 %v2436, %v2438
        %v2440 = vrot.slane %v2433, %v2439
        %v2441 = vcombine.high %v2440, 0.0
        %v2442 = vcombine.low %v2246, %v2274
        %v2444 = vunpack.c.l.s4 1934713408
        %v2445 = vunpack.c.0.s8 %v2444
        %v2446 = vlaneseq
        %v2447 = vshrl.u32 %v2446, 7
        %v2448 = vsub.s32 %v2445, %v2447
        %v2449 = vrot.slane %v2442, %v2448
        %v2450 = vcombine.high %v2449, 0.0
        %2483 = vrot.lane.b32.xlu0 %v2314, 112
        %v2484 = vpop.permute.xlu0 %2483
        %2485 = vrot.lane.b32.xlu0 %v2323, 112
        %v2486 = vpop.permute.xlu0 %2485
        %2487 = vrot.lane.b32.xlu0 %v2332, 112
        %v2488 = vpop.permute.xlu0 %2487
        %2489 = vrot.lane.b32.xlu0 %v2341, 112
        %v2490 = vpop.permute.xlu0 %2489
        %2491 = vrot.lane.b32.xlu0 %v2315, 112
        %v2492 = vpop.permute.xlu0 %2491
        %2493 = vrot.lane.b32.xlu0 %v2324, 112
        %v2494 = vpop.permute.xlu0 %2493
        %2495 = vrot.lane.b32.xlu0 %v2333, 112
        %v2496 = vpop.permute.xlu0 %2495
        %2497 = vrot.lane.b32.xlu0 %v2342, 112
        %v2498 = vpop.permute.xlu0 %2497
        %2499 = vrot.lane.b32.xlu0 %v2350, 112
        %v2500 = vpop.permute.xlu0 %2499
        %2501 = vrot.lane.b32.xlu0 %v2359, 112
        %v2502 = vpop.permute.xlu0 %2501
        %2503 = vrot.lane.b32.xlu0 %v2368, 112
        %v2504 = vpop.permute.xlu0 %2503
        %2505 = vrot.lane.b32.xlu0 %v2377, 112
        %v2506 = vpop.permute.xlu0 %2505
        %2507 = vrot.lane.b32.xlu0 %v2351, 112
        %v2508 = vpop.permute.xlu0 %2507
        %2509 = vrot.lane.b32.xlu0 %v2360, 112
        %v2510 = vpop.permute.xlu0 %2509
        %2511 = vrot.lane.b32.xlu0 %v2369, 112
        %v2512 = vpop.permute.xlu0 %2511
        %2513 = vrot.lane.b32.xlu0 %v2378, 112
        %v2514 = vpop.permute.xlu0 %2513
        %2515 = vrot.lane.b32.xlu0 %v2386, 112
        %v2516 = vpop.permute.xlu0 %2515
        %2517 = vrot.lane.b32.xlu0 %v2395, 112
        %v2518 = vpop.permute.xlu0 %2517
        %2519 = vrot.lane.b32.xlu0 %v2404, 112
        %v2520 = vpop.permute.xlu0 %2519
        %2521 = vrot.lane.b32.xlu0 %v2413, 112
        %v2522 = vpop.permute.xlu0 %2521
        %2523 = vrot.lane.b32.xlu0 %v2387, 112
        %v2524 = vpop.permute.xlu0 %2523
        %2525 = vrot.lane.b32.xlu0 %v2396, 112
        %v2526 = vpop.permute.xlu0 %2525
        %2527 = vrot.lane.b32.xlu0 %v2405, 112
        %v2528 = vpop.permute.xlu0 %2527
        %2529 = vrot.lane.b32.xlu0 %v2414, 112
        %v2530 = vpop.permute.xlu0 %2529
        %2531 = vrot.lane.b32.xlu0 %v2422, 112
        %v2532 = vpop.permute.xlu0 %2531
        %2533 = vrot.lane.b32.xlu0 %v2431, 112
        %v2534 = vpop.permute.xlu0 %2533
        %2535 = vrot.lane.b32.xlu0 %v2440, 112
        %v2536 = vpop.permute.xlu0 %2535
        %2537 = vrot.lane.b32.xlu0 %v2449, 112
        %v2538 = vpop.permute.xlu0 %2537
        %2539 = vrot.lane.b32.xlu0 %v2423, 112
        %v2540 = vpop.permute.xlu0 %2539
        %2541 = vrot.lane.b32.xlu0 %v2432, 112
        %v2542 = vpop.permute.xlu0 %2541
        %2543 = vrot.lane.b32.xlu0 %v2441, 112
        %v2544 = vpop.permute.xlu0 %2543
        %2545 = vrot.lane.b32.xlu0 %v2450, 112
        %v2546 = vpop.permute.xlu0 %2545
        %v2579 = vmax.f32 %v2314, %v2484
        %v2580 = vmax.f32 %v2323, %v2486
        %v2581 = vmax.f32 %v2332, %v2488
        %v2582 = vmax.f32 %v2341, %v2490
        %v2583 = vmax.f32 %v2315, %v2492
        %v2584 = vmax.f32 %v2324, %v2494
        %v2585 = vmax.f32 %v2333, %v2496
        %v2586 = vmax.f32 %v2342, %v2498
        %v2587 = vmax.f32 %v2350, %v2500
        %v2588 = vmax.f32 %v2359, %v2502
        %v2589 = vmax.f32 %v2368, %v2504
        %v2590 = vmax.f32 %v2377, %v2506
        %v2591 = vmax.f32 %v2351, %v2508
        %v2592 = vmax.f32 %v2360, %v2510
        %v2593 = vmax.f32 %v2369, %v2512
        %v2594 = vmax.f32 %v2378, %v2514
        %v2595 = vmax.f32 %v2386, %v2516
        %v2596 = vmax.f32 %v2395, %v2518
        %v2597 = vmax.f32 %v2404, %v2520
        %v2598 = vmax.f32 %v2413, %v2522
        %v2599 = vmax.f32 %v2387, %v2524
        %v2600 = vmax.f32 %v2396, %v2526
        %v2601 = vmax.f32 %v2405, %v2528
        %v2602 = vmax.f32 %v2414, %v2530
        %v2603 = vmax.f32 %v2422, %v2532
        %v2604 = vmax.f32 %v2431, %v2534
        %v2605 = vmax.f32 %v2440, %v2536
        %v2606 = vmax.f32 %v2449, %v2538
        %v2607 = vmax.f32 %v2423, %v2540
        %v2608 = vmax.f32 %v2432, %v2542
        %v2609 = vmax.f32 %v2441, %v2544
        %v2610 = vmax.f32 %v2450, %v2546
        %v2611 = vcombine.low %v2579, %v2583
        %v2613 = vunpack.c.l.s4 1934713408
        %v2614 = vunpack.c.0.s8 %v2613
        %v2615 = vlaneseq
        %v2616 = vshrl.u32 %v2615, 7
        %v2617 = vsub.s32 %v2614, %v2616
        %v2618 = vrot.slane %v2611, %v2617
        %v2619 = vcombine.high %v2618, 0.0
        %v2620 = vcombine.low %v2587, %v2591
        %v2622 = vunpack.c.l.s4 1934713408
        %v2623 = vunpack.c.0.s8 %v2622
        %v2624 = vlaneseq
        %v2625 = vshrl.u32 %v2624, 7
        %v2626 = vsub.s32 %v2623, %v2625
        %v2627 = vrot.slane %v2620, %v2626
        %v2628 = vcombine.high %v2627, 0.0
        %v2629 = vcombine.low %v2595, %v2599
        %v2631 = vunpack.c.l.s4 1934713408
        %v2632 = vunpack.c.0.s8 %v2631
        %v2633 = vlaneseq
        %v2634 = vshrl.u32 %v2633, 7
        %v2635 = vsub.s32 %v2632, %v2634
        %v2636 = vrot.slane %v2629, %v2635
        %v2637 = vcombine.high %v2636, 0.0
        %v2638 = vcombine.low %v2603, %v2607
        %v2640 = vunpack.c.l.s4 1934713408
        %v2641 = vunpack.c.0.s8 %v2640
        %v2642 = vlaneseq
        %v2643 = vshrl.u32 %v2642, 7
        %v2644 = vsub.s32 %v2641, %v2643
        %v2645 = vrot.slane %v2638, %v2644
        %v2646 = vcombine.high %v2645, 0.0
        %v2647 = vcombine.low %v2580, %v2584
        %v2649 = vunpack.c.l.s4 1934713408
        %v2650 = vunpack.c.0.s8 %v2649
        %v2651 = vlaneseq
        %v2652 = vshrl.u32 %v2651, 7
        %v2653 = vsub.s32 %v2650, %v2652
        %v2654 = vrot.slane %v2647, %v2653
        %v2655 = vcombine.high %v2654, 0.0
        %v2656 = vcombine.low %v2588, %v2592
        %v2658 = vunpack.c.l.s4 1934713408
        %v2659 = vunpack.c.0.s8 %v2658
        %v2660 = vlaneseq
        %v2661 = vshrl.u32 %v2660, 7
        %v2662 = vsub.s32 %v2659, %v2661
        %v2663 = vrot.slane %v2656, %v2662
        %v2664 = vcombine.high %v2663, 0.0
        %v2665 = vcombine.low %v2596, %v2600
        %v2667 = vunpack.c.l.s4 1934713408
        %v2668 = vunpack.c.0.s8 %v2667
        %v2669 = vlaneseq
        %v2670 = vshrl.u32 %v2669, 7
        %v2671 = vsub.s32 %v2668, %v2670
        %v2672 = vrot.slane %v2665, %v2671
        %v2673 = vcombine.high %v2672, 0.0
        %v2674 = vcombine.low %v2604, %v2608
        %v2676 = vunpack.c.l.s4 1934713408
        %v2677 = vunpack.c.0.s8 %v2676
        %v2678 = vlaneseq
        %v2679 = vshrl.u32 %v2678, 7
        %v2680 = vsub.s32 %v2677, %v2679
        %v2681 = vrot.slane %v2674, %v2680
        %v2682 = vcombine.high %v2681, 0.0
        %v2683 = vcombine.low %v2581, %v2585
        %v2685 = vunpack.c.l.s4 1934713408
        %v2686 = vunpack.c.0.s8 %v2685
        %v2687 = vlaneseq
        %v2688 = vshrl.u32 %v2687, 7
        %v2689 = vsub.s32 %v2686, %v2688
        %v2690 = vrot.slane %v2683, %v2689
        %v2691 = vcombine.high %v2690, 0.0
        %v2692 = vcombine.low %v2589, %v2593
        %v2694 = vunpack.c.l.s4 1934713408
        %v2695 = vunpack.c.0.s8 %v2694
        %v2696 = vlaneseq
        %v2697 = vshrl.u32 %v2696, 7
        %v2698 = vsub.s32 %v2695, %v2697
        %v2699 = vrot.slane %v2692, %v2698
        %v2700 = vcombine.high %v2699, 0.0
        %v2701 = vcombine.low %v2597, %v2601
        %v2703 = vunpack.c.l.s4 1934713408
        %v2704 = vunpack.c.0.s8 %v2703
        %v2705 = vlaneseq
        %v2706 = vshrl.u32 %v2705, 7
        %v2707 = vsub.s32 %v2704, %v2706
        %v2708 = vrot.slane %v2701, %v2707
        %v2709 = vcombine.high %v2708, 0.0
        %v2710 = vcombine.low %v2605, %v2609
        %v2712 = vunpack.c.l.s4 1934713408
        %v2713 = vunpack.c.0.s8 %v2712
        %v2714 = vlaneseq
        %v2715 = vshrl.u32 %v2714, 7
        %v2716 = vsub.s32 %v2713, %v2715
        %v2717 = vrot.slane %v2710, %v2716
        %v2718 = vcombine.high %v2717, 0.0
        %v2719 = vcombine.low %v2582, %v2586
        %v2721 = vunpack.c.l.s4 1934713408
        %v2722 = vunpack.c.0.s8 %v2721
        %v2723 = vlaneseq
        %v2724 = vshrl.u32 %v2723, 7
        %v2725 = vsub.s32 %v2722, %v2724
        %v2726 = vrot.slane %v2719, %v2725
        %v2727 = vcombine.high %v2726, 0.0
        %v2728 = vcombine.low %v2590, %v2594
        %v2730 = vunpack.c.l.s4 1934713408
        %v2731 = vunpack.c.0.s8 %v2730
        %v2732 = vlaneseq
        %v2733 = vshrl.u32 %v2732, 7
        %v2734 = vsub.s32 %v2731, %v2733
        %v2735 = vrot.slane %v2728, %v2734
        %v2736 = vcombine.high %v2735, 0.0
        %v2737 = vcombine.low %v2598, %v2602
        %v2739 = vunpack.c.l.s4 1934713408
        %v2740 = vunpack.c.0.s8 %v2739
        %v2741 = vlaneseq
        %v2742 = vshrl.u32 %v2741, 7
        %v2743 = vsub.s32 %v2740, %v2742
        %v2744 = vrot.slane %v2737, %v2743
        %v2745 = vcombine.high %v2744, 0.0
        %v2746 = vcombine.low %v2606, %v2610
        %v2748 = vunpack.c.l.s4 1934713408
        %v2749 = vunpack.c.0.s8 %v2748
        %v2750 = vlaneseq
        %v2751 = vshrl.u32 %v2750, 7
        %v2752 = vsub.s32 %v2749, %v2751
        %v2753 = vrot.slane %v2746, %v2752
        %v2754 = vcombine.high %v2753, 0.0
        %v2759 = vcombine.low %v2618, %v2627
        %v2760 = vcombine.low %v2636, %v2645
        %v2762 = vunpack.c.l.s4 1983009808
        %v2763 = vunpack.c.0.s8 %v2762
        %v2764 = vlaneseq
        %v2765 = vshrl.u32 %v2764, 7
        %v2766 = vsub.s32 %v2763, %v2765
        %v2767 = vrot.slane %v2759, %v2766
        %v2769 = vunpack.c.l.s4 1983009808
        %v2770 = vunpack.c.0.s8 %v2769
        %v2771 = vlaneseq
        %v2772 = vshrl.u32 %v2771, 7
        %v2773 = vsub.s32 %v2770, %v2772
        %v2774 = vrot.slane %v2760, %v2773
        %v2775 = vcombine.low %v2767, %v2774
        %v2781 = vcombine.low %v2619, %v2628
        %v2782 = vcombine.low %v2637, %v2646
        %v2784 = vunpack.c.l.s4 1983009808
        %v2785 = vunpack.c.0.s8 %v2784
        %v2786 = vlaneseq
        %v2787 = vshrl.u32 %v2786, 7
        %v2788 = vsub.s32 %v2785, %v2787
        %v2789 = vrot.slane %v2781, %v2788
        %v2791 = vunpack.c.l.s4 1983009808
        %v2792 = vunpack.c.0.s8 %v2791
        %v2793 = vlaneseq
        %v2794 = vshrl.u32 %v2793, 7
        %v2795 = vsub.s32 %v2792, %v2794
        %v2796 = vrot.slane %v2782, %v2795
        %v2797 = vcombine.low %v2789, %v2796
        %2798 = vrot.lane.b32.xlu0 %v2797, 16
        %v2799 = vpop.permute.xlu0 %2798
        %v2805 = vcombine.low %v2654, %v2663
        %v2806 = vcombine.low %v2672, %v2681
        %v2808 = vunpack.c.l.s4 1983009808
        %v2809 = vunpack.c.0.s8 %v2808
        %v2810 = vlaneseq
        %v2811 = vshrl.u32 %v2810, 7
        %v2812 = vsub.s32 %v2809, %v2811
        %v2813 = vrot.slane %v2805, %v2812
        %v2815 = vunpack.c.l.s4 1983009808
        %v2816 = vunpack.c.0.s8 %v2815
        %v2817 = vlaneseq
        %v2818 = vshrl.u32 %v2817, 7
        %v2819 = vsub.s32 %v2816, %v2818
        %v2820 = vrot.slane %v2806, %v2819
        %v2821 = vcombine.low %v2813, %v2820
        %2822 = vrot.lane.b32.xlu0 %v2821, 32
        %v2823 = vpop.permute.xlu0 %2822
        %v2829 = vcombine.low %v2655, %v2664
        %v2830 = vcombine.low %v2673, %v2682
        %v2832 = vunpack.c.l.s4 1983009808
        %v2833 = vunpack.c.0.s8 %v2832
        %v2834 = vlaneseq
        %v2835 = vshrl.u32 %v2834, 7
        %v2836 = vsub.s32 %v2833, %v2835
        %v2837 = vrot.slane %v2829, %v2836
        %v2839 = vunpack.c.l.s4 1983009808
        %v2840 = vunpack.c.0.s8 %v2839
        %v2841 = vlaneseq
        %v2842 = vshrl.u32 %v2841, 7
        %v2843 = vsub.s32 %v2840, %v2842
        %v2844 = vrot.slane %v2830, %v2843
        %v2845 = vcombine.low %v2837, %v2844
        %2846 = vrot.lane.b32.xlu0 %v2845, 48
        %v2847 = vpop.permute.xlu0 %2846
        %v2853 = vcombine.low %v2690, %v2699
        %v2854 = vcombine.low %v2708, %v2717
        %v2856 = vunpack.c.l.s4 1983009808
        %v2857 = vunpack.c.0.s8 %v2856
        %v2858 = vlaneseq
        %v2859 = vshrl.u32 %v2858, 7
        %v2860 = vsub.s32 %v2857, %v2859
        %v2861 = vrot.slane %v2853, %v2860
        %v2863 = vunpack.c.l.s4 1983009808
        %v2864 = vunpack.c.0.s8 %v2863
        %v2865 = vlaneseq
        %v2866 = vshrl.u32 %v2865, 7
        %v2867 = vsub.s32 %v2864, %v2866
        %v2868 = vrot.slane %v2854, %v2867
        %v2869 = vcombine.low %v2861, %v2868
        %2870 = vrot.lane.b32.xlu0 %v2869, 64
        %v2871 = vpop.permute.xlu0 %2870
        %v2877 = vcombine.low %v2691, %v2700
        %v2878 = vcombine.low %v2709, %v2718
        %v2880 = vunpack.c.l.s4 1983009808
        %v2881 = vunpack.c.0.s8 %v2880
        %v2882 = vlaneseq
        %v2883 = vshrl.u32 %v2882, 7
        %v2884 = vsub.s32 %v2881, %v2883
        %v2885 = vrot.slane %v2877, %v2884
        %v2887 = vunpack.c.l.s4 1983009808
        %v2888 = vunpack.c.0.s8 %v2887
        %v2889 = vlaneseq
        %v2890 = vshrl.u32 %v2889, 7
        %v2891 = vsub.s32 %v2888, %v2890
        %v2892 = vrot.slane %v2878, %v2891
        %v2893 = vcombine.low %v2885, %v2892
        %2894 = vrot.lane.b32.xlu0 %v2893, 80
        %v2895 = vpop.permute.xlu0 %2894
        %v2901 = vcombine.low %v2726, %v2735
        %v2902 = vcombine.low %v2744, %v2753
        %v2904 = vunpack.c.l.s4 1983009808
        %v2905 = vunpack.c.0.s8 %v2904
        %v2906 = vlaneseq
        %v2907 = vshrl.u32 %v2906, 7
        %v2908 = vsub.s32 %v2905, %v2907
        %v2909 = vrot.slane %v2901, %v2908
        %v2911 = vunpack.c.l.s4 1983009808
        %v2912 = vunpack.c.0.s8 %v2911
        %v2913 = vlaneseq
        %v2914 = vshrl.u32 %v2913, 7
        %v2915 = vsub.s32 %v2912, %v2914
        %v2916 = vrot.slane %v2902, %v2915
        %v2917 = vcombine.low %v2909, %v2916
        %2918 = vrot.lane.b32.xlu0 %v2917, 96
        %v2919 = vpop.permute.xlu0 %2918
        %v2925 = vcombine.low %v2727, %v2736
        %v2926 = vcombine.low %v2745, %v2754
        %v2928 = vunpack.c.l.s4 1983009808
        %v2929 = vunpack.c.0.s8 %v2928
        %v2930 = vlaneseq
        %v2931 = vshrl.u32 %v2930, 7
        %v2932 = vsub.s32 %v2929, %v2931
        %v2933 = vrot.slane %v2925, %v2932
        %v2935 = vunpack.c.l.s4 1983009808
        %v2936 = vunpack.c.0.s8 %v2935
        %v2937 = vlaneseq
        %v2938 = vshrl.u32 %v2937, 7
        %v2939 = vsub.s32 %v2936, %v2938
        %v2940 = vrot.slane %v2926, %v2939
        %v2941 = vcombine.low %v2933, %v2940
        %2942 = vrot.lane.b32.xlu0 %v2941, 112
        %v2943 = vpop.permute.xlu0 %2942
        %v2945 = vsel %vm775, %v2775, %v2799
        %v2946 = vsel %vm1147, %v2945, %v2823
        %vm2947 = vcmask 392192
        %v2948 = vsel %vm2947, %v2946, %v2847
        %vm2949 = vcmask 523264
        %v2950 = vsel %vm2949, %v2948, %v2871
        %vm2951 = vcmask 654336
        %v2952 = vsel %vm2951, %v2950, %v2895
        %vm2953 = vcmask 785408
        %v2954 = vsel %vm2953, %v2952, %v2919
        %vm2955 = vcmask 916480
        %v2956 = vsel %vm2955, %v2954, %v2943
        %v2958 = vrot.slane %v2956, 7
        %2959 = vrot.lane.b32.xlu0 %v2958, 16
        %v2960 = vpop.permute.xlu0 %2959
        %2962 = vst.msk [vmem:[#allocation4] sm:$0xfe] %vm820, %v2960
        %2963 = vst.msk [vmem:[#allocation4 + $0x8] sm:$0xfe] %vm823, %v2960
        %2964 = vst.msk [vmem:[#allocation4 + $0x10] sm:$0x1] %vm829, %v2960
        %2965 = vst.msk [vmem:[#allocation4 + $0x18] sm:$0x1] %vm832, %v2960
        %v2966 = vld [vmem:[#allocation4] sm:$0xff]
        %v2967 = vld [vmem:[#allocation4 + $0x8] sm:$0xff]
        %v2968 = vpack.c.bf16 %v2966, %v2966
        %v2969 = vpack.c.bf16 %v2967, %v2967
        %v2970 = vld [vmem:[%s5] sm:$0xff]
        %v2971 = vld [vmem:[%s5 + $0x8] sm:$0xff]
        %v2972 = vld [vmem:[%s5 + $0x10] sm:$0xff]
        %v2973 = vld [vmem:[%s5 + $0x18] sm:$0xff]
        %v2974 = vld [vmem:[%s5 + $0x20] sm:$0xff]
        %v2975 = vld [vmem:[%s5 + $0x28] sm:$0xff]
        %v2976 = vld [vmem:[%s5 + $0x30] sm:$0xff]
        %v2977 = vld [vmem:[%s5 + $0x38] sm:$0xff]
        %v2978 = vld [vmem:[%s5 + $0x40] sm:$0xff]
        %v2979 = vld [vmem:[%s5 + $0x48] sm:$0xff]
        %v2980 = vld [vmem:[%s5 + $0x50] sm:$0xff]
        %v2981 = vld [vmem:[%s5 + $0x58] sm:$0xff]
        %v2982 = vld [vmem:[%s5 + $0x60] sm:$0xff]
        %v2983 = vld [vmem:[%s5 + $0x68] sm:$0xff]
        %v2984 = vld [vmem:[%s5 + $0x70] sm:$0xff]
        %v2985 = vld [vmem:[%s5 + $0x78] sm:$0xff]
        %v2986 = vld [vmem:[%s5 + $0x80] sm:$0xff]
        %v2987 = vld [vmem:[%s5 + $0x88] sm:$0xff]
        %v2988 = vld [vmem:[%s5 + $0x90] sm:$0xff]
        %v2989 = vld [vmem:[%s5 + $0x98] sm:$0xff]
        %v2990 = vld [vmem:[#allocation4] sm:$0xfe]
        %v2991 = vld [vmem:[#allocation4 + $0x8] sm:$0xfe]
        %v2992 = vld [vmem:[#allocation4 + $0x10] sm:$0x1]
        %v2993 = vld [vmem:[#allocation4 + $0x18] sm:$0x1]
        %v2994 = vpack.c.bf16 %v2992, %v2990
        %v2995 = vpack.c.bf16 %v2993, %v2991
        %s2996 = scalar_lea.vmem %s5, 160
        %v2997 = vld [vmem:[%s2996] sm:$0xff]
        %v2998 = vld [vmem:[%s2996 + $0x8] sm:$0xff]
        %v2999 = vld [vmem:[%s2996 + $0x10] sm:$0xff]
        %v3000 = vld [vmem:[%s2996 + $0x18] sm:$0xff]
        %v3001 = vld [vmem:[%s2996 + $0x20] sm:$0xff]
        %v3002 = vld [vmem:[%s2996 + $0x28] sm:$0xff]
        %v3003 = vld [vmem:[%s2996 + $0x30] sm:$0xff]
        %v3004 = vld [vmem:[%s2996 + $0x38] sm:$0xff]
        %v3005 = vld [vmem:[%s2996 + $0x40] sm:$0xff]
        %v3006 = vld [vmem:[%s2996 + $0x48] sm:$0xff]
        %v3007 = vld [vmem:[%s2996 + $0x50] sm:$0xff]
        %v3008 = vld [vmem:[%s2996 + $0x58] sm:$0xff]
        %v3009 = vld [vmem:[%s2996 + $0x60] sm:$0xff]
        %v3010 = vld [vmem:[%s2996 + $0x68] sm:$0xff]
        %v3011 = vld [vmem:[%s2996 + $0x70] sm:$0xff]
        %v3012 = vld [vmem:[%s2996 + $0x78] sm:$0xff]
        %v3013 = vld [vmem:[%s2996 + $0x80] sm:$0xff]
        %v3014 = vld [vmem:[%s2996 + $0x88] sm:$0xff]
        %v3015 = vld [vmem:[%s2996 + $0x90] sm:$0xff]
        %v3016 = vld [vmem:[%s2996 + $0x98] sm:$0xff]
        %v3018 = vshrl.u32 %v2994, 16
        %v3020 = vshll.u32 %v2994, 16
        %v3022 = vrot.slane %v3020, 1
        %v3023 = vor.u32 %v3018, %v3022
        %v3025 = vshrl.u32 %v2995, 16
        %v3027 = vshll.u32 %v2995, 16
        %v3029 = vrot.slane %v3027, 1
        %v3030 = vor.u32 %v3025, %v3029
        %v3052 = vunpack.c.l.b16 %v2997
        %v3053 = vunpack.c.h.b16 %v2997
        %v3054 = vunpack.c.l.b16 %v2998
        %v3055 = vunpack.c.h.b16 %v2998
        %v3056 = vunpack.c.l.b16 %v2999
        %v3057 = vunpack.c.h.b16 %v2999
        %v3058 = vunpack.c.l.b16 %v3000
        %v3059 = vunpack.c.h.b16 %v3000
        %v3060 = vunpack.c.l.b16 %v3001
        %v3061 = vunpack.c.h.b16 %v3001
        %v3062 = vunpack.c.l.b16 %v3002
        %v3063 = vunpack.c.h.b16 %v3002
        %v3064 = vunpack.c.l.b16 %v3003
        %v3065 = vunpack.c.h.b16 %v3003
        %v3066 = vunpack.c.l.b16 %v3004
        %v3067 = vunpack.c.h.b16 %v3004
        %v3068 = vunpack.c.l.b16 %v3005
        %v3069 = vunpack.c.h.b16 %v3005
        %v3070 = vunpack.c.l.b16 %v3006
        %v3071 = vunpack.c.h.b16 %v3006
        %v3072 = vunpack.c.l.b16 %v3007
        %v3073 = vunpack.c.h.b16 %v3007
        %v3074 = vunpack.c.l.b16 %v3008
        %v3075 = vunpack.c.h.b16 %v3008
        %v3076 = vunpack.c.l.b16 %v3009
        %v3077 = vunpack.c.h.b16 %v3009
        %v3078 = vunpack.c.l.b16 %v3010
        %v3079 = vunpack.c.h.b16 %v3010
        %v3080 = vunpack.c.l.b16 %v3011
        %v3081 = vunpack.c.h.b16 %v3011
        %v3082 = vunpack.c.l.b16 %v3012
        %v3083 = vunpack.c.h.b16 %v3012
        %v3084 = vunpack.c.l.b16 %v3013
        %v3085 = vunpack.c.h.b16 %v3013
        %v3086 = vunpack.c.l.b16 %v3014
        %v3087 = vunpack.c.h.b16 %v3014
        %v3088 = vunpack.c.l.b16 %v3015
        %v3089 = vunpack.c.h.b16 %v3015
        %v3090 = vunpack.c.l.b16 %v3016
        %v3091 = vunpack.c.h.b16 %v3016
        %v3092 = vpack.c.b16 %v3054, %v3052
        %v3093 = vpack.c.b16 %v3055, %v3053
        %v3094 = vpack.c.b16 %v3058, %v3056
        %v3095 = vpack.c.b16 %v3059, %v3057
        %v3096 = vpack.c.b16 %v3062, %v3060
        %v3097 = vpack.c.b16 %v3063, %v3061
        %v3098 = vpack.c.b16 %v3066, %v3064
        %v3099 = vpack.c.b16 %v3067, %v3065
        %v3100 = vpack.c.b16 %v3070, %v3068
        %v3101 = vpack.c.b16 %v3071, %v3069
        %v3102 = vpack.c.b16 %v3074, %v3072
        %v3103 = vpack.c.b16 %v3075, %v3073
        %v3104 = vpack.c.b16 %v3078, %v3076
        %v3105 = vpack.c.b16 %v3079, %v3077
        %v3106 = vpack.c.b16 %v3082, %v3080
        %v3107 = vpack.c.b16 %v3083, %v3081
        %v3108 = vpack.c.b16 %v3086, %v3084
        %v3109 = vpack.c.b16 %v3087, %v3085
        %v3110 = vpack.c.b16 %v3090, %v3088
        %v3111 = vpack.c.b16 %v3091, %v3089
        %v3133 = vsel %vm1147, %v3030, 0
        %3135 = vmatprep.subr.bf16.mxu0 %v3107
        %3136 = vmatpush1.bf16.msra.mxu0 %v3106
        %3137 = vmatprep.subr.bf16.mxu0 %v3105
        %3138 = vmatpush1.bf16.msra.mxu0 %v3104
        %3139 = vmatprep.subr.bf16.mxu0 %v3103
        %3140 = vmatpush1.bf16.msra.mxu0 %v3102
        %3141 = vmatprep.subr.bf16.mxu0 %v3101
        %3142 = vmatpush1.bf16.msra.mxu0 %v3100
        %3143 = vmatprep.subr.bf16.mxu0 %v3099
        %3144 = vmatpush1.bf16.msra.mxu0 %v3098
        %3145 = vmatprep.subr.bf16.mxu0 %v3097
        %3146 = vmatpush1.bf16.msra.mxu0 %v3096
        %3147 = vmatprep.subr.bf16.mxu0 %v3095
        %3148 = vmatpush1.bf16.msra.mxu0 %v3094
        %3149 = vmatprep.subr.bf16.mxu0 %v3093
        %3150 = vmatpush1.bf16.msra.mxu0 %v3092
        %3151 = vmatprep.subr.bf16.mxu0 0
        %3152 = vmatpush2.bf16.msra.mxu0 0
        %3153 = vmatprep.subr.bf16.mxu0 0
        %3154 = vmatpush2.bf16.msra.mxu0 0
        %3155 = vmatprep.subr.bf16.mxu0 0
        %3156 = vmatpush2.bf16.msra.mxu0 0
        %3157 = vmatprep.subr.bf16.mxu0 0
        %3158 = vmatpush2.bf16.msra.mxu0 0
        %3159 = vmatprep.subr.bf16.mxu0 0
        %3160 = vmatpush2.bf16.msra.mxu0 0
        %3161 = vmatprep.subr.bf16.mxu0 0
        %3162 = vmatpush2.bf16.msra.mxu0 0
        %3163 = vmatprep.subr.bf16.mxu0 %v3111
        %3164 = vmatpush2.bf16.msra.mxu0 %v3110
        %3165 = vmatprep.subr.bf16.mxu0 %v3109
        %3166 = vmatpush2.bf16.msra.mxu0 %v3108
        %3167 = vmatprep.mubr.bf16.mxu0 %v3133
        %3168 = vmatmul.mubr.bf16.gmra.mxu0 %v3023
        %v3169 = vpop.f32.mrf.mxu0
        %v3170 = vadd.f32 0.0, %v3169
        %v3171 = vpop.f32.mrf.mxu0
        %v3172 = vadd.f32 0.0, %v3171
        %v3173 = vpop.f32.mrf.mxu0
        %v3174 = vpop.f32.mrf.mxu0
        %3175 = vdwg.mxu0
        %v3196 = vunpack.c.l.b16 %v2970
        %v3197 = vunpack.c.h.b16 %v2970
        %v3198 = vunpack.c.l.b16 %v2971
        %v3199 = vunpack.c.h.b16 %v2971
        %v3200 = vunpack.c.l.b16 %v2972
        %v3201 = vunpack.c.h.b16 %v2972
        %v3202 = vunpack.c.l.b16 %v2973
        %v3203 = vunpack.c.h.b16 %v2973
        %v3204 = vunpack.c.l.b16 %v2974
        %v3205 = vunpack.c.h.b16 %v2974
        %v3206 = vunpack.c.l.b16 %v2975
        %v3207 = vunpack.c.h.b16 %v2975
        %v3208 = vunpack.c.l.b16 %v2976
        %v3209 = vunpack.c.h.b16 %v2976
        %v3210 = vunpack.c.l.b16 %v2977
        %v3211 = vunpack.c.h.b16 %v2977
        %v3212 = vunpack.c.l.b16 %v2978
        %v3213 = vunpack.c.h.b16 %v2978
        %v3214 = vunpack.c.l.b16 %v2979
        %v3215 = vunpack.c.h.b16 %v2979
        %v3216 = vunpack.c.l.b16 %v2980
        %v3217 = vunpack.c.h.b16 %v2980
        %v3218 = vunpack.c.l.b16 %v2981
        %v3219 = vunpack.c.h.b16 %v2981
        %v3220 = vunpack.c.l.b16 %v2982
        %v3221 = vunpack.c.h.b16 %v2982
        %v3222 = vunpack.c.l.b16 %v2983
        %v3223 = vunpack.c.h.b16 %v2983
        %v3224 = vunpack.c.l.b16 %v2984
        %v3225 = vunpack.c.h.b16 %v2984
        %v3226 = vunpack.c.l.b16 %v2985
        %v3227 = vunpack.c.h.b16 %v2985
        %v3228 = vunpack.c.l.b16 %v2986
        %v3229 = vunpack.c.h.b16 %v2986
        %v3230 = vunpack.c.l.b16 %v2987
        %v3231 = vunpack.c.h.b16 %v2987
        %v3232 = vunpack.c.l.b16 %v2988
        %v3233 = vunpack.c.h.b16 %v2988
        %v3234 = vunpack.c.l.b16 %v2989
        %v3235 = vunpack.c.h.b16 %v2989
        %v3236 = vpack.c.b16 %v3198, %v3196
        %v3237 = vpack.c.b16 %v3199, %v3197
        %v3238 = vpack.c.b16 %v3202, %v3200
        %v3239 = vpack.c.b16 %v3203, %v3201
        %v3240 = vpack.c.b16 %v3206, %v3204
        %v3241 = vpack.c.b16 %v3207, %v3205
        %v3242 = vpack.c.b16 %v3210, %v3208
        %v3243 = vpack.c.b16 %v3211, %v3209
        %v3244 = vpack.c.b16 %v3214, %v3212
        %v3245 = vpack.c.b16 %v3215, %v3213
        %v3246 = vpack.c.b16 %v3218, %v3216
        %v3247 = vpack.c.b16 %v3219, %v3217
        %v3248 = vpack.c.b16 %v3222, %v3220
        %v3249 = vpack.c.b16 %v3223, %v3221
        %v3250 = vpack.c.b16 %v3226, %v3224
        %v3251 = vpack.c.b16 %v3227, %v3225
        %v3252 = vpack.c.b16 %v3230, %v3228
        %v3253 = vpack.c.b16 %v3231, %v3229
        %v3254 = vpack.c.b16 %v3234, %v3232
        %v3255 = vpack.c.b16 %v3235, %v3233
        %v3277 = vsel %vm1147, %v2969, 0
        %3279 = vmatprep.subr.bf16.mxu0 %v3251
        %3280 = vmatpush1.bf16.msra.mxu0 %v3250
        %3281 = vmatprep.subr.bf16.mxu0 %v3249
        %3282 = vmatpush1.bf16.msra.mxu0 %v3248
        %3283 = vmatprep.subr.bf16.mxu0 %v3247
        %3284 = vmatpush1.bf16.msra.mxu0 %v3246
        %3285 = vmatprep.subr.bf16.mxu0 %v3245
        %3286 = vmatpush1.bf16.msra.mxu0 %v3244
        %3287 = vmatprep.subr.bf16.mxu0 %v3243
        %3288 = vmatpush1.bf16.msra.mxu0 %v3242
        %3289 = vmatprep.subr.bf16.mxu0 %v3241
        %3290 = vmatpush1.bf16.msra.mxu0 %v3240
        %3291 = vmatprep.subr.bf16.mxu0 %v3239
        %3292 = vmatpush1.bf16.msra.mxu0 %v3238
        %3293 = vmatprep.subr.bf16.mxu0 %v3237
        %3294 = vmatpush1.bf16.msra.mxu0 %v3236
        %3295 = vmatprep.subr.bf16.mxu0 0
        %3296 = vmatpush2.bf16.msra.mxu0 0
        %3297 = vmatprep.subr.bf16.mxu0 0
        %3298 = vmatpush2.bf16.msra.mxu0 0
        %3299 = vmatprep.subr.bf16.mxu0 0
        %3300 = vmatpush2.bf16.msra.mxu0 0
        %3301 = vmatprep.subr.bf16.mxu0 0
        %3302 = vmatpush2.bf16.msra.mxu0 0
        %3303 = vmatprep.subr.bf16.mxu0 0
        %3304 = vmatpush2.bf16.msra.mxu0 0
        %3305 = vmatprep.subr.bf16.mxu0 0
        %3306 = vmatpush2.bf16.msra.mxu0 0
        %3307 = vmatprep.subr.bf16.mxu0 %v3255
        %3308 = vmatpush2.bf16.msra.mxu0 %v3254
        %3309 = vmatprep.subr.bf16.mxu0 %v3253
        %3310 = vmatpush2.bf16.msra.mxu0 %v3252
        %3311 = vmatprep.mubr.bf16.mxu0 %v3277
        %3312 = vmatmul.mubr.bf16.gmra.mxu0 %v2968
        %v3313 = vpop.f32.mrf.mxu0
        %v3314 = vadd.f32 %v3170, %v3313
        %v3315 = vpop.f32.mrf.mxu0
        %v3316 = vadd.f32 %v3172, %v3315
        %v3317 = vpop.f32.mrf.mxu0
        %v3318 = vpop.f32.mrf.mxu0
        %3319 = vdwg.mxu0
        %v3320 = vld [vmem:[#allocation4] sm:$0xfc]
        %v3321 = vld [vmem:[#allocation4 + $0x8] sm:$0xfc]
        %v3322 = vld [vmem:[#allocation4 + $0x10] sm:$0x3]
        %v3323 = vld [vmem:[#allocation4 + $0x18] sm:$0x3]
        %v3324 = vpack.c.bf16 %v3322, %v3320
        %v3325 = vpack.c.bf16 %v3323, %v3321
        %s3326 = scalar_lea.vmem %s5, 320
        %v3327 = vld [vmem:[%s3326] sm:$0xff]
        %v3328 = vld [vmem:[%s3326 + $0x8] sm:$0xff]
        %v3329 = vld [vmem:[%s3326 + $0x10] sm:$0xff]
        %v3330 = vld [vmem:[%s3326 + $0x18] sm:$0xff]
        %v3331 = vld [vmem:[%s3326 + $0x20] sm:$0xff]
        %v3332 = vld [vmem:[%s3326 + $0x28] sm:$0xff]
        %v3333 = vld [vmem:[%s3326 + $0x30] sm:$0xff]
        %v3334 = vld [vmem:[%s3326 + $0x38] sm:$0xff]
        %v3335 = vld [vmem:[%s3326 + $0x40] sm:$0xff]
        %v3336 = vld [vmem:[%s3326 + $0x48] sm:$0xff]
        %v3337 = vld [vmem:[%s3326 + $0x50] sm:$0xff]
        %v3338 = vld [vmem:[%s3326 + $0x58] sm:$0xff]
        %v3339 = vld [vmem:[%s3326 + $0x60] sm:$0xff]
        %v3340 = vld [vmem:[%s3326 + $0x68] sm:$0xff]
        %v3341 = vld [vmem:[%s3326 + $0x70] sm:$0xff]
        %v3342 = vld [vmem:[%s3326 + $0x78] sm:$0xff]
        %v3343 = vld [vmem:[%s3326 + $0x80] sm:$0xff]
        %v3344 = vld [vmem:[%s3326 + $0x88] sm:$0xff]
        %v3345 = vld [vmem:[%s3326 + $0x90] sm:$0xff]
        %v3346 = vld [vmem:[%s3326 + $0x98] sm:$0xff]
        %v3349 = vrot.slane %v3324, 1
        %v3350 = vrot.slane %v3325, 1
        %v3372 = vunpack.c.l.b16 %v3327
        %v3373 = vunpack.c.h.b16 %v3327
        %v3374 = vunpack.c.l.b16 %v3328
        %v3375 = vunpack.c.h.b16 %v3328
        %v3376 = vunpack.c.l.b16 %v3329
        %v3377 = vunpack.c.h.b16 %v3329
        %v3378 = vunpack.c.l.b16 %v3330
        %v3379 = vunpack.c.h.b16 %v3330
        %v3380 = vunpack.c.l.b16 %v3331
        %v3381 = vunpack.c.h.b16 %v3331
        %v3382 = vunpack.c.l.b16 %v3332
        %v3383 = vunpack.c.h.b16 %v3332
        %v3384 = vunpack.c.l.b16 %v3333
        %v3385 = vunpack.c.h.b16 %v3333
        %v3386 = vunpack.c.l.b16 %v3334
        %v3387 = vunpack.c.h.b16 %v3334
        %v3388 = vunpack.c.l.b16 %v3335
        %v3389 = vunpack.c.h.b16 %v3335
        %v3390 = vunpack.c.l.b16 %v3336
        %v3391 = vunpack.c.h.b16 %v3336
        %v3392 = vunpack.c.l.b16 %v3337
        %v3393 = vunpack.c.h.b16 %v3337
        %v3394 = vunpack.c.l.b16 %v3338
        %v3395 = vunpack.c.h.b16 %v3338
        %v3396 = vunpack.c.l.b16 %v3339
        %v3397 = vunpack.c.h.b16 %v3339
        %v3398 = vunpack.c.l.b16 %v3340
        %v3399 = vunpack.c.h.b16 %v3340
        %v3400 = vunpack.c.l.b16 %v3341
        %v3401 = vunpack.c.h.b16 %v3341
        %v3402 = vunpack.c.l.b16 %v3342
        %v3403 = vunpack.c.h.b16 %v3342
        %v3404 = vunpack.c.l.b16 %v3343
        %v3405 = vunpack.c.h.b16 %v3343
        %v3406 = vunpack.c.l.b16 %v3344
        %v3407 = vunpack.c.h.b16 %v3344
        %v3408 = vunpack.c.l.b16 %v3345
        %v3409 = vunpack.c.h.b16 %v3345
        %v3410 = vunpack.c.l.b16 %v3346
        %v3411 = vunpack.c.h.b16 %v3346
        %v3412 = vpack.c.b16 %v3374, %v3372
        %v3413 = vpack.c.b16 %v3375, %v3373
        %v3414 = vpack.c.b16 %v3378, %v3376
        %v3415 = vpack.c.b16 %v3379, %v3377
        %v3416 = vpack.c.b16 %v3382, %v3380
        %v3417 = vpack.c.b16 %v3383, %v3381
        %v3418 = vpack.c.b16 %v3386, %v3384
        %v3419 = vpack.c.b16 %v3387, %v3385
        %v3420 = vpack.c.b16 %v3390, %v3388
        %v3421 = vpack.c.b16 %v3391, %v3389
        %v3422 = vpack.c.b16 %v3394, %v3392
        %v3423 = vpack.c.b16 %v3395, %v3393
        %v3424 = vpack.c.b16 %v3398, %v3396
        %v3425 = vpack.c.b16 %v3399, %v3397
        %v3426 = vpack.c.b16 %v3402, %v3400
        %v3427 = vpack.c.b16 %v3403, %v3401
        %v3428 = vpack.c.b16 %v3406, %v3404
        %v3429 = vpack.c.b16 %v3407, %v3405
        %v3430 = vpack.c.b16 %v3410, %v3408
        %v3431 = vpack.c.b16 %v3411, %v3409
        %v3453 = vsel %vm1147, %v3350, 0
        %3455 = vmatprep.subr.bf16.mxu0 %v3427
        %3456 = vmatpush1.bf16.msra.mxu0 %v3426
        %3457 = vmatprep.subr.bf16.mxu0 %v3425
        %3458 = vmatpush1.bf16.msra.mxu0 %v3424
        %3459 = vmatprep.subr.bf16.mxu0 %v3423
        %3460 = vmatpush1.bf16.msra.mxu0 %v3422
        %3461 = vmatprep.subr.bf16.mxu0 %v3421
        %3462 = vmatpush1.bf16.msra.mxu0 %v3420
        %3463 = vmatprep.subr.bf16.mxu0 %v3419
        %3464 = vmatpush1.bf16.msra.mxu0 %v3418
        %3465 = vmatprep.subr.bf16.mxu0 %v3417
        %3466 = vmatpush1.bf16.msra.mxu0 %v3416
        %3467 = vmatprep.subr.bf16.mxu0 %v3415
        %3468 = vmatpush1.bf16.msra.mxu0 %v3414
        %3469 = vmatprep.subr.bf16.mxu0 %v3413
        %3470 = vmatpush1.bf16.msra.mxu0 %v3412
        %3471 = vmatprep.subr.bf16.mxu0 0
        %3472 = vmatpush2.bf16.msra.mxu0 0
        %3473 = vmatprep.subr.bf16.mxu0 0
        %3474 = vmatpush2.bf16.msra.mxu0 0
        %3475 = vmatprep.subr.bf16.mxu0 0
        %3476 = vmatpush2.bf16.msra.mxu0 0
        %3477 = vmatprep.subr.bf16.mxu0 0
        %3478 = vmatpush2.bf16.msra.mxu0 0
        %3479 = vmatprep.subr.bf16.mxu0 0
        %3480 = vmatpush2.bf16.msra.mxu0 0
        %3481 = vmatprep.subr.bf16.mxu0 0
        %3482 = vmatpush2.bf16.msra.mxu0 0
        %3483 = vmatprep.subr.bf16.mxu0 %v3431
        %3484 = vmatpush2.bf16.msra.mxu0 %v3430
        %3485 = vmatprep.subr.bf16.mxu0 %v3429
        %3486 = vmatpush2.bf16.msra.mxu0 %v3428
        %3487 = vmatprep.mubr.bf16.mxu0 %v3453
        %3488 = vmatmul.mubr.bf16.gmra.mxu0 %v3349
        %v3489 = vpop.f32.mrf.mxu0
        %v3490 = vadd.f32 0.0, %v3489
        %v3491 = vpop.f32.mrf.mxu0
        %v3492 = vadd.f32 0.0, %v3491
        %v3493 = vpop.f32.mrf.mxu0
        %v3494 = vpop.f32.mrf.mxu0
        %3495 = vdwg.mxu0
        %v3496 = vadd.f32 %v3314, %v3490
        %v3497 = vadd.f32 %v3316, %v3492
        %v3498 = vld [vmem:[%s6] sm:$0x3]
        %v3500 = vlaneseq
        %v3501 = vshrl.u32 %v3500, 7
        %v3502 = vsub.s32 0, %v3501
        %v3503 = vrot.slane %v3498, %v3502
        %v3504 = vlaneseq
        %v3505 = vshrl.u32 %v3504, 7
        %v3506 = vsub.s32 1, %v3505
        %v3507 = vrot.slane %v3498, %v3506
        %v3510 = vadd.f32 %v3496, %v3503
        %v3511 = vadd.f32 %v3497, %v3507
        %v3512 = vmax.f32 %v3510, 0.0
        %v3513 = vmax.f32 %v3511, 0.0
        %vm3514 = vcmp.lt.s32.totalorder %v766, 320
        %vm3515 = vmand %vm767, %vm3514
        %3516 = vst.msk [vmem:[#allocation5] ss:$8 sm:$0x7] %vm3515, 0.0
        %3517 = vst.msk [vmem:[#allocation5] ss:$8 sm:$0x0] %vm3515, 0.0
        %s3518 = scalar_lea.vmem [#allocation5], 25
        %3519 = vst.msk [vmem:[%s3518] ss:$8 sm:$0x7] %vm3515, 0.0
        %3520 = vst.msk [vmem:[%s3518] ss:$8 sm:$0x0] %vm3515, 0.0
        %3521 = vst.msk [vmem:[#allocation5] sm:$0xff] %vm1147, 0.0
        %vm3522 = vcmask 254976
        %3523 = vst.msk [vmem:[#allocation5 + $0x18] sm:$0x3] %vm3522, 0.0
        %vm3524 = vcmask 523520
        %3525 = vst.msk [vmem:[#allocation5 + $0x10] sm:$0xff] %vm3524, 0.0
        %vm3526 = vcmask 517376
        %3527 = vst.msk [vmem:[#allocation5 + $0x28] sm:$0x3] %vm3526, 0.0
        %v3530 = vrot.slane %v3512, 7
        %v3531 = vrot.slane %v3513, 7
        %3532 = vrot.lane.b32.xlu0 %v3530, 32
        %v3533 = vpop.permute.xlu0 %3532
        %3534 = vrot.lane.b32.xlu0 %v3531, 32
        %v3535 = vpop.permute.xlu0 %3534
        %v3536 = vsel %vm1147, %v3533, %v3535
        %vm3540 = vcmask 1047809
        %3541 = vst.msk [vmem:[#allocation5] sm:$0xfe] %vm3540, %v3533
        %3542 = vst [vmem:[#allocation5 + $0x8] sm:$0xfe] %v3536
        %vm3543 = vcmask 261121
        %3544 = vst.msk [vmem:[#allocation5 + $0x10] sm:$0xfe] %vm3543, %v3535
        %vm3545 = vcmask 1040640
        %3546 = vst.msk [vmem:[#allocation5 + $0x18] sm:$0x1] %vm3545, %v3533
        %3547 = vst [vmem:[#allocation5 + $0x20] sm:$0x1] %v3536
        %vm3548 = vcmask 253952
        %3549 = vst.msk [vmem:[#allocation5 + $0x28] sm:$0x1] %vm3548, %v3535
        %v3550 = vld [vmem:[#allocation5] sm:$0xff]
        %v3551 = vld [vmem:[#allocation5 + $0x8] sm:$0xff]
        %v3552 = vld [vmem:[#allocation5 + $0x10] sm:$0xff]
        %v3553 = vpack.c.bf16 %v3550, %v3550
        %v3554 = vpack.c.bf16 %v3551, %v3551
        %v3555 = vpack.c.bf16 %v3552, %v3552
        %v3556 = vld [vmem:[%s7] sm:$0xff]
        %v3557 = vld [vmem:[%s7 + $0x8] sm:$0xff]
        %v3558 = vld [vmem:[%s7 + $0x10] sm:$0xff]
        %v3559 = vld [vmem:[%s7 + $0x18] sm:$0xff]
        %v3560 = vld [vmem:[%s7 + $0x20] sm:$0xff]
        %v3561 = vld [vmem:[%s7 + $0x28] sm:$0xff]
        %v3562 = vld [vmem:[%s7 + $0x30] sm:$0xff]
        %v3563 = vld [vmem:[%s7 + $0x38] sm:$0xff]
        %v3564 = vld [vmem:[%s7 + $0x40] sm:$0xff]
        %v3565 = vld [vmem:[%s7 + $0x48] sm:$0xff]
        %v3566 = vld [vmem:[%s7 + $0x50] sm:$0xff]
        %v3567 = vld [vmem:[%s7 + $0x58] sm:$0xff]
        %v3568 = vld [vmem:[%s7 + $0x60] sm:$0xff]
        %v3569 = vld [vmem:[%s7 + $0x68] sm:$0xff]
        %v3570 = vld [vmem:[%s7 + $0x70] sm:$0xff]
        %v3571 = vld [vmem:[%s7 + $0x78] sm:$0xff]
        %v3572 = vld [vmem:[%s7 + $0x80] sm:$0xff]
        %v3573 = vld [vmem:[%s7 + $0x88] sm:$0xff]
        %v3574 = vld [vmem:[%s7 + $0x90] sm:$0xff]
        %v3575 = vld [vmem:[%s7 + $0x98] sm:$0xff]
        %v3576 = vld [vmem:[%s7 + $0xa0] sm:$0xff]
        %v3577 = vld [vmem:[%s7 + $0xa8] sm:$0xff]
        %v3578 = vld [vmem:[%s7 + $0xb0] sm:$0xff]
        %v3579 = vld [vmem:[%s7 + $0xb8] sm:$0xff]
        %v3580 = vld [vmem:[%s7 + $0xc0] sm:$0xff]
        %v3581 = vld [vmem:[%s7 + $0xc8] sm:$0xff]
        %v3582 = vld [vmem:[%s7 + $0xd0] sm:$0xff]
        %v3583 = vld [vmem:[%s7 + $0xd8] sm:$0xff]
        %v3584 = vld [vmem:[%s7 + $0xe0] sm:$0xff]
        %v3585 = vld [vmem:[%s7 + $0xe8] sm:$0xff]
        %v3586 = vld [vmem:[%s7 + $0xf0] sm:$0xff]
        %v3587 = vld [vmem:[%s7 + $0xf8] sm:$0xff]
        %v3588 = vld [vmem:[%s7 + $0x100] sm:$0xff]
        %v3589 = vld [vmem:[%s7 + $0x108] sm:$0xff]
        %v3590 = vld [vmem:[%s7 + $0x110] sm:$0xff]
        %v3591 = vld [vmem:[%s7 + $0x118] sm:$0xff]
        %v3592 = vld [vmem:[%s7 + $0x120] sm:$0xff]
        %v3593 = vld [vmem:[%s7 + $0x128] sm:$0xff]
        %v3594 = vld [vmem:[%s7 + $0x130] sm:$0xff]
        %v3595 = vld [vmem:[%s7 + $0x138] sm:$0xff]
        %v3596 = vld [vmem:[#allocation5] sm:$0xfe]
        %v3597 = vld [vmem:[#allocation5 + $0x8] sm:$0xfe]
        %v3598 = vld [vmem:[#allocation5 + $0x10] sm:$0xfe]
        %v3599 = vld [vmem:[#allocation5 + $0x18] sm:$0x1]
        %v3600 = vld [vmem:[#allocation5 + $0x20] sm:$0x1]
        %v3601 = vld [vmem:[#allocation5 + $0x28] sm:$0x1]
        %v3602 = vpack.c.bf16 %v3599, %v3596
        %v3603 = vpack.c.bf16 %v3600, %v3597
        %v3604 = vpack.c.bf16 %v3601, %v3598
        %s3605 = scalar_lea.vmem %s7, 320
        %v3606 = vld [vmem:[%s3605] sm:$0xff]
        %v3607 = vld [vmem:[%s3605 + $0x8] sm:$0xff]
        %v3608 = vld [vmem:[%s3605 + $0x10] sm:$0xff]
        %v3609 = vld [vmem:[%s3605 + $0x18] sm:$0xff]
        %v3610 = vld [vmem:[%s3605 + $0x20] sm:$0xff]
        %v3611 = vld [vmem:[%s3605 + $0x28] sm:$0xff]
        %v3612 = vld [vmem:[%s3605 + $0x30] sm:$0xff]
        %v3613 = vld [vmem:[%s3605 + $0x38] sm:$0xff]
        %v3614 = vld [vmem:[%s3605 + $0x40] sm:$0xff]
        %v3615 = vld [vmem:[%s3605 + $0x48] sm:$0xff]
        %v3616 = vld [vmem:[%s3605 + $0x50] sm:$0xff]
        %v3617 = vld [vmem:[%s3605 + $0x58] sm:$0xff]
        %v3618 = vld [vmem:[%s3605 + $0x60] sm:$0xff]
        %v3619 = vld [vmem:[%s3605 + $0x68] sm:$0xff]
        %v3620 = vld [vmem:[%s3605 + $0x70] sm:$0xff]
        %v3621 = vld [vmem:[%s3605 + $0x78] sm:$0xff]
        %v3622 = vld [vmem:[%s3605 + $0x80] sm:$0xff]
        %v3623 = vld [vmem:[%s3605 + $0x88] sm:$0xff]
        %v3624 = vld [vmem:[%s3605 + $0x90] sm:$0xff]
        %v3625 = vld [vmem:[%s3605 + $0x98] sm:$0xff]
        %v3626 = vld [vmem:[%s3605 + $0xa0] sm:$0xff]
        %v3627 = vld [vmem:[%s3605 + $0xa8] sm:$0xff]
        %v3628 = vld [vmem:[%s3605 + $0xb0] sm:$0xff]
        %v3629 = vld [vmem:[%s3605 + $0xb8] sm:$0xff]
        %v3630 = vld [vmem:[%s3605 + $0xc0] sm:$0xff]
        %v3631 = vld [vmem:[%s3605 + $0xc8] sm:$0xff]
        %v3632 = vld [vmem:[%s3605 + $0xd0] sm:$0xff]
        %v3633 = vld [vmem:[%s3605 + $0xd8] sm:$0xff]
        %v3634 = vld [vmem:[%s3605 + $0xe0] sm:$0xff]
        %v3635 = vld [vmem:[%s3605 + $0xe8] sm:$0xff]
        %v3636 = vld [vmem:[%s3605 + $0xf0] sm:$0xff]
        %v3637 = vld [vmem:[%s3605 + $0xf8] sm:$0xff]
        %v3638 = vld [vmem:[%s3605 + $0x100] sm:$0xff]
        %v3639 = vld [vmem:[%s3605 + $0x108] sm:$0xff]
        %v3640 = vld [vmem:[%s3605 + $0x110] sm:$0xff]
        %v3641 = vld [vmem:[%s3605 + $0x118] sm:$0xff]
        %v3642 = vld [vmem:[%s3605 + $0x120] sm:$0xff]
        %v3643 = vld [vmem:[%s3605 + $0x128] sm:$0xff]
        %v3644 = vld [vmem:[%s3605 + $0x130] sm:$0xff]
        %v3645 = vld [vmem:[%s3605 + $0x138] sm:$0xff]
        %v3647 = vshrl.u32 %v3602, 16
        %v3649 = vshll.u32 %v3602, 16
        %v3651 = vrot.slane %v3649, 1
        %v3652 = vor.u32 %v3647, %v3651
        %v3654 = vshrl.u32 %v3603, 16
        %v3656 = vshll.u32 %v3603, 16
        %v3658 = vrot.slane %v3656, 1
        %v3659 = vor.u32 %v3654, %v3658
        %v3661 = vshrl.u32 %v3604, 16
        %v3663 = vshll.u32 %v3604, 16
        %v3665 = vrot.slane %v3663, 1
        %v3666 = vor.u32 %v3661, %v3665
        %v3709 = vunpack.c.l.b16 %v3606
        %v3710 = vunpack.c.h.b16 %v3606
        %v3711 = vunpack.c.l.b16 %v3607
        %v3712 = vunpack.c.h.b16 %v3607
        %v3713 = vunpack.c.l.b16 %v3608
        %v3714 = vunpack.c.h.b16 %v3608
        %v3715 = vunpack.c.l.b16 %v3609
        %v3716 = vunpack.c.h.b16 %v3609
        %v3717 = vunpack.c.l.b16 %v3610
        %v3718 = vunpack.c.h.b16 %v3610
        %v3719 = vunpack.c.l.b16 %v3611
        %v3720 = vunpack.c.h.b16 %v3611
        %v3721 = vunpack.c.l.b16 %v3612
        %v3722 = vunpack.c.h.b16 %v3612
        %v3723 = vunpack.c.l.b16 %v3613
        %v3724 = vunpack.c.h.b16 %v3613
        %v3725 = vunpack.c.l.b16 %v3614
        %v3726 = vunpack.c.h.b16 %v3614
        %v3727 = vunpack.c.l.b16 %v3615
        %v3728 = vunpack.c.h.b16 %v3615
        %v3729 = vunpack.c.l.b16 %v3616
        %v3730 = vunpack.c.h.b16 %v3616
        %v3731 = vunpack.c.l.b16 %v3617
        %v3732 = vunpack.c.h.b16 %v3617
        %v3733 = vunpack.c.l.b16 %v3618
        %v3734 = vunpack.c.h.b16 %v3618
        %v3735 = vunpack.c.l.b16 %v3619
        %v3736 = vunpack.c.h.b16 %v3619
        %v3737 = vunpack.c.l.b16 %v3620
        %v3738 = vunpack.c.h.b16 %v3620
        %v3739 = vunpack.c.l.b16 %v3621
        %v3740 = vunpack.c.h.b16 %v3621
        %v3741 = vunpack.c.l.b16 %v3622
        %v3742 = vunpack.c.h.b16 %v3622
        %v3743 = vunpack.c.l.b16 %v3623
        %v3744 = vunpack.c.h.b16 %v3623
        %v3745 = vunpack.c.l.b16 %v3624
        %v3746 = vunpack.c.h.b16 %v3624
        %v3747 = vunpack.c.l.b16 %v3625
        %v3748 = vunpack.c.h.b16 %v3625
        %v3749 = vunpack.c.l.b16 %v3626
        %v3750 = vunpack.c.h.b16 %v3626
        %v3751 = vunpack.c.l.b16 %v3627
        %v3752 = vunpack.c.h.b16 %v3627
        %v3753 = vunpack.c.l.b16 %v3628
        %v3754 = vunpack.c.h.b16 %v3628
        %v3755 = vunpack.c.l.b16 %v3629
        %v3756 = vunpack.c.h.b16 %v3629
        %v3757 = vunpack.c.l.b16 %v3630
        %v3758 = vunpack.c.h.b16 %v3630
        %v3759 = vunpack.c.l.b16 %v3631
        %v3760 = vunpack.c.h.b16 %v3631
        %v3761 = vunpack.c.l.b16 %v3632
        %v3762 = vunpack.c.h.b16 %v3632
        %v3763 = vunpack.c.l.b16 %v3633
        %v3764 = vunpack.c.h.b16 %v3633
        %v3765 = vunpack.c.l.b16 %v3634
        %v3766 = vunpack.c.h.b16 %v3634
        %v3767 = vunpack.c.l.b16 %v3635
        %v3768 = vunpack.c.h.b16 %v3635
        %v3769 = vunpack.c.l.b16 %v3636
        %v3770 = vunpack.c.h.b16 %v3636
        %v3771 = vunpack.c.l.b16 %v3637
        %v3772 = vunpack.c.h.b16 %v3637
        %v3773 = vunpack.c.l.b16 %v3638
        %v3774 = vunpack.c.h.b16 %v3638
        %v3775 = vunpack.c.l.b16 %v3639
        %v3776 = vunpack.c.h.b16 %v3639
        %v3777 = vunpack.c.l.b16 %v3640
        %v3778 = vunpack.c.h.b16 %v3640
        %v3779 = vunpack.c.l.b16 %v3641
        %v3780 = vunpack.c.h.b16 %v3641
        %v3781 = vunpack.c.l.b16 %v3642
        %v3782 = vunpack.c.h.b16 %v3642
        %v3783 = vunpack.c.l.b16 %v3643
        %v3784 = vunpack.c.h.b16 %v3643
        %v3785 = vunpack.c.l.b16 %v3644
        %v3786 = vunpack.c.h.b16 %v3644
        %v3787 = vunpack.c.l.b16 %v3645
        %v3788 = vunpack.c.h.b16 %v3645
        %v3789 = vpack.c.b16 %v3711, %v3709
        %v3790 = vpack.c.b16 %v3712, %v3710
        %v3791 = vpack.c.b16 %v3715, %v3713
        %v3792 = vpack.c.b16 %v3716, %v3714
        %v3793 = vpack.c.b16 %v3719, %v3717
        %v3794 = vpack.c.b16 %v3720, %v3718
        %v3795 = vpack.c.b16 %v3723, %v3721
        %v3796 = vpack.c.b16 %v3724, %v3722
        %v3797 = vpack.c.b16 %v3727, %v3725
        %v3798 = vpack.c.b16 %v3728, %v3726
        %v3799 = vpack.c.b16 %v3731, %v3729
        %v3800 = vpack.c.b16 %v3732, %v3730
        %v3801 = vpack.c.b16 %v3735, %v3733
        %v3802 = vpack.c.b16 %v3736, %v3734
        %v3803 = vpack.c.b16 %v3739, %v3737
        %v3804 = vpack.c.b16 %v3740, %v3738
        %v3805 = vpack.c.b16 %v3743, %v3741
        %v3806 = vpack.c.b16 %v3744, %v3742
        %v3807 = vpack.c.b16 %v3747, %v3745
        %v3808 = vpack.c.b16 %v3748, %v3746
        %v3809 = vpack.c.b16 %v3751, %v3749
        %v3810 = vpack.c.b16 %v3752, %v3750
        %v3811 = vpack.c.b16 %v3755, %v3753
        %v3812 = vpack.c.b16 %v3756, %v3754
        %v3813 = vpack.c.b16 %v3759, %v3757
        %v3814 = vpack.c.b16 %v3760, %v3758
        %v3815 = vpack.c.b16 %v3763, %v3761
        %v3816 = vpack.c.b16 %v3764, %v3762
        %v3817 = vpack.c.b16 %v3767, %v3765
        %v3818 = vpack.c.b16 %v3768, %v3766
        %v3819 = vpack.c.b16 %v3771, %v3769
        %v3820 = vpack.c.b16 %v3772, %v3770
        %v3821 = vpack.c.b16 %v3775, %v3773
        %v3822 = vpack.c.b16 %v3776, %v3774
        %v3823 = vpack.c.b16 %v3779, %v3777
        %v3824 = vpack.c.b16 %v3780, %v3778
        %v3825 = vpack.c.b16 %v3783, %v3781
        %v3826 = vpack.c.b16 %v3784, %v3782
        %v3827 = vpack.c.b16 %v3787, %v3785
        %v3828 = vpack.c.b16 %v3788, %v3786
        %v3870 = vsel %vm2949, %v3666, 0
        %3872 = vmatprep.subr.bf16.mxu0 %v3804
        %3873 = vmatpush1.bf16.msra.mxu0 %v3803
        %3874 = vmatprep.subr.bf16.mxu0 %v3802
        %3875 = vmatpush1.bf16.msra.mxu0 %v3801
        %3876 = vmatprep.subr.bf16.mxu0 %v3800
        %3877 = vmatpush1.bf16.msra.mxu0 %v3799
        %3878 = vmatprep.subr.bf16.mxu0 %v3798
        %3879 = vmatpush1.bf16.msra.mxu0 %v3797
        %3880 = vmatprep.subr.bf16.mxu0 %v3796
        %3881 = vmatpush1.bf16.msra.mxu0 %v3795
        %3882 = vmatprep.subr.bf16.mxu0 %v3794
        %3883 = vmatpush1.bf16.msra.mxu0 %v3793
        %3884 = vmatprep.subr.bf16.mxu0 %v3792
        %3885 = vmatpush1.bf16.msra.mxu0 %v3791
        %3886 = vmatprep.subr.bf16.mxu0 %v3790
        %3887 = vmatpush1.bf16.msra.mxu0 %v3789
        %3888 = vmatprep.subr.bf16.mxu0 %v3820
        %3889 = vmatpush2.bf16.msra.mxu0 %v3819
        %3890 = vmatprep.subr.bf16.mxu0 %v3818
        %3891 = vmatpush2.bf16.msra.mxu0 %v3817
        %3892 = vmatprep.subr.bf16.mxu0 %v3816
        %3893 = vmatpush2.bf16.msra.mxu0 %v3815
        %3894 = vmatprep.subr.bf16.mxu0 %v3814
        %3895 = vmatpush2.bf16.msra.mxu0 %v3813
        %3896 = vmatprep.subr.bf16.mxu0 %v3812
        %3897 = vmatpush2.bf16.msra.mxu0 %v3811
        %3898 = vmatprep.subr.bf16.mxu0 %v3810
        %3899 = vmatpush2.bf16.msra.mxu0 %v3809
        %3900 = vmatprep.subr.bf16.mxu0 %v3808
        %3901 = vmatpush2.bf16.msra.mxu0 %v3807
        %3902 = vmatprep.subr.bf16.mxu0 %v3806
        %3903 = vmatpush2.bf16.msra.mxu0 %v3805
        %3904 = vmatprep.mubr.bf16.mxu0 %v3659
        %3905 = vmatmul.mubr.bf16.gmra.mxu0 %v3652
        %v3906 = vpop.f32.mrf.mxu0
        %v3907 = vadd.f32 0.0, %v3906
        %v3908 = vpop.f32.mrf.mxu0
        %v3909 = vadd.f32 0.0, %v3908
        %v3910 = vpop.f32.mrf.mxu0
        %v3911 = vpop.f32.mrf.mxu0
        %3912 = vdwg.mxu0
        %3913 = vmatprep.subr.bf16.mxu0 0
        %3914 = vmatpush1.bf16.msra.mxu0 0
        %3915 = vmatprep.subr.bf16.mxu0 0
        %3916 = vmatpush1.bf16.msra.mxu0 0
        %3917 = vmatprep.subr.bf16.mxu0 0
        %3918 = vmatpush1.bf16.msra.mxu0 0
        %3919 = vmatprep.subr.bf16.mxu0 0
        %3920 = vmatpush1.bf16.msra.mxu0 0
        %3921 = vmatprep.subr.bf16.mxu0 %v3828
        %3922 = vmatpush1.bf16.msra.mxu0 %v3827
        %3923 = vmatprep.subr.bf16.mxu0 %v3826
        %3924 = vmatpush1.bf16.msra.mxu0 %v3825
        %3925 = vmatprep.subr.bf16.mxu0 %v3824
        %3926 = vmatpush1.bf16.msra.mxu0 %v3823
        %3927 = vmatprep.subr.bf16.mxu0 %v3822
        %3928 = vmatpush1.bf16.msra.mxu0 %v3821
        %3929 = vmatprep.subr.bf16.mxu0 0
        %3930 = vmatpush2.bf16.msra.mxu0 0
        %3931 = vmatprep.subr.bf16.mxu0 0
        %3932 = vmatpush2.bf16.msra.mxu0 0
        %3933 = vmatprep.subr.bf16.mxu0 0
        %3934 = vmatpush2.bf16.msra.mxu0 0
        %3935 = vmatprep.subr.bf16.mxu0 0
        %3936 = vmatpush2.bf16.msra.mxu0 0
        %3937 = vmatprep.subr.bf16.mxu0 0
        %3938 = vmatpush2.bf16.msra.mxu0 0
        %3939 = vmatprep.subr.bf16.mxu0 0
        %3940 = vmatpush2.bf16.msra.mxu0 0
        %3941 = vmatprep.subr.bf16.mxu0 0
        %3942 = vmatpush2.bf16.msra.mxu0 0
        %3943 = vmatprep.subr.bf16.mxu0 0
        %3944 = vmatpush2.bf16.msra.mxu0 0
        %3945 = vmatprep.mubr.bf16.mxu0 0
        %3946 = vmatmul.mubr.bf16.gmra.mxu0 %v3870
        %v3947 = vpop.f32.mrf.mxu0
        %v3948 = vadd.f32 %v3907, %v3947
        %v3949 = vpop.f32.mrf.mxu0
        %v3950 = vadd.f32 %v3909, %v3949
        %v3951 = vpop.f32.mrf.mxu0
        %v3952 = vpop.f32.mrf.mxu0
        %3953 = vdwg.mxu0
        %v3994 = vunpack.c.l.b16 %v3556
        %v3995 = vunpack.c.h.b16 %v3556
        %v3996 = vunpack.c.l.b16 %v3557
        %v3997 = vunpack.c.h.b16 %v3557
        %v3998 = vunpack.c.l.b16 %v3558
        %v3999 = vunpack.c.h.b16 %v3558
        %v4000 = vunpack.c.l.b16 %v3559
        %v4001 = vunpack.c.h.b16 %v3559
        %v4002 = vunpack.c.l.b16 %v3560
        %v4003 = vunpack.c.h.b16 %v3560
        %v4004 = vunpack.c.l.b16 %v3561
        %v4005 = vunpack.c.h.b16 %v3561
        %v4006 = vunpack.c.l.b16 %v3562
        %v4007 = vunpack.c.h.b16 %v3562
        %v4008 = vunpack.c.l.b16 %v3563
        %v4009 = vunpack.c.h.b16 %v3563
        %v4010 = vunpack.c.l.b16 %v3564
        %v4011 = vunpack.c.h.b16 %v3564
        %v4012 = vunpack.c.l.b16 %v3565
        %v4013 = vunpack.c.h.b16 %v3565
        %v4014 = vunpack.c.l.b16 %v3566
        %v4015 = vunpack.c.h.b16 %v3566
        %v4016 = vunpack.c.l.b16 %v3567
        %v4017 = vunpack.c.h.b16 %v3567
        %v4018 = vunpack.c.l.b16 %v3568
        %v4019 = vunpack.c.h.b16 %v3568
        %v4020 = vunpack.c.l.b16 %v3569
        %v4021 = vunpack.c.h.b16 %v3569
        %v4022 = vunpack.c.l.b16 %v3570
        %v4023 = vunpack.c.h.b16 %v3570
        %v4024 = vunpack.c.l.b16 %v3571
        %v4025 = vunpack.c.h.b16 %v3571
        %v4026 = vunpack.c.l.b16 %v3572
        %v4027 = vunpack.c.h.b16 %v3572
        %v4028 = vunpack.c.l.b16 %v3573
        %v4029 = vunpack.c.h.b16 %v3573
        %v4030 = vunpack.c.l.b16 %v3574
        %v4031 = vunpack.c.h.b16 %v3574
        %v4032 = vunpack.c.l.b16 %v3575
        %v4033 = vunpack.c.h.b16 %v3575
        %v4034 = vunpack.c.l.b16 %v3576
        %v4035 = vunpack.c.h.b16 %v3576
        %v4036 = vunpack.c.l.b16 %v3577
        %v4037 = vunpack.c.h.b16 %v3577
        %v4038 = vunpack.c.l.b16 %v3578
        %v4039 = vunpack.c.h.b16 %v3578
        %v4040 = vunpack.c.l.b16 %v3579
        %v4041 = vunpack.c.h.b16 %v3579
        %v4042 = vunpack.c.l.b16 %v3580
        %v4043 = vunpack.c.h.b16 %v3580
        %v4044 = vunpack.c.l.b16 %v3581
        %v4045 = vunpack.c.h.b16 %v3581
        %v4046 = vunpack.c.l.b16 %v3582
        %v4047 = vunpack.c.h.b16 %v3582
        %v4048 = vunpack.c.l.b16 %v3583
        %v4049 = vunpack.c.h.b16 %v3583
        %v4050 = vunpack.c.l.b16 %v3584
        %v4051 = vunpack.c.h.b16 %v3584
        %v4052 = vunpack.c.l.b16 %v3585
        %v4053 = vunpack.c.h.b16 %v3585
        %v4054 = vunpack.c.l.b16 %v3586
        %v4055 = vunpack.c.h.b16 %v3586
        %v4056 = vunpack.c.l.b16 %v3587
        %v4057 = vunpack.c.h.b16 %v3587
        %v4058 = vunpack.c.l.b16 %v3588
        %v4059 = vunpack.c.h.b16 %v3588
        %v4060 = vunpack.c.l.b16 %v3589
        %v4061 = vunpack.c.h.b16 %v3589
        %v4062 = vunpack.c.l.b16 %v3590
        %v4063 = vunpack.c.h.b16 %v3590
        %v4064 = vunpack.c.l.b16 %v3591
        %v4065 = vunpack.c.h.b16 %v3591
        %v4066 = vunpack.c.l.b16 %v3592
        %v4067 = vunpack.c.h.b16 %v3592
        %v4068 = vunpack.c.l.b16 %v3593
        %v4069 = vunpack.c.h.b16 %v3593
        %v4070 = vunpack.c.l.b16 %v3594
        %v4071 = vunpack.c.h.b16 %v3594
        %v4072 = vunpack.c.l.b16 %v3595
        %v4073 = vunpack.c.h.b16 %v3595
        %v4074 = vpack.c.b16 %v3996, %v3994
        %v4075 = vpack.c.b16 %v3997, %v3995
        %v4076 = vpack.c.b16 %v4000, %v3998
        %v4077 = vpack.c.b16 %v4001, %v3999
        %v4078 = vpack.c.b16 %v4004, %v4002
        %v4079 = vpack.c.b16 %v4005, %v4003
        %v4080 = vpack.c.b16 %v4008, %v4006
        %v4081 = vpack.c.b16 %v4009, %v4007
        %v4082 = vpack.c.b16 %v4012, %v4010
        %v4083 = vpack.c.b16 %v4013, %v4011
        %v4084 = vpack.c.b16 %v4016, %v4014
        %v4085 = vpack.c.b16 %v4017, %v4015
        %v4086 = vpack.c.b16 %v4020, %v4018
        %v4087 = vpack.c.b16 %v4021, %v4019
        %v4088 = vpack.c.b16 %v4024, %v4022
        %v4089 = vpack.c.b16 %v4025, %v4023
        %v4090 = vpack.c.b16 %v4028, %v4026
        %v4091 = vpack.c.b16 %v4029, %v4027
        %v4092 = vpack.c.b16 %v4032, %v4030
        %v4093 = vpack.c.b16 %v4033, %v4031
        %v4094 = vpack.c.b16 %v4036, %v4034
        %v4095 = vpack.c.b16 %v4037, %v4035
        %v4096 = vpack.c.b16 %v4040, %v4038
        %v4097 = vpack.c.b16 %v4041, %v4039
        %v4098 = vpack.c.b16 %v4044, %v4042
        %v4099 = vpack.c.b16 %v4045, %v4043
        %v4100 = vpack.c.b16 %v4048, %v4046
        %v4101 = vpack.c.b16 %v4049, %v4047
        %v4102 = vpack.c.b16 %v4052, %v4050
        %v4103 = vpack.c.b16 %v4053, %v4051
        %v4104 = vpack.c.b16 %v4056, %v4054
        %v4105 = vpack.c.b16 %v4057, %v4055
        %v4106 = vpack.c.b16 %v4060, %v4058
        %v4107 = vpack.c.b16 %v4061, %v4059
        %v4108 = vpack.c.b16 %v4064, %v4062
        %v4109 = vpack.c.b16 %v4065, %v4063
        %v4110 = vpack.c.b16 %v4068, %v4066
        %v4111 = vpack.c.b16 %v4069, %v4067
        %v4112 = vpack.c.b16 %v4072, %v4070
        %v4113 = vpack.c.b16 %v4073, %v4071
        %v4155 = vsel %vm2949, %v3555, 0
        %4157 = vmatprep.subr.bf16.mxu0 %v4089
        %4158 = vmatpush1.bf16.msra.mxu0 %v4088
        %4159 = vmatprep.subr.bf16.mxu0 %v4087
        %4160 = vmatpush1.bf16.msra.mxu0 %v4086
        %4161 = vmatprep.subr.bf16.mxu0 %v4085
        %4162 = vmatpush1.bf16.msra.mxu0 %v4084
        %4163 = vmatprep.subr.bf16.mxu0 %v4083
        %4164 = vmatpush1.bf16.msra.mxu0 %v4082
        %4165 = vmatprep.subr.bf16.mxu0 %v4081
        %4166 = vmatpush1.bf16.msra.mxu0 %v4080
        %4167 = vmatprep.subr.bf16.mxu0 %v4079
        %4168 = vmatpush1.bf16.msra.mxu0 %v4078
        %4169 = vmatprep.subr.bf16.mxu0 %v4077
        %4170 = vmatpush1.bf16.msra.mxu0 %v4076
        %4171 = vmatprep.subr.bf16.mxu0 %v4075
        %4172 = vmatpush1.bf16.msra.mxu0 %v4074
        %4173 = vmatprep.subr.bf16.mxu0 %v4105
        %4174 = vmatpush2.bf16.msra.mxu0 %v4104
        %4175 = vmatprep.subr.bf16.mxu0 %v4103
        %4176 = vmatpush2.bf16.msra.mxu0 %v4102
        %4177 = vmatprep.subr.bf16.mxu0 %v4101
        %4178 = vmatpush2.bf16.msra.mxu0 %v4100
        %4179 = vmatprep.subr.bf16.mxu0 %v4099
        %4180 = vmatpush2.bf16.msra.mxu0 %v4098
        %4181 = vmatprep.subr.bf16.mxu0 %v4097
        %4182 = vmatpush2.bf16.msra.mxu0 %v4096
        %4183 = vmatprep.subr.bf16.mxu0 %v4095
        %4184 = vmatpush2.bf16.msra.mxu0 %v4094
        %4185 = vmatprep.subr.bf16.mxu0 %v4093
        %4186 = vmatpush2.bf16.msra.mxu0 %v4092
        %4187 = vmatprep.subr.bf16.mxu0 %v4091
        %4188 = vmatpush2.bf16.msra.mxu0 %v4090
        %4189 = vmatprep.mubr.bf16.mxu0 %v3554
        %4190 = vmatmul.mubr.bf16.gmra.mxu0 %v3553
        %v4191 = vpop.f32.mrf.mxu0
        %v4192 = vadd.f32 %v3948, %v4191
        %v4193 = vpop.f32.mrf.mxu0
        %v4194 = vadd.f32 %v3950, %v4193
        %v4195 = vpop.f32.mrf.mxu0
        %v4196 = vpop.f32.mrf.mxu0
        %4197 = vdwg.mxu0
        %4198 = vmatprep.subr.bf16.mxu0 0
        %4199 = vmatpush1.bf16.msra.mxu0 0
        %4200 = vmatprep.subr.bf16.mxu0 0
        %4201 = vmatpush1.bf16.msra.mxu0 0
        %4202 = vmatprep.subr.bf16.mxu0 0
        %4203 = vmatpush1.bf16.msra.mxu0 0
        %4204 = vmatprep.subr.bf16.mxu0 0
        %4205 = vmatpush1.bf16.msra.mxu0 0
        %4206 = vmatprep.subr.bf16.mxu0 %v4113
        %4207 = vmatpush1.bf16.msra.mxu0 %v4112
        %4208 = vmatprep.subr.bf16.mxu0 %v4111
        %4209 = vmatpush1.bf16.msra.mxu0 %v4110
        %4210 = vmatprep.subr.bf16.mxu0 %v4109
        %4211 = vmatpush1.bf16.msra.mxu0 %v4108
        %4212 = vmatprep.subr.bf16.mxu0 %v4107
        %4213 = vmatpush1.bf16.msra.mxu0 %v4106
        %4214 = vmatprep.subr.bf16.mxu0 0
        %4215 = vmatpush2.bf16.msra.mxu0 0
        %4216 = vmatprep.subr.bf16.mxu0 0
        %4217 = vmatpush2.bf16.msra.mxu0 0
        %4218 = vmatprep.subr.bf16.mxu0 0
        %4219 = vmatpush2.bf16.msra.mxu0 0
        %4220 = vmatprep.subr.bf16.mxu0 0
        %4221 = vmatpush2.bf16.msra.mxu0 0
        %4222 = vmatprep.subr.bf16.mxu0 0
        %4223 = vmatpush2.bf16.msra.mxu0 0
        %4224 = vmatprep.subr.bf16.mxu0 0
        %4225 = vmatpush2.bf16.msra.mxu0 0
        %4226 = vmatprep.subr.bf16.mxu0 0
        %4227 = vmatpush2.bf16.msra.mxu0 0
        %4228 = vmatprep.subr.bf16.mxu0 0
        %4229 = vmatpush2.bf16.msra.mxu0 0
        %4230 = vmatprep.mubr.bf16.mxu0 0
        %4231 = vmatmul.mubr.bf16.gmra.mxu0 %v4155
        %v4232 = vpop.f32.mrf.mxu0
        %v4233 = vadd.f32 %v4192, %v4232
        %v4234 = vpop.f32.mrf.mxu0
        %v4235 = vadd.f32 %v4194, %v4234
        %v4236 = vpop.f32.mrf.mxu0
        %v4237 = vpop.f32.mrf.mxu0
        %4238 = vdwg.mxu0
        %v4239 = vld [vmem:[#allocation5] sm:$0xfc]
        %v4240 = vld [vmem:[#allocation5 + $0x8] sm:$0xfc]
        %v4241 = vld [vmem:[#allocation5 + $0x10] sm:$0xfc]
        %v4242 = vld [vmem:[#allocation5 + $0x18] sm:$0x3]
        %v4243 = vld [vmem:[#allocation5 + $0x20] sm:$0x3]
        %v4244 = vld [vmem:[#allocation5 + $0x28] sm:$0x3]
        %v4245 = vpack.c.bf16 %v4242, %v4239
        %v4246 = vpack.c.bf16 %v4243, %v4240
        %v4247 = vpack.c.bf16 %v4244, %v4241
        %s4248 = scalar_lea.vmem %s7, 640
        %v4249 = vld [vmem:[%s4248] sm:$0xff]
        %v4250 = vld [vmem:[%s4248 + $0x8] sm:$0xff]
        %v4251 = vld [vmem:[%s4248 + $0x10] sm:$0xff]
        %v4252 = vld [vmem:[%s4248 + $0x18] sm:$0xff]
        %v4253 = vld [vmem:[%s4248 + $0x20] sm:$0xff]
        %v4254 = vld [vmem:[%s4248 + $0x28] sm:$0xff]
        %v4255 = vld [vmem:[%s4248 + $0x30] sm:$0xff]
        %v4256 = vld [vmem:[%s4248 + $0x38] sm:$0xff]
        %v4257 = vld [vmem:[%s4248 + $0x40] sm:$0xff]
        %v4258 = vld [vmem:[%s4248 + $0x48] sm:$0xff]
        %v4259 = vld [vmem:[%s4248 + $0x50] sm:$0xff]
        %v4260 = vld [vmem:[%s4248 + $0x58] sm:$0xff]
        %v4261 = vld [vmem:[%s4248 + $0x60] sm:$0xff]
        %v4262 = vld [vmem:[%s4248 + $0x68] sm:$0xff]
        %v4263 = vld [vmem:[%s4248 + $0x70] sm:$0xff]
        %v4264 = vld [vmem:[%s4248 + $0x78] sm:$0xff]
        %v4265 = vld [vmem:[%s4248 + $0x80] sm:$0xff]
        %v4266 = vld [vmem:[%s4248 + $0x88] sm:$0xff]
        %v4267 = vld [vmem:[%s4248 + $0x90] sm:$0xff]
        %v4268 = vld [vmem:[%s4248 + $0x98] sm:$0xff]
        %v4269 = vld [vmem:[%s4248 + $0xa0] sm:$0xff]
        %v4270 = vld [vmem:[%s4248 + $0xa8] sm:$0xff]
        %v4271 = vld [vmem:[%s4248 + $0xb0] sm:$0xff]
        %v4272 = vld [vmem:[%s4248 + $0xb8] sm:$0xff]
        %v4273 = vld [vmem:[%s4248 + $0xc0] sm:$0xff]
        %v4274 = vld [vmem:[%s4248 + $0xc8] sm:$0xff]
        %v4275 = vld [vmem:[%s4248 + $0xd0] sm:$0xff]
        %v4276 = vld [vmem:[%s4248 + $0xd8] sm:$0xff]
        %v4277 = vld [vmem:[%s4248 + $0xe0] sm:$0xff]
        %v4278 = vld [vmem:[%s4248 + $0xe8] sm:$0xff]
        %v4279 = vld [vmem:[%s4248 + $0xf0] sm:$0xff]
        %v4280 = vld [vmem:[%s4248 + $0xf8] sm:$0xff]
        %v4281 = vld [vmem:[%s4248 + $0x100] sm:$0xff]
        %v4282 = vld [vmem:[%s4248 + $0x108] sm:$0xff]
        %v4283 = vld [vmem:[%s4248 + $0x110] sm:$0xff]
        %v4284 = vld [vmem:[%s4248 + $0x118] sm:$0xff]
        %v4285 = vld [vmem:[%s4248 + $0x120] sm:$0xff]
        %v4286 = vld [vmem:[%s4248 + $0x128] sm:$0xff]
        %v4287 = vld [vmem:[%s4248 + $0x130] sm:$0xff]
        %v4288 = vld [vmem:[%s4248 + $0x138] sm:$0xff]
        %v4292 = vrot.slane %v4245, 1
        %v4293 = vrot.slane %v4246, 1
        %v4294 = vrot.slane %v4247, 1
        %v4337 = vunpack.c.l.b16 %v4249
        %v4338 = vunpack.c.h.b16 %v4249
        %v4339 = vunpack.c.l.b16 %v4250
        %v4340 = vunpack.c.h.b16 %v4250
        %v4341 = vunpack.c.l.b16 %v4251
        %v4342 = vunpack.c.h.b16 %v4251
        %v4343 = vunpack.c.l.b16 %v4252
        %v4344 = vunpack.c.h.b16 %v4252
        %v4345 = vunpack.c.l.b16 %v4253
        %v4346 = vunpack.c.h.b16 %v4253
        %v4347 = vunpack.c.l.b16 %v4254
        %v4348 = vunpack.c.h.b16 %v4254
        %v4349 = vunpack.c.l.b16 %v4255
        %v4350 = vunpack.c.h.b16 %v4255
        %v4351 = vunpack.c.l.b16 %v4256
        %v4352 = vunpack.c.h.b16 %v4256
        %v4353 = vunpack.c.l.b16 %v4257
        %v4354 = vunpack.c.h.b16 %v4257
        %v4355 = vunpack.c.l.b16 %v4258
        %v4356 = vunpack.c.h.b16 %v4258
        %v4357 = vunpack.c.l.b16 %v4259
        %v4358 = vunpack.c.h.b16 %v4259
        %v4359 = vunpack.c.l.b16 %v4260
        %v4360 = vunpack.c.h.b16 %v4260
        %v4361 = vunpack.c.l.b16 %v4261
        %v4362 = vunpack.c.h.b16 %v4261
        %v4363 = vunpack.c.l.b16 %v4262
        %v4364 = vunpack.c.h.b16 %v4262
        %v4365 = vunpack.c.l.b16 %v4263
        %v4366 = vunpack.c.h.b16 %v4263
        %v4367 = vunpack.c.l.b16 %v4264
        %v4368 = vunpack.c.h.b16 %v4264
        %v4369 = vunpack.c.l.b16 %v4265
        %v4370 = vunpack.c.h.b16 %v4265
        %v4371 = vunpack.c.l.b16 %v4266
        %v4372 = vunpack.c.h.b16 %v4266
        %v4373 = vunpack.c.l.b16 %v4267
        %v4374 = vunpack.c.h.b16 %v4267
        %v4375 = vunpack.c.l.b16 %v4268
        %v4376 = vunpack.c.h.b16 %v4268
        %v4377 = vunpack.c.l.b16 %v4269
        %v4378 = vunpack.c.h.b16 %v4269
        %v4379 = vunpack.c.l.b16 %v4270
        %v4380 = vunpack.c.h.b16 %v4270
        %v4381 = vunpack.c.l.b16 %v4271
        %v4382 = vunpack.c.h.b16 %v4271
        %v4383 = vunpack.c.l.b16 %v4272
        %v4384 = vunpack.c.h.b16 %v4272
        %v4385 = vunpack.c.l.b16 %v4273
        %v4386 = vunpack.c.h.b16 %v4273
        %v4387 = vunpack.c.l.b16 %v4274
        %v4388 = vunpack.c.h.b16 %v4274
        %v4389 = vunpack.c.l.b16 %v4275
        %v4390 = vunpack.c.h.b16 %v4275
        %v4391 = vunpack.c.l.b16 %v4276
        %v4392 = vunpack.c.h.b16 %v4276
        %v4393 = vunpack.c.l.b16 %v4277
        %v4394 = vunpack.c.h.b16 %v4277
        %v4395 = vunpack.c.l.b16 %v4278
        %v4396 = vunpack.c.h.b16 %v4278
        %v4397 = vunpack.c.l.b16 %v4279
        %v4398 = vunpack.c.h.b16 %v4279
        %v4399 = vunpack.c.l.b16 %v4280
        %v4400 = vunpack.c.h.b16 %v4280
        %v4401 = vunpack.c.l.b16 %v4281
        %v4402 = vunpack.c.h.b16 %v4281
        %v4403 = vunpack.c.l.b16 %v4282
        %v4404 = vunpack.c.h.b16 %v4282
        %v4405 = vunpack.c.l.b16 %v4283
        %v4406 = vunpack.c.h.b16 %v4283
        %v4407 = vunpack.c.l.b16 %v4284
        %v4408 = vunpack.c.h.b16 %v4284
        %v4409 = vunpack.c.l.b16 %v4285
        %v4410 = vunpack.c.h.b16 %v4285
        %v4411 = vunpack.c.l.b16 %v4286
        %v4412 = vunpack.c.h.b16 %v4286
        %v4413 = vunpack.c.l.b16 %v4287
        %v4414 = vunpack.c.h.b16 %v4287
        %v4415 = vunpack.c.l.b16 %v4288
        %v4416 = vunpack.c.h.b16 %v4288
        %v4417 = vpack.c.b16 %v4339, %v4337
        %v4418 = vpack.c.b16 %v4340, %v4338
        %v4419 = vpack.c.b16 %v4343, %v4341
        %v4420 = vpack.c.b16 %v4344, %v4342
        %v4421 = vpack.c.b16 %v4347, %v4345
        %v4422 = vpack.c.b16 %v4348, %v4346
        %v4423 = vpack.c.b16 %v4351, %v4349
        %v4424 = vpack.c.b16 %v4352, %v4350
        %v4425 = vpack.c.b16 %v4355, %v4353
        %v4426 = vpack.c.b16 %v4356, %v4354
        %v4427 = vpack.c.b16 %v4359, %v4357
        %v4428 = vpack.c.b16 %v4360, %v4358
        %v4429 = vpack.c.b16 %v4363, %v4361
        %v4430 = vpack.c.b16 %v4364, %v4362
        %v4431 = vpack.c.b16 %v4367, %v4365
        %v4432 = vpack.c.b16 %v4368, %v4366
        %v4433 = vpack.c.b16 %v4371, %v4369
        %v4434 = vpack.c.b16 %v4372, %v4370
        %v4435 = vpack.c.b16 %v4375, %v4373
        %v4436 = vpack.c.b16 %v4376, %v4374
        %v4437 = vpack.c.b16 %v4379, %v4377
        %v4438 = vpack.c.b16 %v4380, %v4378
        %v4439 = vpack.c.b16 %v4383, %v4381
        %v4440 = vpack.c.b16 %v4384, %v4382
        %v4441 = vpack.c.b16 %v4387, %v4385
        %v4442 = vpack.c.b16 %v4388, %v4386
        %v4443 = vpack.c.b16 %v4391, %v4389
        %v4444 = vpack.c.b16 %v4392, %v4390
        %v4445 = vpack.c.b16 %v4395, %v4393
        %v4446 = vpack.c.b16 %v4396, %v4394
        %v4447 = vpack.c.b16 %v4399, %v4397
        %v4448 = vpack.c.b16 %v4400, %v4398
        %v4449 = vpack.c.b16 %v4403, %v4401
        %v4450 = vpack.c.b16 %v4404, %v4402
        %v4451 = vpack.c.b16 %v4407, %v4405
        %v4452 = vpack.c.b16 %v4408, %v4406
        %v4453 = vpack.c.b16 %v4411, %v4409
        %v4454 = vpack.c.b16 %v4412, %v4410
        %v4455 = vpack.c.b16 %v4415, %v4413
        %v4456 = vpack.c.b16 %v4416, %v4414
        %v4498 = vsel %vm2949, %v4294, 0
        %4500 = vmatprep.subr.bf16.mxu0 %v4432
        %4501 = vmatpush1.bf16.msra.mxu0 %v4431
        %4502 = vmatprep.subr.bf16.mxu0 %v4430
        %4503 = vmatpush1.bf16.msra.mxu0 %v4429
        %4504 = vmatprep.subr.bf16.mxu0 %v4428
        %4505 = vmatpush1.bf16.msra.mxu0 %v4427
        %4506 = vmatprep.subr.bf16.mxu0 %v4426
        %4507 = vmatpush1.bf16.msra.mxu0 %v4425
        %4508 = vmatprep.subr.bf16.mxu0 %v4424
        %4509 = vmatpush1.bf16.msra.mxu0 %v4423
        %4510 = vmatprep.subr.bf16.mxu0 %v4422
        %4511 = vmatpush1.bf16.msra.mxu0 %v4421
        %4512 = vmatprep.subr.bf16.mxu0 %v4420
        %4513 = vmatpush1.bf16.msra.mxu0 %v4419
        %4514 = vmatprep.subr.bf16.mxu0 %v4418
        %4515 = vmatpush1.bf16.msra.mxu0 %v4417
        %4516 = vmatprep.subr.bf16.mxu0 %v4448
        %4517 = vmatpush2.bf16.msra.mxu0 %v4447
        %4518 = vmatprep.subr.bf16.mxu0 %v4446
        %4519 = vmatpush2.bf16.msra.mxu0 %v4445
        %4520 = vmatprep.subr.bf16.mxu0 %v4444
        %4521 = vmatpush2.bf16.msra.mxu0 %v4443
        %4522 = vmatprep.subr.bf16.mxu0 %v4442
        %4523 = vmatpush2.bf16.msra.mxu0 %v4441
        %4524 = vmatprep.subr.bf16.mxu0 %v4440
        %4525 = vmatpush2.bf16.msra.mxu0 %v4439
        %4526 = vmatprep.subr.bf16.mxu0 %v4438
        %4527 = vmatpush2.bf16.msra.mxu0 %v4437
        %4528 = vmatprep.subr.bf16.mxu0 %v4436
        %4529 = vmatpush2.bf16.msra.mxu0 %v4435
        %4530 = vmatprep.subr.bf16.mxu0 %v4434
        %4531 = vmatpush2.bf16.msra.mxu0 %v4433
        %4532 = vmatprep.mubr.bf16.mxu0 %v4293
        %4533 = vmatmul.mubr.bf16.gmra.mxu0 %v4292
        %v4534 = vpop.f32.mrf.mxu0
        %v4535 = vadd.f32 0.0, %v4534
        %v4536 = vpop.f32.mrf.mxu0
        %v4537 = vadd.f32 0.0, %v4536
        %v4538 = vpop.f32.mrf.mxu0
        %v4539 = vpop.f32.mrf.mxu0
        %4540 = vdwg.mxu0
        %4541 = vmatprep.subr.bf16.mxu0 0
        %4542 = vmatpush1.bf16.msra.mxu0 0
        %4543 = vmatprep.subr.bf16.mxu0 0
        %4544 = vmatpush1.bf16.msra.mxu0 0
        %4545 = vmatprep.subr.bf16.mxu0 0
        %4546 = vmatpush1.bf16.msra.mxu0 0
        %4547 = vmatprep.subr.bf16.mxu0 0
        %4548 = vmatpush1.bf16.msra.mxu0 0
        %4549 = vmatprep.subr.bf16.mxu0 %v4456
        %4550 = vmatpush1.bf16.msra.mxu0 %v4455
        %4551 = vmatprep.subr.bf16.mxu0 %v4454
        %4552 = vmatpush1.bf16.msra.mxu0 %v4453
        %4553 = vmatprep.subr.bf16.mxu0 %v4452
        %4554 = vmatpush1.bf16.msra.mxu0 %v4451
        %4555 = vmatprep.subr.bf16.mxu0 %v4450
        %4556 = vmatpush1.bf16.msra.mxu0 %v4449
        %4557 = vmatprep.subr.bf16.mxu0 0
        %4558 = vmatpush2.bf16.msra.mxu0 0
        %4559 = vmatprep.subr.bf16.mxu0 0
        %4560 = vmatpush2.bf16.msra.mxu0 0
        %4561 = vmatprep.subr.bf16.mxu0 0
        %4562 = vmatpush2.bf16.msra.mxu0 0
        %4563 = vmatprep.subr.bf16.mxu0 0
        %4564 = vmatpush2.bf16.msra.mxu0 0
        %4565 = vmatprep.subr.bf16.mxu0 0
        %4566 = vmatpush2.bf16.msra.mxu0 0
        %4567 = vmatprep.subr.bf16.mxu0 0
        %4568 = vmatpush2.bf16.msra.mxu0 0
        %4569 = vmatprep.subr.bf16.mxu0 0
        %4570 = vmatpush2.bf16.msra.mxu0 0
        %4571 = vmatprep.subr.bf16.mxu0 0
        %4572 = vmatpush2.bf16.msra.mxu0 0
        %4573 = vmatprep.mubr.bf16.mxu0 0
        %4574 = vmatmul.mubr.bf16.gmra.mxu0 %v4498
        %v4575 = vpop.f32.mrf.mxu0
        %v4576 = vadd.f32 %v4535, %v4575
        %v4577 = vpop.f32.mrf.mxu0
        %v4578 = vadd.f32 %v4537, %v4577
        %v4579 = vpop.f32.mrf.mxu0
        %v4580 = vpop.f32.mrf.mxu0
        %4581 = vdwg.mxu0
        %v4582 = vadd.f32 %v4233, %v4576
        %v4583 = vadd.f32 %v4235, %v4578
        %v4584 = vld [vmem:[%s8] sm:$0x3]
        %v4586 = vlaneseq
        %v4587 = vshrl.u32 %v4586, 7
        %v4588 = vsub.s32 0, %v4587
        %v4589 = vrot.slane %v4584, %v4588
        %v4590 = vlaneseq
        %v4591 = vshrl.u32 %v4590, 7
        %v4592 = vsub.s32 1, %v4591
        %v4593 = vrot.slane %v4584, %v4592
        %v4596 = vadd.f32 %v4582, %v4589
        %v4597 = vadd.f32 %v4583, %v4593
        %v4598 = vmax.f32 %v4596, 0.0
        %v4599 = vmax.f32 %v4597, 0.0
        %v4602 = vcombine.low %v4598, %v4599
        %v4603 = vcombine.high %v4598, %v4599
        %v4605 = vunpack.c.l.s4 1983009808
        %v4606 = vunpack.c.0.s8 %v4605
        %v4607 = vlaneseq
        %v4608 = vshrl.u32 %v4607, 7
        %v4609 = vsub.s32 %v4606, %v4608
        %v4610 = vrot.slane %v4602, %v4609
        %v4612 = vunpack.c.l.s4 1983009808
        %v4613 = vunpack.c.0.s8 %v4612
        %v4614 = vlaneseq
        %v4615 = vshrl.u32 %v4614, 7
        %v4616 = vsub.s32 %v4613, %v4615
        %v4617 = vrot.slane %v4603, %v4616
        %v4618 = vcombine.high %v4610, %v4610
        %v4619 = vcombine.high %v4617, %v4617
        %v4624 = vrot.slane %v4610, 7
        %v4625 = vrot.slane %v4624, 2
        %v4626 = vrot.slane %v4618, 7
        %v4627 = vrot.slane %v4626, 2
        %v4628 = vrot.slane %v4617, 7
        %v4629 = vrot.slane %v4628, 2
        %v4630 = vrot.slane %v4619, 7
        %v4631 = vrot.slane %v4630, 2
        %v4636 = vmax.f32 %v4610, %v4625
        %v4637 = vmax.f32 %v4618, %v4627
        %v4638 = vmax.f32 %v4617, %v4629
        %v4639 = vmax.f32 %v4619, %v4631
        %v4644 = vrot.slane %v4636, 2
        %v4645 = vrot.slane %v4637, 2
        %v4646 = vrot.slane %v4638, 2
        %v4647 = vrot.slane %v4639, 2
        %4648 = vrot.lane.b32.xlu0 %v4636, 64
        %v4649 = vpop.permute.xlu0 %4648
        %4650 = vrot.lane.b32.xlu0 %v4637, 64
        %v4651 = vpop.permute.xlu0 %4650
        %4652 = vrot.lane.b32.xlu0 %v4638, 64
        %v4653 = vpop.permute.xlu0 %4652
        %4654 = vrot.lane.b32.xlu0 %v4639, 64
        %v4655 = vpop.permute.xlu0 %4654
        %v4656 = vrot.slane %v4649, 2
        %v4657 = vrot.slane %v4651, 2
        %v4658 = vrot.slane %v4653, 2
        %v4659 = vrot.slane %v4655, 2
        %v4660 = vsel %vm2045, %v4636, %v4636
        %v4661 = vsel %vm2047, %v4636, %v4660
        %v4662 = vrot.slane %v4637, 7
        %v4663 = vsel %vm2050, %v4662, %v4661
        %v4664 = vsel %vm2052, %v4662, %v4663
        %v4665 = vsel %vm2054, %v4662, %v4664
        %v4666 = vsel %vm2056, %v4662, %v4665
        %v4667 = vsel %vm2045, %v4638, %v4638
        %v4668 = vsel %vm2047, %v4638, %v4667
        %v4669 = vrot.slane %v4639, 7
        %v4670 = vsel %vm2050, %v4669, %v4668
        %v4671 = vsel %vm2052, %v4669, %v4670
        %v4672 = vsel %vm2054, %v4669, %v4671
        %v4673 = vsel %vm2056, %v4669, %v4672
        %v4674 = vsel %vm2045, %v4649, %v4649
        %v4675 = vsel %vm2047, %v4649, %v4674
        %v4676 = vrot.slane %v4651, 7
        %v4677 = vsel %vm2050, %v4676, %v4675
        %v4678 = vsel %vm2052, %v4676, %v4677
        %v4679 = vsel %vm2054, %v4676, %v4678
        %v4680 = vsel %vm2056, %v4676, %v4679
        %v4681 = vsel %vm2045, %v4653, %v4653
        %v4682 = vsel %vm2047, %v4653, %v4681
        %v4683 = vrot.slane %v4655, 7
        %v4684 = vsel %vm2050, %v4683, %v4682
        %v4685 = vsel %vm2052, %v4683, %v4684
        %v4686 = vsel %vm2054, %v4683, %v4685
        %v4687 = vsel %vm2056, %v4683, %v4686
        %v4688 = vsel %vm2045, %v4644, %v4644
        %v4689 = vsel %vm2047, %v4644, %v4688
        %v4690 = vrot.slane %v4645, 7
        %v4691 = vsel %vm2050, %v4690, %v4689
        %v4692 = vsel %vm2052, %v4690, %v4691
        %v4693 = vsel %vm2054, %v4690, %v4692
        %v4694 = vsel %vm2056, %v4690, %v4693
        %v4695 = vsel %vm2045, %v4646, %v4646
        %v4696 = vsel %vm2047, %v4646, %v4695
        %v4697 = vrot.slane %v4647, 7
        %v4698 = vsel %vm2050, %v4697, %v4696
        %v4699 = vsel %vm2052, %v4697, %v4698
        %v4700 = vsel %vm2054, %v4697, %v4699
        %v4701 = vsel %vm2056, %v4697, %v4700
        %v4702 = vsel %vm2045, %v4656, %v4656
        %v4703 = vsel %vm2047, %v4656, %v4702
        %v4704 = vrot.slane %v4657, 7
        %v4705 = vsel %vm2050, %v4704, %v4703
        %v4706 = vsel %vm2052, %v4704, %v4705
        %v4707 = vsel %vm2054, %v4704, %v4706
        %v4708 = vsel %vm2056, %v4704, %v4707
        %v4709 = vsel %vm2045, %v4658, %v4658
        %v4710 = vsel %vm2047, %v4658, %v4709
        %v4711 = vrot.slane %v4659, 7
        %v4712 = vsel %vm2050, %v4711, %v4710
        %v4713 = vsel %vm2052, %v4711, %v4712
        %v4714 = vsel %vm2054, %v4711, %v4713
        %v4715 = vsel %vm2056, %v4711, %v4714
        %v4724 = vcombine.low %v4666, %v4680
        %v4726 = vunpack.c.l.s4 1934713408
        %v4727 = vunpack.c.0.s8 %v4726
        %v4728 = vlaneseq
        %v4729 = vshrl.u32 %v4728, 7
        %v4730 = vsub.s32 %v4727, %v4729
        %v4731 = vrot.slane %v4724, %v4730
        %v4732 = vcombine.high %v4731, 0.0
        %v4733 = vcombine.low %v4694, %v4708
        %v4735 = vunpack.c.l.s4 1934713408
        %v4736 = vunpack.c.0.s8 %v4735
        %v4737 = vlaneseq
        %v4738 = vshrl.u32 %v4737, 7
        %v4739 = vsub.s32 %v4736, %v4738
        %v4740 = vrot.slane %v4733, %v4739
        %v4741 = vcombine.high %v4740, 0.0
        %v4742 = vcombine.low %v4673, %v4687
        %v4744 = vunpack.c.l.s4 1934713408
        %v4745 = vunpack.c.0.s8 %v4744
        %v4746 = vlaneseq
        %v4747 = vshrl.u32 %v4746, 7
        %v4748 = vsub.s32 %v4745, %v4747
        %v4749 = vrot.slane %v4742, %v4748
        %v4750 = vcombine.high %v4749, 0.0
        %v4751 = vcombine.low %v4701, %v4715
        %v4753 = vunpack.c.l.s4 1934713408
        %v4754 = vunpack.c.0.s8 %v4753
        %v4755 = vlaneseq
        %v4756 = vshrl.u32 %v4755, 7
        %v4757 = vsub.s32 %v4754, %v4756
        %v4758 = vrot.slane %v4751, %v4757
        %v4759 = vcombine.high %v4758, 0.0
        %4768 = vrot.lane.b32.xlu0 %v4731, 96
        %v4769 = vpop.permute.xlu0 %4768
        %4770 = vrot.lane.b32.xlu0 %v4740, 96
        %v4771 = vpop.permute.xlu0 %4770
        %4772 = vrot.lane.b32.xlu0 %v4732, 96
        %v4773 = vpop.permute.xlu0 %4772
        %4774 = vrot.lane.b32.xlu0 %v4741, 96
        %v4775 = vpop.permute.xlu0 %4774
        %4776 = vrot.lane.b32.xlu0 %v4749, 96
        %v4777 = vpop.permute.xlu0 %4776
        %4778 = vrot.lane.b32.xlu0 %v4758, 96
        %v4779 = vpop.permute.xlu0 %4778
        %4780 = vrot.lane.b32.xlu0 %v4750, 96
        %v4781 = vpop.permute.xlu0 %4780
        %4782 = vrot.lane.b32.xlu0 %v4759, 96
        %v4783 = vpop.permute.xlu0 %4782
        %v4792 = vmax.f32 %v4731, %v4769
        %v4793 = vmax.f32 %v4740, %v4771
        %v4794 = vmax.f32 %v4732, %v4773
        %v4795 = vmax.f32 %v4741, %v4775
        %v4796 = vmax.f32 %v4749, %v4777
        %v4797 = vmax.f32 %v4758, %v4779
        %v4798 = vmax.f32 %v4750, %v4781
        %v4799 = vmax.f32 %v4759, %v4783
        %v4800 = vcombine.low %v4792, %v4794
        %v4802 = vunpack.c.l.s4 1934713408
        %v4803 = vunpack.c.0.s8 %v4802
        %v4804 = vlaneseq
        %v4805 = vshrl.u32 %v4804, 7
        %v4806 = vsub.s32 %v4803, %v4805
        %v4807 = vrot.slane %v4800, %v4806
        %v4808 = vcombine.high %v4807, 0.0
        %v4809 = vcombine.low %v4796, %v4798
        %v4811 = vunpack.c.l.s4 1934713408
        %v4812 = vunpack.c.0.s8 %v4811
        %v4813 = vlaneseq
        %v4814 = vshrl.u32 %v4813, 7
        %v4815 = vsub.s32 %v4812, %v4814
        %v4816 = vrot.slane %v4809, %v4815
        %v4817 = vcombine.high %v4816, 0.0
        %v4818 = vcombine.low %v4793, %v4795
        %v4820 = vunpack.c.l.s4 1934713408
        %v4821 = vunpack.c.0.s8 %v4820
        %v4822 = vlaneseq
        %v4823 = vshrl.u32 %v4822, 7
        %v4824 = vsub.s32 %v4821, %v4823
        %v4825 = vrot.slane %v4818, %v4824
        %v4826 = vcombine.high %v4825, 0.0
        %v4827 = vcombine.low %v4797, %v4799
        %v4829 = vunpack.c.l.s4 1934713408
        %v4830 = vunpack.c.0.s8 %v4829
        %v4831 = vlaneseq
        %v4832 = vshrl.u32 %v4831, 7
        %v4833 = vsub.s32 %v4830, %v4832
        %v4834 = vrot.slane %v4827, %v4833
        %v4835 = vcombine.high %v4834, 0.0
        %v4838 = vcombine.low %v4807, %v4816
        %v4840 = vunpack.c.l.s4 1983009808
        %v4841 = vunpack.c.0.s8 %v4840
        %v4842 = vlaneseq
        %v4843 = vshrl.u32 %v4842, 7
        %v4844 = vsub.s32 %v4841, %v4843
        %v4845 = vrot.slane %v4838, %v4844
        %v4849 = vcombine.low %v4808, %v4817
        %v4851 = vunpack.c.l.s4 1983009808
        %v4852 = vunpack.c.0.s8 %v4851
        %v4853 = vlaneseq
        %v4854 = vshrl.u32 %v4853, 7
        %v4855 = vsub.s32 %v4852, %v4854
        %v4856 = vrot.slane %v4849, %v4855
        %4857 = vrot.lane.b32.xlu0 %v4856, 32
        %v4858 = vpop.permute.xlu0 %4857
        %v4862 = vcombine.low %v4825, %v4834
        %v4864 = vunpack.c.l.s4 1983009808
        %v4865 = vunpack.c.0.s8 %v4864
        %v4866 = vlaneseq
        %v4867 = vshrl.u32 %v4866, 7
        %v4868 = vsub.s32 %v4865, %v4867
        %v4869 = vrot.slane %v4862, %v4868
        %4870 = vrot.lane.b32.xlu0 %v4869, 64
        %v4871 = vpop.permute.xlu0 %4870
        %v4875 = vcombine.low %v4826, %v4835
        %v4877 = vunpack.c.l.s4 1983009808
        %v4878 = vunpack.c.0.s8 %v4877
        %v4879 = vlaneseq
        %v4880 = vshrl.u32 %v4879, 7
        %v4881 = vsub.s32 %v4878, %v4880
        %v4882 = vrot.slane %v4875, %v4881
        %4883 = vrot.lane.b32.xlu0 %v4882, 96
        %v4884 = vpop.permute.xlu0 %4883
        %v4886 = vsel %vm1147, %v4845, %v4858
        %v4887 = vsel %vm2949, %v4886, %v4871
        %v4888 = vsel %vm2953, %v4887, %v4884
        %v4889 = vsel %vm485, %v4888, 0.0
        %v4890 = vrot.slane %v4889, 4
        %v4891 = vadd.f32 %v4889, %v4890
        %v4892 = vrot.slane %v4891, 2
        %v4893 = vadd.f32 %v4891, %v4892
        %v4894 = vrot.slane %v4893, 1
        %v4895 = vadd.f32 %v4893, %v4894
        %v4896 = vpack.c.bf16 %v4895, %v4895
        %v4897 = vld [vmem:[%s9] sm:$0xf]
        %v4898 = vld [vmem:[%s9 + $0x4] sm:$0xf]
        %v4899 = vld [vmem:[%s9 + $0x8] sm:$0xf]
        %v4900 = vld [vmem:[%s9 + $0xc] sm:$0xf]
        %v4901 = vld [vmem:[%s9 + $0x10] sm:$0xf]
        %v4902 = vld [vmem:[%s9 + $0x14] sm:$0xf]
        %v4903 = vld [vmem:[%s9 + $0x18] sm:$0xf]
        %v4904 = vld [vmem:[%s9 + $0x1c] sm:$0xf]
        %v4905 = vld [vmem:[%s9 + $0x20] sm:$0xf]
        %v4906 = vld [vmem:[%s9 + $0x24] sm:$0xf]
        %v4907 = vld [vmem:[%s9 + $0x28] sm:$0xf]
        %v4908 = vld [vmem:[%s9 + $0x2c] sm:$0xf]
        %v4909 = vld [vmem:[%s9 + $0x30] sm:$0xf]
        %v4910 = vld [vmem:[%s9 + $0x34] sm:$0xf]
        %v4911 = vld [vmem:[%s9 + $0x38] sm:$0xf]
        %v4912 = vld [vmem:[%s9 + $0x3c] sm:$0xf]
        %v4913 = vld [vmem:[%s10] sm:$0x1]
        %v4930 = vunpack.c.l.b16 %v4897
        %v4931 = vunpack.c.l.b16 %v4898
        %v4932 = vunpack.c.l.b16 %v4899
        %v4933 = vunpack.c.l.b16 %v4900
        %v4934 = vunpack.c.l.b16 %v4901
        %v4935 = vunpack.c.l.b16 %v4902
        %v4936 = vunpack.c.l.b16 %v4903
        %v4937 = vunpack.c.l.b16 %v4904
        %v4938 = vunpack.c.l.b16 %v4905
        %v4939 = vunpack.c.l.b16 %v4906
        %v4940 = vunpack.c.l.b16 %v4907
        %v4941 = vunpack.c.l.b16 %v4908
        %v4942 = vunpack.c.l.b16 %v4909
        %v4943 = vunpack.c.l.b16 %v4910
        %v4944 = vunpack.c.l.b16 %v4911
        %v4945 = vunpack.c.l.b16 %v4912
        %v4946 = vpack.c.b16 %v4931, %v4930
        %v4947 = vpack.c.b16 %v4933, %v4932
        %v4948 = vpack.c.b16 %v4935, %v4934
        %v4949 = vpack.c.b16 %v4937, %v4936
        %v4950 = vpack.c.b16 %v4939, %v4938
        %v4951 = vpack.c.b16 %v4941, %v4940
        %v4952 = vpack.c.b16 %v4943, %v4942
        %v4953 = vpack.c.b16 %v4945, %v4944
        %4962 = vmatprep.subr.bf16.mxu0 0
        %4963 = vmatpush1.bf16.msra.mxu0 %v4953
        %4964 = vmatprep.subr.bf16.mxu0 0
        %4965 = vmatpush1.bf16.msra.mxu0 %v4952
        %4966 = vmatprep.subr.bf16.mxu0 0
        %4967 = vmatpush1.bf16.msra.mxu0 %v4951
        %4968 = vmatprep.subr.bf16.mxu0 0
        %4969 = vmatpush1.bf16.msra.mxu0 %v4950
        %4970 = vmatprep.subr.bf16.mxu0 0
        %4971 = vmatpush1.bf16.msra.mxu0 %v4949
        %4972 = vmatprep.subr.bf16.mxu0 0
        %4973 = vmatpush1.bf16.msra.mxu0 %v4948
        %4974 = vmatprep.subr.bf16.mxu0 0
        %4975 = vmatpush1.bf16.msra.mxu0 %v4947
        %4976 = vmatprep.subr.bf16.mxu0 0
        %4977 = vmatpush1.bf16.msra.mxu0 %v4946
        %4978 = vmatprep.subr.bf16.mxu0 0
        %4979 = vmatpush2.bf16.msra.mxu0 0
        %4980 = vmatprep.subr.bf16.mxu0 0
        %4981 = vmatpush2.bf16.msra.mxu0 0
        %4982 = vmatprep.subr.bf16.mxu0 0
        %4983 = vmatpush2.bf16.msra.mxu0 0
        %4984 = vmatprep.subr.bf16.mxu0 0
        %4985 = vmatpush2.bf16.msra.mxu0 0
        %4986 = vmatprep.subr.bf16.mxu0 0
        %4987 = vmatpush2.bf16.msra.mxu0 0
        %4988 = vmatprep.subr.bf16.mxu0 0
        %4989 = vmatpush2.bf16.msra.mxu0 0
        %4990 = vmatprep.subr.bf16.mxu0 0
        %4991 = vmatpush2.bf16.msra.mxu0 0
        %4992 = vmatprep.subr.bf16.mxu0 0
        %4993 = vmatpush2.bf16.msra.mxu0 0
        %4994 = vmatprep.mubr.bf16.mxu0 0
        %4995 = vmatmul.mubr.bf16.gmra.mxu0 %v4896
        %v4996 = vpop.f32.mrf.mxu0
        %v4997 = vadd.f32 %v4913, %v4996
        %v4998 = vpop.f32.mrf.mxu0
        %v4999 = vpop.f32.mrf.mxu0
        %v5000 = vpop.f32.mrf.mxu0
        %5001 = vdwg.mxu0
        %5002 = vst.msk [vmem:[%s378] sm:$0x1] %vm3548, %v4997
        %s5003 = sand.u32 %s269, 1
        %s5004 = scalar_lea.sflag [#allocation7], %s5003
        %s5005 = sand.u32 %s269, 1
        %s5006 = scalar_lea.vmem [#allocation6], %s5005
        // Predicated region
        $region65: #{discriminator_forward.1} parent=63 // pred_check
          %p5007 = pneg %p279
        $region66: #{discriminator_forward.1} parent=63 // pred_check_branch
          %5009 = sbr.rel (%p5007) target = $region68
        $region67: #{discriminator_forward.1} parent=63 // pred_region
          %s5011 = ssub.s32 16, 16
          %5012 = vsyncadd %s5004, %s5011
          %s5013 = smul.addr %s25, 16
          %s5014 = scalar_lea.hbm %s11, %s5013
          %s5016 = sshll.u32 %s5006, 4
          %s5017 = int_to_ptr.vmem [resolvable:$true] %s5016
          %5019 = dma.vmem_to_hbm [thread:$0]  %s5017, 16, %s5014, %s5004
        $region68: #{discriminator_forward.1} parent=63 // pred_fallthru
          _
      $region64: #{discriminator_forward.1} parent=5 // pred_fallthru
        _
      %p5020 = scmp.le.s32.totalorder 2, %s20
      // Predicated region
      $region69: #{discriminator_forward.1} parent=5 // pred_check
        %p5021 = pneg %p5020
      $region70: #{discriminator_forward.1} parent=5 // pred_check_branch
        %5023 = sbr.rel (%p5021) target = $region72
      $region71: #{discriminator_forward.1} parent=5 // pred_region
        %s5024 = ssub.s32 %s20, 2
        // Predicated region
        $region73: #{discriminator_forward.1} parent=71 // pred_check
          %p5025 = pneg %p285
        $region74: #{discriminator_forward.1} parent=71 // pred_check_branch
          %5027 = sbr.rel (%p5025) target = $region76
        $region75: #{discriminator_forward.1} parent=71 // pred_region
          %s5028 = sand.u32 %s270, 1
          %s5029 = scalar_lea.sflag [#allocation7], %s5028
          %s5030 = sand.u32 %s270, 1
          %s5031 = scalar_lea.vmem [#allocation6], %s5030
          %5032 = dma.done %s5029, 16
        $region76: #{discriminator_forward.1} parent=71 // pred_fallthru
          _
      $region72: #{discriminator_forward.1} parent=5 // pred_fallthru
        _
    $region6: #{discriminator_forward.1} parent=1 // loop_footer
      %s24 = sadd.s32 1, %s20
    $region7: #{discriminator_forward.1} parent=1 // loop_footer_branch
      %19 = sbr.rel target = $region3
    $region8: #{discriminator_forward.1} parent=1 // loop_exit
      _
    %5033 = vsyncpa [#allocation7], 1
    %s5034 = scalar_lea.sflag [#allocation7], 1
    %5035 = vsyncpa %s5034, 1

</llo_original>
